<compile_context>
chip_gen: v7x
topology: tpu7x:2x2x1
jax: 0.10.0
libtpu: 0.0.40
codegen_flags: <defaults>
</compile_context>

<pallas_src>
import jax
import jax.numpy as jnp
from jax.experimental import pallas as pl
from jax.experimental.pallas import tpu as pltpu

NEG_SLOPE = 0.01   # F.leaky_relu_ default
EPS = 1e-5         # nn.BatchNorm2d default


def _leaky(y):
    return jnp.where(y >= 0, y, NEG_SLOPE * y)


def _shift_t(a, dt):
    """out[t] = a[t + dt], zero outside [0, T).  dt in {-1, 0, 1}.

    T is the outer (non lane/sublane) axis, so these slices/concats are whole
    (F, C)-plane moves -- cheap and layout-aligned.
    """
    if dt == 0:
        return a
    z = jnp.zeros_like(a[:1])
    if dt > 0:
        return jnp.concatenate([a[dt:], z], axis=0)
    return jnp.concatenate([z, a[:dt]], axis=0)


def _shift_f(a, df):
    """out[:, f] = a[:, f + df], zero outside [0, F).  df in {-1, 0, 1}."""
    if df == 0:
        return a
    F = a.shape[1]
    r = pltpu.roll(a, shift=(-df) % F, axis=1)          # XLU sublane rotate (idle slot)
    col = jax.lax.broadcasted_iota(jnp.int32, a.shape, 1)
    keep = col < (F - df) if df > 0 else col >= (-df)   # zero the wrapped edge
    return jnp.where(keep, r, jnp.zeros_like(r))


def _conv3x3(act, w_ref):
    """3x3 'same' conv as ONE bf16 MXU matmul over im2col patches (K = 9*Cin).

    act:   (T, F, Cin) f32 activation (already bn + leaky_relu'ed)
    w_ref: (9*Cin, Cout) bf16 weight, taps in (kh, kw, ci) row-major order
    returns (T, F, Cout) f32
    """
    T, F, Ci = act.shape
    Co = w_ref.shape[-1]
    shifted_t = {dt: _shift_t(act, dt) for dt in (-1, 0, 1)}
    taps = [_shift_f(shifted_t[dt], df)
            for dt in (-1, 0, 1) for df in (-1, 0, 1)]          # (kh, kw) row-major
    patches = jnp.concatenate(taps, axis=-1).astype(jnp.bfloat16)   # (T, F, 9*Ci)
    out = jnp.dot(patches.reshape(T * F, 9 * Ci), w_ref[...],
                  preferred_element_type=jnp.float32)           # f32 accumulate
    return out.reshape(T, F, Co)


def stage1_kernel(x_ref, w1_ref, s1_ref, t1_ref, h1_ref):
    """h1 = conv1(leaky_relu(bn1(x))); one batch element per grid step."""
    x = x_ref[0]                                        # (T, F, Ci) f32
    a = _leaky(x * s1_ref[0] + t1_ref[0])               # folded BN1 affine (stats hoisted)
    h1_ref[0] = _conv3x3(a, w1_ref)


def stage2_kernel(h1_ref, x_ref, w2_ref, ws_ref, bs_ref, s2_ref, t2_ref,
                  pool_ref, lat_ref):
    """latent = conv2(leaky_relu(bn2(h1))) + shortcut(x);  pooled = avgpool 2x2."""
    T, F = h1_ref.shape[1], h1_ref.shape[2]

    # 1x1 shortcut first so x's live range ends before the conv work.
    x = x_ref[0]                                        # (T, F, Ci) f32
    Ci = x.shape[-1]
    Co = ws_ref.shape[-1]
    sc = jnp.dot(x.astype(jnp.bfloat16).reshape(T * F, Ci), ws_ref[...],
                 preferred_element_type=jnp.float32).reshape(T, F, Co)
    sc = sc + bs_ref[0]

    a = _leaky(h1_ref[0] * s2_ref[0] + t2_ref[0])       # folded BN2 affine
    latent = sc + _conv3x3(a, w2_ref)
    lat_ref[0] = latent

    # 2x2 average pool (stride 2). Strided slices of in-register values do not
    # lower reliably, so read the just-written latent block back with pl.ds.
    Th, Fh = T // 2, F // 2
    a00 = lat_ref[:, pl.ds(0, Th, stride=2), pl.ds(0, Fh, stride=2), :]
    a01 = lat_ref[:, pl.ds(0, Th, stride=2), pl.ds(1, Fh, stride=2), :]
    a10 = lat_ref[:, pl.ds(1, Th, stride=2), pl.ds(0, Fh, stride=2), :]
    a11 = lat_ref[:, pl.ds(1, Th, stride=2), pl.ds(1, Fh, stride=2), :]
    pool_ref[...] = 0.25 * (a00 + a01 + a10 + a11)


def _compiler_params(block_bytes):
    est = 4 * block_bytes                     # double-buffered blocks + temporaries
    vmem = int(min(100 * 2 ** 20, max(32 * 2 ** 20, est)))
    return pltpu.CompilerParams(dimension_semantics=("parallel",),
                                vmem_limit_bytes=vmem)


def encoder_block(x_nchw, params):
    """x_nchw: (B, Ci, T, F) f32 -> (pooled (B,Co,T/2,F/2), latent (B,Co,T,F))."""
    B, Ci, T, F = x_nchw.shape
    Co = params["w1"].shape[-1]

    x = jnp.transpose(x_nchw, (0, 2, 3, 1)).astype(jnp.float32)   # (B, T, F, Ci)

    g1 = params["g1"].reshape(-1).astype(jnp.float32)
    b1 = params["b1"].reshape(-1).astype(jnp.float32)
    g2 = params["g2"].reshape(-1).astype(jnp.float32)
    b2 = params["b2"].reshape(-1).astype(jnp.float32)

    # Training-mode BN1 batch stats (hoisted, f32) folded into scale/shift.
    m1 = jnp.mean(x, axis=(0, 1, 2))
    v1 = jnp.mean(jnp.square(x - m1), axis=(0, 1, 2))
    s1 = g1 * jax.lax.rsqrt(v1 + EPS)
    t1 = b1 - m1 * s1

    # Conv weights as im2col matrices, bf16 (kernel accumulates in f32).
    w1 = params["w1"].reshape(9 * Ci, Co).astype(jnp.bfloat16)
    w2 = params["w2"].reshape(9 * Co, Co).astype(jnp.bfloat16)
    ws = params["ws"].astype(jnp.bfloat16)                         # (Ci, Co)
    bs = params["bs"].reshape(1, Co).astype(jnp.float32)

    blk1 = 4 * T * F * (Ci + Co) + 6 * T * F * 9 * Ci + 2 * 9 * Ci * Co
    h1 = pl.pallas_call(
        stage1_kernel,
        out_shape=jax.ShapeDtypeStruct((B, T, F, Co), jnp.float32),
        grid=(B,),
        in_specs=[
            pl.BlockSpec((1, T, F, Ci), lambda b: (b, 0, 0, 0)),   # x
            pl.BlockSpec((9 * Ci, Co), lambda b: (0, 0)),          # conv1 im2col weight
            pl.BlockSpec((1, Ci), lambda b: (0, 0)),               # bn1 scale
            pl.BlockSpec((1, Ci), lambda b: (0, 0)),               # bn1 shift
        ],
        out_specs=pl.BlockSpec((1, T, F, Co), lambda b: (b, 0, 0, 0)),
        compiler_params=_compiler_params(blk1),
    )(x, w1, s1.reshape(1, Ci), t1.reshape(1, Ci))

    # Training-mode BN2 batch stats from the (f32) stage-1 output.
    m2 = jnp.mean(h1, axis=(0, 1, 2))
    v2 = jnp.mean(jnp.square(h1 - m2), axis=(0, 1, 2))
    s2 = g2 * jax.lax.rsqrt(v2 + EPS)
    t2 = b2 - m2 * s2

    blk2 = 4 * T * F * (Ci + 2 * Co) + 6 * T * F * 9 * Co + 2 * 9 * Co * Co
    pooled, latent = pl.pallas_call(
        stage2_kernel,
        out_shape=(jax.ShapeDtypeStruct((B, T // 2, F // 2, Co), jnp.float32),
                   jax.ShapeDtypeStruct((B, T, F, Co), jnp.float32)),
        grid=(B,),
        in_specs=[
            pl.BlockSpec((1, T, F, Co), lambda b: (b, 0, 0, 0)),   # h1
            pl.BlockSpec((1, T, F, Ci), lambda b: (b, 0, 0, 0)),   # x
            pl.BlockSpec((9 * Co, Co), lambda b: (0, 0)),          # conv2 im2col weight
            pl.BlockSpec((Ci, Co), lambda b: (0, 0)),              # shortcut 1x1 weight
            pl.BlockSpec((1, Co), lambda b: (0, 0)),               # shortcut bias
            pl.BlockSpec((1, Co), lambda b: (0, 0)),               # bn2 scale
            pl.BlockSpec((1, Co), lambda b: (0, 0)),               # bn2 shift
        ],
        out_specs=(pl.BlockSpec((1, T // 2, F // 2, Co), lambda b: (b, 0, 0, 0)),
                   pl.BlockSpec((1, T, F, Co), lambda b: (b, 0, 0, 0))),
        compiler_params=_compiler_params(blk2),
    )(h1, x, w2, ws, bs, s2.reshape(1, Co), t2.reshape(1, Co))

    return jnp.transpose(pooled, (0, 3, 1, 2)), jnp.transpose(latent, (0, 3, 1, 2))


# ----------------------- pure-JAX reference (NCHW, like PyTorch) -----------------------
def reference(x, params):
    def bn_leaky(h, g, b):
        m = h.mean(axis=(0, 2, 3), keepdims=True)
        v = ((h - m) ** 2).mean(axis=(0, 2, 3), keepdims=True)
        y = (h - m) / jnp.sqrt(v + EPS) * g.reshape(1, -1, 1, 1) + b.reshape(1, -1, 1, 1)
        return jnp.where(y >= 0, y, NEG_SLOPE * y)

    def conv(h, w_hwio, pad):
        w_oihw = jnp.transpose(w_hwio, (3, 2, 0, 1))
        return jax.lax.conv_general_dilated(
            h, w_oihw, (1, 1), ((pad, pad), (pad, pad)),
            dimension_numbers=("NCHW", "OIHW", "NCHW"),
            precision=jax.lax.Precision.HIGHEST)

    g1 = params["g1"].reshape(-1); b1 = params["b1"].reshape(-1)
    g2 = params["g2"].reshape(-1); b2 = params["b2"].reshape(-1)

    h = conv(bn_leaky(x, g1, b1), params["w1"], 1)
    h = conv(bn_leaky(h, g2, b2), params["w2"], 1)
    ws_oihw = params["ws"].T[:, :, None, None]
    sc = jax.lax.conv_general_dilated(
        x, ws_oihw, (1, 1), ((0, 0), (0, 0)),
        dimension_numbers=("NCHW", "OIHW", "NCHW"),
        precision=jax.lax.Precision.HIGHEST) + params["bs"].reshape(1, -1, 1, 1)
    latent = sc + h
    B, C, T, F = latent.shape
    pooled = latent.reshape(B, C, T // 2, 2, F // 2, 2).mean(axis=(3, 5))
    return pooled, latent


if __name__ == "__main__":
    B, Ci, Co, T, F = 2, 4, 8, 16, 16

    key = jax.random.PRNGKey(0)
    ks = jax.random.split(key, 10)
    params = {
        "w1": 0.1 * jax.random.normal(ks[0], (3, 3, Ci, Co), jnp.float32),
        "w2": 0.1 * jax.random.normal(ks[1], (3, 3, Co, Co), jnp.float32),
        # in_channels != out_channels -> real 1x1 shortcut conv with bias
        "ws": 0.1 * jax.random.normal(ks[2], (Ci, Co), jnp.float32),
        "bs": 0.1 * jax.random.normal(ks[3], (1, 1, 1, Co), jnp.float32),
        "g1": 1.0 + 0.1 * jax.random.normal(ks[4], (1, 1, 1, Ci), jnp.float32),
        "b1": 0.1 * jax.random.normal(ks[5], (1, 1, 1, Ci), jnp.float32),
        "g2": 1.0 + 0.1 * jax.random.normal(ks[6], (1, 1, 1, Co), jnp.float32),
        "b2": 0.1 * jax.random.normal(ks[7], (1, 1, 1, Co), jnp.float32),
    }
    x = jax.random.normal(ks[8], (B, Ci, T, F), jnp.float32)

    out_p, lat_p = jax.jit(encoder_block)(x, params)
    jax.block_until_ready((out_p, lat_p))

    out_r, lat_r = reference(x, params)
    err_out = float(jnp.max(jnp.abs(out_p - out_r)))
    err_lat = float(jnp.max(jnp.abs(lat_p - lat_r)))
    # bf16 matmul operands with f32 accumulation vs an all-f32 HIGHEST reference.
    ok = (jnp.allclose(out_p, out_r, atol=5e-2, rtol=5e-2) and
          jnp.allclose(lat_p, lat_r, atol=5e-2, rtol=5e-2))
    assert ok, f"mismatch: pooled max err {err_out}, latent max err {err_lat}"
    print("KERNEL_OK")
</pallas_src>

<mosaic_0001>
module attributes {stable_mosaic.version = 11 : i64} {
  func.func @stage1_kernel(%arg0: i32, %arg1: memref<1x16x16x4xf32, #tpu.memory_space<vmem>>, %arg2: memref<36x8xbf16, #tpu.memory_space<vmem>>, %arg3: memref<1x4xf32, #tpu.memory_space<vmem>>, %arg4: memref<1x4xf32, #tpu.memory_space<vmem>>, %arg5: memref<1x16x16x8xf32, #tpu.memory_space<vmem>>) attributes {dimension_semantics = [#tpu.dimension_semantics<parallel>], iteration_bounds = array<i64: 2>, scalar_prefetch = 0 : i64, scratch_operands = 0 : i64, tpu.core_type = #tpu.core_type<tc>, window_params = [{transform_indices = @transform_0, window_bounds = array<i64: 1, 16, 16, 4>}, {pipeline_mode = #tpu.pipeline_mode<synchronous>, transform_indices = @transform_1, window_bounds = array<i64: 36, 8>}, {pipeline_mode = #tpu.pipeline_mode<synchronous>, transform_indices = @transform_2, window_bounds = array<i64: 1, 4>}, {pipeline_mode = #tpu.pipeline_mode<synchronous>, transform_indices = @transform_3, window_bounds = array<i64: 1, 4>}, {transform_indices = @transform_4, window_bounds = array<i64: 1, 16, 16, 8>}]} {
    %c0 = arith.constant 0 : index
    %c0_0 = arith.constant 0 : index
    %c0_1 = arith.constant 0 : index
    %c0_2 = arith.constant 0 : index
    %0 = vector.load %arg1[%c0, %c0_0, %c0_1, %c0_2] : memref<1x16x16x4xf32, #tpu.memory_space<vmem>>, vector<1x16x16x4xf32>
    %1 = vector.shape_cast %0 : vector<1x16x16x4xf32> to vector<16x16x4xf32>
    %c0_3 = arith.constant 0 : index
    %c0_4 = arith.constant 0 : index
    %2 = vector.load %arg3[%c0_3, %c0_4] : memref<1x4xf32, #tpu.memory_space<vmem>>, vector<1x4xf32>
    %3 = vector.shape_cast %2 : vector<1x4xf32> to vector<4xf32>
    %4 = vector.shape_cast %3 : vector<4xf32> to vector<1x1x4xf32>
    %5 = vector.broadcast %4 : vector<1x1x4xf32> to vector<16x16x4xf32>
    %6 = arith.mulf %1, %5 : vector<16x16x4xf32>
    %c0_5 = arith.constant 0 : index
    %c0_6 = arith.constant 0 : index
    %7 = vector.load %arg4[%c0_5, %c0_6] : memref<1x4xf32, #tpu.memory_space<vmem>>, vector<1x4xf32>
    %8 = vector.shape_cast %7 : vector<1x4xf32> to vector<4xf32>
    %9 = vector.shape_cast %8 : vector<4xf32> to vector<1x1x4xf32>
    %10 = vector.broadcast %9 : vector<1x1x4xf32> to vector<16x16x4xf32>
    %11 = arith.addf %6, %10 : vector<16x16x4xf32>
    %cst = arith.constant 0.000000e+00 : f32
    %12 = vector.broadcast %cst : f32 to vector<16x16x4xf32>
    %13 = arith.cmpf oge, %11, %12 : vector<16x16x4xf32>
    %cst_7 = arith.constant 0.00999999977 : f32
    %14 = vector.broadcast %cst_7 : f32 to vector<16x16x4xf32>
    %15 = arith.mulf %14, %11 : vector<16x16x4xf32>
    %16 = arith.select %13, %11, %15 : vector<16x16x4xi1>, vector<16x16x4xf32>
    %cst_8 = arith.constant 0.000000e+00 : f32
    %17 = vector.broadcast %cst_8 : f32 to vector<1x16x4xf32>
    %18 = vector.extract_strided_slice %16 {offsets = [0, 0, 0], sizes = [15, 16, 4], strides = [1, 1, 1]} : vector<16x16x4xf32> to vector<15x16x4xf32>
    %19 = tpu.concatenate %17, %18 in 0 : vector<1x16x4xf32>, vector<15x16x4xf32> -> vector<16x16x4xf32>
    %cst_9 = arith.constant 0.000000e+00 : f32
    %20 = vector.broadcast %cst_9 : f32 to vector<1x16x4xf32>
    %21 = vector.extract_strided_slice %16 {offsets = [1, 0, 0], sizes = [15, 16, 4], strides = [1, 1, 1]} : vector<16x16x4xf32> to vector<15x16x4xf32>
    %22 = tpu.concatenate %21, %20 in 0 : vector<15x16x4xf32>, vector<1x16x4xf32> -> vector<16x16x4xf32>
    %c1_i32 = arith.constant 1 : i32
    %23 = tpu.dynamic_rotate %19 by %c1_i32 dim 1 : vector<16x16x4xf32>, i32 -> vector<16x16x4xf32>
    %24 = tpu.iota {dimensions = array<i32: 1>} : vector<16x16x4xi32>
    %c1_i32_10 = arith.constant 1 : i32
    %25 = vector.broadcast %c1_i32_10 : i32 to vector<16x16x4xi32>
    %26 = arith.cmpi sge, %24, %25 : vector<16x16x4xi32>
    %cst_11 = arith.constant 0.000000e+00 : f32
    %27 = vector.broadcast %cst_11 : f32 to vector<16x16x4xf32>
    %28 = arith.select %26, %23, %27 : vector<16x16x4xi1>, vector<16x16x4xf32>
    %c15_i32 = arith.constant 15 : i32
    %29 = tpu.dynamic_rotate %19 by %c15_i32 dim 1 : vector<16x16x4xf32>, i32 -> vector<16x16x4xf32>
    %30 = tpu.iota {dimensions = array<i32: 1>} : vector<16x16x4xi32>
    %c15_i32_12 = arith.constant 15 : i32
    %31 = vector.broadcast %c15_i32_12 : i32 to vector<16x16x4xi32>
    %32 = arith.cmpi slt, %30, %31 : vector<16x16x4xi32>
    %cst_13 = arith.constant 0.000000e+00 : f32
    %33 = vector.broadcast %cst_13 : f32 to vector<16x16x4xf32>
    %34 = arith.select %32, %29, %33 : vector<16x16x4xi1>, vector<16x16x4xf32>
    %c1_i32_14 = arith.constant 1 : i32
    %35 = tpu.dynamic_rotate %16 by %c1_i32_14 dim 1 : vector<16x16x4xf32>, i32 -> vector<16x16x4xf32>
    %36 = tpu.iota {dimensions = array<i32: 1>} : vector<16x16x4xi32>
    %c1_i32_15 = arith.constant 1 : i32
    %37 = vector.broadcast %c1_i32_15 : i32 to vector<16x16x4xi32>
    %38 = arith.cmpi sge, %36, %37 : vector<16x16x4xi32>
    %cst_16 = arith.constant 0.000000e+00 : f32
    %39 = vector.broadcast %cst_16 : f32 to vector<16x16x4xf32>
    %40 = arith.select %38, %35, %39 : vector<16x16x4xi1>, vector<16x16x4xf32>
    %c15_i32_17 = arith.constant 15 : i32
    %41 = tpu.dynamic_rotate %16 by %c15_i32_17 dim 1 : vector<16x16x4xf32>, i32 -> vector<16x16x4xf32>
    %42 = tpu.iota {dimensions = array<i32: 1>} : vector<16x16x4xi32>
    %c15_i32_18 = arith.constant 15 : i32
    %43 = vector.broadcast %c15_i32_18 : i32 to vector<16x16x4xi32>
    %44 = arith.cmpi slt, %42, %43 : vector<16x16x4xi32>
    %cst_19 = arith.constant 0.000000e+00 : f32
    %45 = vector.broadcast %cst_19 : f32 to vector<16x16x4xf32>
    %46 = arith.select %44, %41, %45 : vector<16x16x4xi1>, vector<16x16x4xf32>
    %c1_i32_20 = arith.constant 1 : i32
    %47 = tpu.dynamic_rotate %22 by %c1_i32_20 dim 1 : vector<16x16x4xf32>, i32 -> vector<16x16x4xf32>
    %48 = tpu.iota {dimensions = array<i32: 1>} : vector<16x16x4xi32>
    %c1_i32_21 = arith.constant 1 : i32
    %49 = vector.broadcast %c1_i32_21 : i32 to vector<16x16x4xi32>
    %50 = arith.cmpi sge, %48, %49 : vector<16x16x4xi32>
    %cst_22 = arith.constant 0.000000e+00 : f32
    %51 = vector.broadcast %cst_22 : f32 to vector<16x16x4xf32>
    %52 = arith.select %50, %47, %51 : vector<16x16x4xi1>, vector<16x16x4xf32>
    %c15_i32_23 = arith.constant 15 : i32
    %53 = tpu.dynamic_rotate %22 by %c15_i32_23 dim 1 : vector<16x16x4xf32>, i32 -> vector<16x16x4xf32>
    %54 = tpu.iota {dimensions = array<i32: 1>} : vector<16x16x4xi32>
    %c15_i32_24 = arith.constant 15 : i32
    %55 = vector.broadcast %c15_i32_24 : i32 to vector<16x16x4xi32>
    %56 = arith.cmpi slt, %54, %55 : vector<16x16x4xi32>
    %cst_25 = arith.constant 0.000000e+00 : f32
    %57 = vector.broadcast %cst_25 : f32 to vector<16x16x4xf32>
    %58 = arith.select %56, %53, %57 : vector<16x16x4xi1>, vector<16x16x4xf32>
    %59 = tpu.concatenate %28, %19, %34, %40, %16, %46, %52, %22, %58 in 2 : vector<16x16x4xf32>, vector<16x16x4xf32>, vector<16x16x4xf32>, vector<16x16x4xf32>, vector<16x16x4xf32>, vector<16x16x4xf32>, vector<16x16x4xf32>, vector<16x16x4xf32>, vector<16x16x4xf32> -> vector<16x16x36xf32>
    %60 = arith.truncf %59 : vector<16x16x36xf32> to vector<16x16x36xbf16>
    %61 = vector.shape_cast %60 : vector<16x16x36xbf16> to vector<256x36xbf16>
    %c0_26 = arith.constant 0 : index
    %c0_27 = arith.constant 0 : index
    %62 = vector.load %arg2[%c0_26, %c0_27] : memref<36x8xbf16, #tpu.memory_space<vmem>>, vector<36x8xbf16>
    %cst_28 = arith.constant dense<0.000000e+00> : vector<256x8xf32>
    %63 = tpu.matmul %61, %62, %cst_28 {dimension_numbers = #tpu.dot_dimension_numbers<[1], [0], [0], [1], [0, 0, 1, 1], [], []>} : vector<256x36xbf16>, vector<36x8xbf16>, vector<256x8xf32> -> vector<256x8xf32>
    %64 = vector.shape_cast %63 : vector<256x8xf32> to vector<16x16x8xf32>
    %c0_29 = arith.constant 0 : index
    %c0_30 = arith.constant 0 : index
    %c0_31 = arith.constant 0 : index
    %c0_32 = arith.constant 0 : index
    %65 = vector.load %arg5[%c0_29, %c0_30, %c0_31, %c0_32] : memref<1x16x16x8xf32, #tpu.memory_space<vmem>>, vector<1x16x16x8xf32>
    %66 = vector.shape_cast %65 : vector<1x16x16x8xf32> to vector<16x16x8xf32>
    %67 = vector.shape_cast %64 : vector<16x16x8xf32> to vector<1x16x16x8xf32>
    tpu.vector_store %arg5[%c0_29, %c0_30, %c0_31, %c0_32], %67 {strides = array<i32>} : memref<1x16x16x8xf32, #tpu.memory_space<vmem>>, vector<1x16x16x8xf32>,
    return
  }
  func.func @transform_0(%arg0: i32) -> (i32, i32, i32, i32) {
    %c0_i32 = arith.constant 0 : i32
    %c0_i32_0 = arith.constant 0 : i32
    %c0_i32_1 = arith.constant 0 : i32
    %c0_i32_2 = arith.constant 0 : i32
    return %arg0, %c0_i32, %c0_i32_0, %c0_i32_1 : i32, i32, i32, i32
  }
  func.func @transform_1(%arg0: i32) -> (i32, i32) {
    %c0_i32 = arith.constant 0 : i32
    %c0_i32_0 = arith.constant 0 : i32
    %c0_i32_1 = arith.constant 0 : i32
    return %c0_i32, %c0_i32_0 : i32, i32
  }
  func.func @transform_2(%arg0: i32) -> (i32, i32) {
    %c0_i32 = arith.constant 0 : i32
    %c0_i32_0 = arith.constant 0 : i32
    %c0_i32_1 = arith.constant 0 : i32
    return %c0_i32, %c0_i32_0 : i32, i32
  }
  func.func @transform_3(%arg0: i32) -> (i32, i32) {
    %c0_i32 = arith.constant 0 : i32
    %c0_i32_0 = arith.constant 0 : i32
    %c0_i32_1 = arith.constant 0 : i32
    return %c0_i32, %c0_i32_0 : i32, i32
  }
  func.func @transform_4(%arg0: i32) -> (i32, i32, i32, i32) {
    %c0_i32 = arith.constant 0 : i32
    %c0_i32_0 = arith.constant 0 : i32
    %c0_i32_1 = arith.constant 0 : i32
    %c0_i32_2 = arith.constant 0 : i32
    return %arg0, %c0_i32, %c0_i32_0, %c0_i32_1 : i32, i32, i32, i32
  }
}

module attributes {stable_mosaic.version = 11 : i64} {
  func.func @stage2_kernel(%arg0: i32, %arg1: memref<1x16x16x8xf32, #tpu.memory_space<vmem>>, %arg2: memref<1x16x16x4xf32, #tpu.memory_space<vmem>>, %arg3: memref<72x8xbf16, #tpu.memory_space<vmem>>, %arg4: memref<4x8xbf16, #tpu.memory_space<vmem>>, %arg5: memref<1x8xf32, #tpu.memory_space<vmem>>, %arg6: memref<1x8xf32, #tpu.memory_space<vmem>>, %arg7: memref<1x8xf32, #tpu.memory_space<vmem>>, %arg8: memref<1x8x8x8xf32, #tpu.memory_space<vmem>>, %arg9: memref<1x16x16x8xf32, #tpu.memory_space<vmem>>) attributes {dimension_semantics = [#tpu.dimension_semantics<parallel>], iteration_bounds = array<i64: 2>, scalar_prefetch = 0 : i64, scratch_operands = 0 : i64, tpu.core_type = #tpu.core_type<tc>, window_params = [{transform_indices = @transform_0, window_bounds = array<i64: 1, 16, 16, 8>}, {transform_indices = @transform_1, window_bounds = array<i64: 1, 16, 16, 4>}, {pipeline_mode = #tpu.pipeline_mode<synchronous>, transform_indices = @transform_2, window_bounds = array<i64: 72, 8>}, {pipeline_mode = #tpu.pipeline_mode<synchronous>, transform_indices = @transform_3, window_bounds = array<i64: 4, 8>}, {pipeline_mode = #tpu.pipeline_mode<synchronous>, transform_indices = @transform_4, window_bounds = array<i64: 1, 8>}, {pipeline_mode = #tpu.pipeline_mode<synchronous>, transform_indices = @transform_5, window_bounds = array<i64: 1, 8>}, {pipeline_mode = #tpu.pipeline_mode<synchronous>, transform_indices = @transform_6, window_bounds = array<i64: 1, 8>}, {transform_indices = @transform_7, window_bounds = array<i64: 1, 8, 8, 8>}, {transform_indices = @transform_8, window_bounds = array<i64: 1, 16, 16, 8>}]} {
    %c0 = arith.constant 0 : index
    %c0_0 = arith.constant 0 : index
    %c0_1 = arith.constant 0 : index
    %c0_2 = arith.constant 0 : index
    %0 = vector.load %arg2[%c0, %c0_0, %c0_1, %c0_2] : memref<1x16x16x4xf32, #tpu.memory_space<vmem>>, vector<1x16x16x4xf32>
    %1 = vector.shape_cast %0 : vector<1x16x16x4xf32> to vector<16x16x4xf32>
    %2 = arith.truncf %1 : vector<16x16x4xf32> to vector<16x16x4xbf16>
    %3 = vector.shape_cast %2 : vector<16x16x4xbf16> to vector<256x4xbf16>
    %c0_3 = arith.constant 0 : index
    %c0_4 = arith.constant 0 : index
    %4 = vector.load %arg4[%c0_3, %c0_4] : memref<4x8xbf16, #tpu.memory_space<vmem>>, vector<4x8xbf16>
    %cst = arith.constant dense<0.000000e+00> : vector<256x8xf32>
    %5 = tpu.matmul %3, %4, %cst {dimension_numbers = #tpu.dot_dimension_numbers<[1], [0], [0], [1], [0, 0, 1, 1], [], []>} : vector<256x4xbf16>, vector<4x8xbf16>, vector<256x8xf32> -> vector<256x8xf32>
    %6 = vector.shape_cast %5 : vector<256x8xf32> to vector<16x16x8xf32>
    %c0_5 = arith.constant 0 : index
    %c0_6 = arith.constant 0 : index
    %7 = vector.load %arg5[%c0_5, %c0_6] : memref<1x8xf32, #tpu.memory_space<vmem>>, vector<1x8xf32>
    %8 = vector.shape_cast %7 : vector<1x8xf32> to vector<8xf32>
    %9 = vector.shape_cast %8 : vector<8xf32> to vector<1x1x8xf32>
    %10 = vector.broadcast %9 : vector<1x1x8xf32> to vector<16x16x8xf32>
    %11 = arith.addf %6, %10 : vector<16x16x8xf32>
    %c0_7 = arith.constant 0 : index
    %c0_8 = arith.constant 0 : index
    %c0_9 = arith.constant 0 : index
    %c0_10 = arith.constant 0 : index
    %12 = vector.load %arg1[%c0_7, %c0_8, %c0_9, %c0_10] : memref<1x16x16x8xf32, #tpu.memory_space<vmem>>, vector<1x16x16x8xf32>
    %13 = vector.shape_cast %12 : vector<1x16x16x8xf32> to vector<16x16x8xf32>
    %c0_11 = arith.constant 0 : index
    %c0_12 = arith.constant 0 : index
    %14 = vector.load %arg6[%c0_11, %c0_12] : memref<1x8xf32, #tpu.memory_space<vmem>>, vector<1x8xf32>
    %15 = vector.shape_cast %14 : vector<1x8xf32> to vector<8xf32>
    %16 = vector.shape_cast %15 : vector<8xf32> to vector<1x1x8xf32>
    %17 = vector.broadcast %16 : vector<1x1x8xf32> to vector<16x16x8xf32>
    %18 = arith.mulf %13, %17 : vector<16x16x8xf32>
    %c0_13 = arith.constant 0 : index
    %c0_14 = arith.constant 0 : index
    %19 = vector.load %arg7[%c0_13, %c0_14] : memref<1x8xf32, #tpu.memory_space<vmem>>, vector<1x8xf32>
    %20 = vector.shape_cast %19 : vector<1x8xf32> to vector<8xf32>
    %21 = vector.shape_cast %20 : vector<8xf32> to vector<1x1x8xf32>
    %22 = vector.broadcast %21 : vector<1x1x8xf32> to vector<16x16x8xf32>
    %23 = arith.addf %18, %22 : vector<16x16x8xf32>
    %cst_15 = arith.constant 0.000000e+00 : f32
    %24 = vector.broadcast %cst_15 : f32 to vector<16x16x8xf32>
    %25 = arith.cmpf oge, %23, %24 : vector<16x16x8xf32>
    %cst_16 = arith.constant 0.00999999977 : f32
    %26 = vector.broadcast %cst_16 : f32 to vector<16x16x8xf32>
    %27 = arith.mulf %26, %23 : vector<16x16x8xf32>
    %28 = arith.select %25, %23, %27 : vector<16x16x8xi1>, vector<16x16x8xf32>
    %cst_17 = arith.constant 0.000000e+00 : f32
    %29 = vector.broadcast %cst_17 : f32 to vector<1x16x8xf32>
    %30 = vector.extract_strided_slice %28 {offsets = [0, 0, 0], sizes = [15, 16, 8], strides = [1, 1, 1]} : vector<16x16x8xf32> to vector<15x16x8xf32>
    %31 = tpu.concatenate %29, %30 in 0 : vector<1x16x8xf32>, vector<15x16x8xf32> -> vector<16x16x8xf32>
    %cst_18 = arith.constant 0.000000e+00 : f32
    %32 = vector.broadcast %cst_18 : f32 to vector<1x16x8xf32>
    %33 = vector.extract_strided_slice %28 {offsets = [1, 0, 0], sizes = [15, 16, 8], strides = [1, 1, 1]} : vector<16x16x8xf32> to vector<15x16x8xf32>
    %34 = tpu.concatenate %33, %32 in 0 : vector<15x16x8xf32>, vector<1x16x8xf32> -> vector<16x16x8xf32>
    %c1_i32 = arith.constant 1 : i32
    %35 = tpu.dynamic_rotate %31 by %c1_i32 dim 1 : vector<16x16x8xf32>, i32 -> vector<16x16x8xf32>
    %36 = tpu.iota {dimensions = array<i32: 1>} : vector<16x16x8xi32>
    %c1_i32_19 = arith.constant 1 : i32
    %37 = vector.broadcast %c1_i32_19 : i32 to vector<16x16x8xi32>
    %38 = arith.cmpi sge, %36, %37 : vector<16x16x8xi32>
    %cst_20 = arith.constant 0.000000e+00 : f32
    %39 = vector.broadcast %cst_20 : f32 to vector<16x16x8xf32>
    %40 = arith.select %38, %35, %39 : vector<16x16x8xi1>, vector<16x16x8xf32>
    %c15_i32 = arith.constant 15 : i32
    %41 = tpu.dynamic_rotate %31 by %c15_i32 dim 1 : vector<16x16x8xf32>, i32 -> vector<16x16x8xf32>
    %42 = tpu.iota {dimensions = array<i32: 1>} : vector<16x16x8xi32>
    %c15_i32_21 = arith.constant 15 : i32
    %43 = vector.broadcast %c15_i32_21 : i32 to vector<16x16x8xi32>
    %44 = arith.cmpi slt, %42, %43 : vector<16x16x8xi32>
    %cst_22 = arith.constant 0.000000e+00 : f32
    %45 = vector.broadcast %cst_22 : f32 to vector<16x16x8xf32>
    %46 = arith.select %44, %41, %45 : vector<16x16x8xi1>, vector<16x16x8xf32>
    %c1_i32_23 = arith.constant 1 : i32
    %47 = tpu.dynamic_rotate %28 by %c1_i32_23 dim 1 : vector<16x16x8xf32>, i32 -> vector<16x16x8xf32>
    %48 = tpu.iota {dimensions = array<i32: 1>} : vector<16x16x8xi32>
    %c1_i32_24 = arith.constant 1 : i32
    %49 = vector.broadcast %c1_i32_24 : i32 to vector<16x16x8xi32>
    %50 = arith.cmpi sge, %48, %49 : vector<16x16x8xi32>
    %cst_25 = arith.constant 0.000000e+00 : f32
    %51 = vector.broadcast %cst_25 : f32 to vector<16x16x8xf32>
    %52 = arith.select %50, %47, %51 : vector<16x16x8xi1>, vector<16x16x8xf32>
    %c15_i32_26 = arith.constant 15 : i32
    %53 = tpu.dynamic_rotate %28 by %c15_i32_26 dim 1 : vector<16x16x8xf32>, i32 -> vector<16x16x8xf32>
    %54 = tpu.iota {dimensions = array<i32: 1>} : vector<16x16x8xi32>
    %c15_i32_27 = arith.constant 15 : i32
    %55 = vector.broadcast %c15_i32_27 : i32 to vector<16x16x8xi32>
    %56 = arith.cmpi slt, %54, %55 : vector<16x16x8xi32>
    %cst_28 = arith.constant 0.000000e+00 : f32
    %57 = vector.broadcast %cst_28 : f32 to vector<16x16x8xf32>
    %58 = arith.select %56, %53, %57 : vector<16x16x8xi1>, vector<16x16x8xf32>
    %c1_i32_29 = arith.constant 1 : i32
    %59 = tpu.dynamic_rotate %34 by %c1_i32_29 dim 1 : vector<16x16x8xf32>, i32 -> vector<16x16x8xf32>
    %60 = tpu.iota {dimensions = array<i32: 1>} : vector<16x16x8xi32>
    %c1_i32_30 = arith.constant 1 : i32
    %61 = vector.broadcast %c1_i32_30 : i32 to vector<16x16x8xi32>
    %62 = arith.cmpi sge, %60, %61 : vector<16x16x8xi32>
    %cst_31 = arith.constant 0.000000e+00 : f32
    %63 = vector.broadcast %cst_31 : f32 to vector<16x16x8xf32>
    %64 = arith.select %62, %59, %63 : vector<16x16x8xi1>, vector<16x16x8xf32>
    %c15_i32_32 = arith.constant 15 : i32
    %65 = tpu.dynamic_rotate %34 by %c15_i32_32 dim 1 : vector<16x16x8xf32>, i32 -> vector<16x16x8xf32>
    %66 = tpu.iota {dimensions = array<i32: 1>} : vector<16x16x8xi32>
    %c15_i32_33 = arith.constant 15 : i32
    %67 = vector.broadcast %c15_i32_33 : i32 to vector<16x16x8xi32>
    %68 = arith.cmpi slt, %66, %67 : vector<16x16x8xi32>
    %cst_34 = arith.constant 0.000000e+00 : f32
    %69 = vector.broadcast %cst_34 : f32 to vector<16x16x8xf32>
    %70 = arith.select %68, %65, %69 : vector<16x16x8xi1>, vector<16x16x8xf32>
    %71 = tpu.concatenate %40, %31, %46, %52, %28, %58, %64, %34, %70 in 2 : vector<16x16x8xf32>, vector<16x16x8xf32>, vector<16x16x8xf32>, vector<16x16x8xf32>, vector<16x16x8xf32>, vector<16x16x8xf32>, vector<16x16x8xf32>, vector<16x16x8xf32>, vector<16x16x8xf32> -> vector<16x16x72xf32>
    %72 = arith.truncf %71 : vector<16x16x72xf32> to vector<16x16x72xbf16>
    %73 = vector.shape_cast %72 : vector<16x16x72xbf16> to vector<256x72xbf16>
    %c0_35 = arith.constant 0 : index
    %c0_36 = arith.constant 0 : index
    %74 = vector.load %arg3[%c0_35, %c0_36] : memref<72x8xbf16, #tpu.memory_space<vmem>>, vector<72x8xbf16>
    %cst_37 = arith.constant dense<0.000000e+00> : vector<256x8xf32>
    %75 = tpu.matmul %73, %74, %cst_37 {dimension_numbers = #tpu.dot_dimension_numbers<[1], [0], [0], [1], [0, 0, 1, 1], [], []>} : vector<256x72xbf16>, vector<72x8xbf16>, vector<256x8xf32> -> vector<256x8xf32>
    %76 = vector.shape_cast %75 : vector<256x8xf32> to vector<16x16x8xf32>
    %77 = arith.addf %11, %76 : vector<16x16x8xf32>
    %c0_38 = arith.constant 0 : index
    %c0_39 = arith.constant 0 : index
    %c0_40 = arith.constant 0 : index
    %c0_41 = arith.constant 0 : index
    %78 = vector.load %arg9[%c0_38, %c0_39, %c0_40, %c0_41] : memref<1x16x16x8xf32, #tpu.memory_space<vmem>>, vector<1x16x16x8xf32>
    %79 = vector.shape_cast %78 : vector<1x16x16x8xf32> to vector<16x16x8xf32>
    %80 = vector.shape_cast %77 : vector<16x16x8xf32> to vector<1x16x16x8xf32>
    tpu.vector_store %arg9[%c0_38, %c0_39, %c0_40, %c0_41], %80 {strides = array<i32>} : memref<1x16x16x8xf32, #tpu.memory_space<vmem>>, vector<1x16x16x8xf32>,
    %c0_42 = arith.constant 0 : index
    %c0_43 = arith.constant 0 : index
    %c0_44 = arith.constant 0 : index
    %c0_45 = arith.constant 0 : index
    %81 = tpu.strided_load %arg9[%c0_42, %c0_43, %c0_44, %c0_45] {strides = array<i32: 1, 2, 2, 1>} : memref<1x16x16x8xf32, #tpu.memory_space<vmem>>, vector<1x8x8x8xf32>
    %c0_46 = arith.constant 0 : index
    %c0_47 = arith.constant 0 : index
    %c1 = arith.constant 1 : index
    %c0_48 = arith.constant 0 : index
    %82 = tpu.strided_load %arg9[%c0_46, %c0_47, %c1, %c0_48] {strides = array<i32: 1, 2, 2, 1>} : memref<1x16x16x8xf32, #tpu.memory_space<vmem>>, vector<1x8x8x8xf32>
    %c0_49 = arith.constant 0 : index
    %c1_50 = arith.constant 1 : index
    %c0_51 = arith.constant 0 : index
    %c0_52 = arith.constant 0 : index
    %83 = tpu.strided_load %arg9[%c0_49, %c1_50, %c0_51, %c0_52] {strides = array<i32: 1, 2, 2, 1>} : memref<1x16x16x8xf32, #tpu.memory_space<vmem>>, vector<1x8x8x8xf32>
    %c0_53 = arith.constant 0 : index
    %c1_54 = arith.constant 1 : index
    %c1_55 = arith.constant 1 : index
    %c0_56 = arith.constant 0 : index
    %84 = tpu.strided_load %arg9[%c0_53, %c1_54, %c1_55, %c0_56] {strides = array<i32: 1, 2, 2, 1>} : memref<1x16x16x8xf32, #tpu.memory_space<vmem>>, vector<1x8x8x8xf32>
    %85 = arith.addf %81, %82 : vector<1x8x8x8xf32>
    %86 = arith.addf %85, %83 : vector<1x8x8x8xf32>
    %87 = arith.addf %86, %84 : vector<1x8x8x8xf32>
    %cst_57 = arith.constant 2.500000e-01 : f32
    %88 = vector.broadcast %cst_57 : f32 to vector<1x8x8x8xf32>
    %89 = arith.mulf %88, %87 : vector<1x8x8x8xf32>
    %c0_58 = arith.constant 0 : index
    %c0_59 = arith.constant 0 : index
    %c0_60 = arith.constant 0 : index
    %c0_61 = arith.constant 0 : index
    %90 = vector.load %arg8[%c0_58, %c0_59, %c0_60, %c0_61] : memref<1x8x8x8xf32, #tpu.memory_space<vmem>>, vector<1x8x8x8xf32>
    tpu.vector_store %arg8[%c0_58, %c0_59, %c0_60, %c0_61], %89 {strides = array<i32>} : memref<1x8x8x8xf32, #tpu.memory_space<vmem>>, vector<1x8x8x8xf32>,
    return
  }
  func.func @transform_0(%arg0: i32) -> (i32, i32, i32, i32) {
    %c0_i32 = arith.constant 0 : i32
    %c0_i32_0 = arith.constant 0 : i32
    %c0_i32_1 = arith.constant 0 : i32
    %c0_i32_2 = arith.constant 0 : i32
    return %arg0, %c0_i32, %c0_i32_0, %c0_i32_1 : i32, i32, i32, i32
  }
  func.func @transform_1(%arg0: i32) -> (i32, i32, i32, i32) {
    %c0_i32 = arith.constant 0 : i32
    %c0_i32_0 = arith.constant 0 : i32
    %c0_i32_1 = arith.constant 0 : i32
    %c0_i32_2 = arith.constant 0 : i32
    return %arg0, %c0_i32, %c0_i32_0, %c0_i32_1 : i32, i32, i32, i32
  }
  func.func @transform_2(%arg0: i32) -> (i32, i32) {
    %c0_i32 = arith.constant 0 : i32
    %c0_i32_0 = arith.constant 0 : i32
    %c0_i32_1 = arith.constant 0 : i32
    return %c0_i32, %c0_i32_0 : i32, i32
  }
  func.func @transform_3(%arg0: i32) -> (i32, i32) {
    %c0_i32 = arith.constant 0 : i32
    %c0_i32_0 = arith.constant 0 : i32
    %c0_i32_1 = arith.constant 0 : i32
    return %c0_i32, %c0_i32_0 : i32, i32
  }
  func.func @transform_4(%arg0: i32) -> (i32, i32) {
    %c0_i32 = arith.constant 0 : i32
    %c0_i32_0 = arith.constant 0 : i32
    %c0_i32_1 = arith.constant 0 : i32
    return %c0_i32, %c0_i32_0 : i32, i32
  }
  func.func @transform_5(%arg0: i32) -> (i32, i32) {
    %c0_i32 = arith.constant 0 : i32
    %c0_i32_0 = arith.constant 0 : i32
    %c0_i32_1 = arith.constant 0 : i32
    return %c0_i32, %c0_i32_0 : i32, i32
  }
  func.func @transform_6(%arg0: i32) -> (i32, i32) {
    %c0_i32 = arith.constant 0 : i32
    %c0_i32_0 = arith.constant 0 : i32
    %c0_i32_1 = arith.constant 0 : i32
    return %c0_i32, %c0_i32_0 : i32, i32
  }
  func.func @transform_7(%arg0: i32) -> (i32, i32, i32, i32) {
    %c0_i32 = arith.constant 0 : i32
    %c0_i32_0 = arith.constant 0 : i32
    %c0_i32_1 = arith.constant 0 : i32
    %c0_i32_2 = arith.constant 0 : i32
    return %arg0, %c0_i32, %c0_i32_0, %c0_i32_1 : i32, i32, i32, i32
  }
  func.func @transform_8(%arg0: i32) -> (i32, i32, i32, i32) {
    %c0_i32 = arith.constant 0 : i32
    %c0_i32_0 = arith.constant 0 : i32
    %c0_i32_1 = arith.constant 0 : i32
    %c0_i32_2 = arith.constant 0 : i32
    return %arg0, %c0_i32, %c0_i32_0, %c0_i32_1 : i32, i32, i32, i32
  }
}

</mosaic_0001>

<llo_original>
// kernel: encoder_block.2
$region0: #{encoder_block.2}
  #allocation0 [shape = 'u32[]', space=smem, size = 0x4, offset = 0x4, fixed_abs, tag = 'smem constant byte address 0x4 - core index']
  #allocation1 [shape = 'u32[144,128]{1,0:T(1,128)}', space=vmem, size = 0x12000, scoped, tag = 'internal scratch']
  %s0 = inlined_call_operand.vmem [shape: f32[2,16,16,4], index: 0, kind: input, shape index: {}]
  %s1 = inlined_call_operand.vmem [shape: bf16[36,8], index: 1, kind: input, shape index: {}]
  %s2 = inlined_call_operand.vmem [shape: f32[1,4], index: 2, kind: input, shape index: {}]
  %s3 = inlined_call_operand.vmem [shape: f32[1,4], index: 3, kind: input, shape index: {}]
  %s4 = inlined_call_operand.vmem [shape: f32[2,16,16,8], index: 4, kind: output, shape index: {}]
  %s5 = sld [smem:[#allocation0]]
  $region49: #{encoder_block.2} parent=0
    _
  %s7 = ssub.s32 1, %s5
  %s8 = scalar_select 0, %s7, %s5
  loop: start=0, step=1, limit=4
  $region2: #{encoder_block.2} parent=0 // loop_pre_header
    _
  $region3: #{encoder_block.2} parent=0 // loop_header
    %s10 = sphi 0, %s14
    %p11 = scmp.ge.s32.totalorder %s10, 4
    %s20 = sphi 0, %s22
    %s23 = sphi 0, %s20
    %s24 = sphi 0, %s23
    %s40 = sphi 0, %s24
    %s44 = sphi 0, %s44
    %s46 = sphi 0, %s44
    %s47 = sphi 0, %s46
    %s61 = sphi 0, %s47
    %s65 = sphi 0, %s65
    %s67 = sphi 0, %s65
    %s68 = sphi 0, %s67
    %s82 = sphi 0, %s68
    %s86 = sphi 0, %s86
    %s88 = sphi 0, %s86
    %s89 = sphi 0, %s88
    %s103 = sphi 0, %s89
    %s109 = sphi 0, %s111
    %s112 = sphi 0, %s109
    %s113 = sphi 0, %s112
    %s129 = sphi 0, %s113
  $region4: #{encoder_block.2} parent=0 // loop_header_branch
    %13 = sbr.rel (%p11) target = $region8
  $region5: #{encoder_block.2} parent=0 // loop_body
    %s15 = ssub.s32 %s10, 1
    %s16 = ssub.s32 %s10, 2
    %s17 = sadd.s32 %s10, 1
    %s18 = ssub.s32 %s10, %s17
    %p19 = scmp.eq.s32.totalorder %s18, 0
    %s21 = sadd.s32 %s20, 1
    %s22 = scalar_select %p19, %s20, %s21
    %p25 = pneg %p19
    %p26 = scmp.eq.s32.totalorder %s10, 1
    %p27 = por %p25, %p26
    %p28 = scmp.ne.s32.totalorder %s20, %s23
    %p29 = scmp.eq.s32.totalorder %s10, 0
    %p30 = por %p28, %p29
    %p31 = scmp.ne.s32.totalorder %s20, %s23
    %p32 = scmp.eq.s32.totalorder %s15, 1
    %p33 = por %p31, %p32
    %p34 = scmp.ne.s32.totalorder %s23, %s24
    %p35 = scmp.eq.s32.totalorder %s15, 0
    %p36 = por %p34, %p35
    %p37 = scmp.ne.s32.totalorder %s23, %s24
    %p38 = scmp.eq.s32.totalorder %s16, 1
    %p39 = por %p37, %p38
    %p41 = scmp.ne.s32.totalorder %s24, %s40
    %p42 = scmp.eq.s32.totalorder %s16, 0
    %p43 = por %p41, %p42
    %s45 = sadd.s32 %s44, 1
    %p48 = scmp.eq.s32.totalorder %s10, 1
    %p49 = scmp.ne.s32.totalorder %s44, %s46
    %p50 = scmp.eq.s32.totalorder %s10, 0
    %p51 = por %p49, %p50
    %p52 = scmp.ne.s32.totalorder %s44, %s46
    %p53 = scmp.eq.s32.totalorder %s15, 1
    %p54 = por %p52, %p53
    %p55 = scmp.ne.s32.totalorder %s46, %s47
    %p56 = scmp.eq.s32.totalorder %s15, 0
    %p57 = por %p55, %p56
    %p58 = scmp.ne.s32.totalorder %s46, %s47
    %p59 = scmp.eq.s32.totalorder %s16, 1
    %p60 = por %p58, %p59
    %p62 = scmp.ne.s32.totalorder %s47, %s61
    %p63 = scmp.eq.s32.totalorder %s16, 0
    %p64 = por %p62, %p63
    %s66 = sadd.s32 %s65, 1
    %p69 = scmp.eq.s32.totalorder %s10, 1
    %p70 = scmp.ne.s32.totalorder %s65, %s67
    %p71 = scmp.eq.s32.totalorder %s10, 0
    %p72 = por %p70, %p71
    %p73 = scmp.ne.s32.totalorder %s65, %s67
    %p74 = scmp.eq.s32.totalorder %s15, 1
    %p75 = por %p73, %p74
    %p76 = scmp.ne.s32.totalorder %s67, %s68
    %p77 = scmp.eq.s32.totalorder %s15, 0
    %p78 = por %p76, %p77
    %p79 = scmp.ne.s32.totalorder %s67, %s68
    %p80 = scmp.eq.s32.totalorder %s16, 1
    %p81 = por %p79, %p80
    %p83 = scmp.ne.s32.totalorder %s68, %s82
    %p84 = scmp.eq.s32.totalorder %s16, 0
    %p85 = por %p83, %p84
    %s87 = sadd.s32 %s86, 1
    %p90 = scmp.eq.s32.totalorder %s10, 1
    %p91 = scmp.ne.s32.totalorder %s86, %s88
    %p92 = scmp.eq.s32.totalorder %s10, 0
    %p93 = por %p91, %p92
    %p94 = scmp.ne.s32.totalorder %s86, %s88
    %p95 = scmp.eq.s32.totalorder %s15, 1
    %p96 = por %p94, %p95
    %p97 = scmp.ne.s32.totalorder %s88, %s89
    %p98 = scmp.eq.s32.totalorder %s15, 0
    %p99 = por %p97, %p98
    %p100 = scmp.ne.s32.totalorder %s88, %s89
    %p101 = scmp.eq.s32.totalorder %s16, 1
    %p102 = por %p100, %p101
    %p104 = scmp.ne.s32.totalorder %s89, %s103
    %p105 = scmp.eq.s32.totalorder %s16, 0
    %p106 = por %p104, %p105
    %s107 = ssub.s32 %s10, %s17
    %p108 = scmp.eq.s32.totalorder %s107, 0
    %s110 = sadd.s32 %s109, 1
    %s111 = scalar_select %p108, %s109, %s110
    %p114 = pneg %p108
    %p115 = scmp.eq.s32.totalorder %s10, 1
    %p116 = por %p114, %p115
    %p117 = scmp.ne.s32.totalorder %s109, %s112
    %p118 = scmp.eq.s32.totalorder %s10, 0
    %p119 = por %p117, %p118
    %p120 = scmp.ne.s32.totalorder %s109, %s112
    %p121 = scmp.eq.s32.totalorder %s15, 1
    %p122 = por %p120, %p121
    %p123 = scmp.ne.s32.totalorder %s112, %s113
    %p124 = scmp.eq.s32.totalorder %s15, 0
    %p125 = por %p123, %p124
    %p126 = scmp.ne.s32.totalorder %s112, %s113
    %p127 = scmp.eq.s32.totalorder %s16, 1
    %p128 = por %p126, %p127
    %p130 = scmp.ne.s32.totalorder %s113, %s129
    %p131 = scmp.eq.s32.totalorder %s16, 0
    %p132 = por %p130, %p131
    %p133 = scmp.le.s32.totalorder 1, %s10
    %p134 = scmp.lt.s32.totalorder %s10, 3
    %p135 = pnand %p133, %p134
    %p136 = pneg %p135
    // Predicated region
    $region9: #{encoder_block.2} parent=5 // pred_check
      _
    $region10: #{encoder_block.2} parent=5 // pred_check_branch
      %138 = sbr.rel (%p135) target = $region12
    $region11: #{encoder_block.2} parent=5 // pred_region
      %s139 = ssub.s32 %s10, 1
      // Predicated region
      $region13: #{encoder_block.2} parent=11 // pred_check
        %p140 = pneg %p57
      $region14: #{encoder_block.2} parent=11 // pred_check_branch
        %142 = sbr.rel (%p140) target = $region16
      $region15: #{encoder_block.2} parent=11 // pred_region
        _
      $region16: #{encoder_block.2} parent=11 // pred_fallthru
        _
      // Predicated region
      $region17: #{encoder_block.2} parent=11 // pred_check
        %p143 = pneg %p78
      $region18: #{encoder_block.2} parent=11 // pred_check_branch
        %145 = sbr.rel (%p143) target = $region20
      $region19: #{encoder_block.2} parent=11 // pred_region
        _
      $region20: #{encoder_block.2} parent=11 // pred_fallthru
        _
      // Predicated region
      $region21: #{encoder_block.2} parent=11 // pred_check
        %p146 = pneg %p99
      $region22: #{encoder_block.2} parent=11 // pred_check_branch
        %148 = sbr.rel (%p146) target = $region24
      $region23: #{encoder_block.2} parent=11 // pred_region
        _
      $region24: #{encoder_block.2} parent=11 // pred_fallthru
        _
    $region12: #{encoder_block.2} parent=5 // pred_fallthru
      _
    %p149 = scmp.lt.s32.totalorder %s10, 2
    // Predicated region
    $region25: #{encoder_block.2} parent=5 // pred_check
      %p150 = pneg %p149
    $region26: #{encoder_block.2} parent=5 // pred_check_branch
      %152 = sbr.rel (%p150) target = $region28
    $region27: #{encoder_block.2} parent=5 // pred_region
      // Predicated region
      $region29: #{encoder_block.2} parent=27 // pred_check
        %p153 = pneg %p30
      $region30: #{encoder_block.2} parent=27 // pred_check_branch
        %155 = sbr.rel (%p153) target = $region32
      $region31: #{encoder_block.2} parent=27 // pred_region
        %p156 = scmp.lt.s32.totalorder %s10, 1
        %s157 = scalar_select %p156, %s10, 1
        %s158 = smul.addr %s157, 32
        %s159 = smul.addr %s158, 8
        %s160 = scalar_lea.vmem %s0, %s159
      $region32: #{encoder_block.2} parent=27 // pred_fallthru
        _
    $region28: #{encoder_block.2} parent=5 // pred_fallthru
      _
    %p161 = scmp.le.s32.totalorder 1, %s10
    %p162 = scmp.lt.s32.totalorder %s10, 3
    %p163 = pnand %p161, %p162
    %p164 = pneg %p163
    // Predicated region
    $region33: #{encoder_block.2} parent=5 // pred_check
      _
    $region34: #{encoder_block.2} parent=5 // pred_check_branch
      %166 = sbr.rel (%p163) target = $region36
    $region35: #{encoder_block.2} parent=5 // pred_region
      %s167 = ssub.s32 %s10, 1
      %p168 = scmp.lt.s32.totalorder %s15, 1
      %s169 = scalar_select %p168, %s15, 1
      %s170 = smul.addr %s169, 32
      %s171 = smul.addr %s170, 8
      %s172 = scalar_lea.vmem %s0, %s171
      %p173 = pneg %p36
      %p174 = pneg %p33
      %p175 = pneg %p57
      %p176 = pneg %p54
      %p177 = pneg %p78
      %p178 = pneg %p75
      %p179 = pneg %p99
      %p180 = pneg %p96
      %p181 = pneg %p125
      %p182 = pneg %p122
      %p183 = scmp.lt.s32.totalorder %s15, 1
      %s184 = scalar_select %p183, %s15, 1
      %s185 = smul.addr %s184, 32
      %s186 = smul.addr %s185, 8
      %s187 = scalar_lea.vmem %s4, %s186
      %p188 = scmp.lt.s32.totalorder %s15, 1
      %s189 = scalar_select %p188, %s15, 1
      %s190 = smul.addr %s189, 32
      %s191 = smul.addr %s190, 8
      %s192 = scalar_lea.vmem %s0, %s191
      %p193 = scmp.lt.s32.totalorder %s15, 1
      %s194 = scalar_select %p193, %s15, 1
      %s195 = smul.addr %s194, 32
      %s196 = smul.addr %s195, 8
      %s197 = scalar_lea.vmem %s4, %s196
      %v199 = vld [vmem:[%s192] sm:$0xff]
      %v200 = vld [vmem:[%s192 + $0x8] sm:$0xff]
      %v201 = vld [vmem:[%s192 + $0x10] sm:$0xff]
      %v202 = vld [vmem:[%s192 + $0x18] sm:$0xff]
      %v203 = vld [vmem:[%s192 + $0x20] sm:$0xff]
      %v204 = vld [vmem:[%s192 + $0x28] sm:$0xff]
      %v205 = vld [vmem:[%s192 + $0x30] sm:$0xff]
      %v206 = vld [vmem:[%s192 + $0x38] sm:$0xff]
      %v207 = vld [vmem:[%s192 + $0x40] sm:$0xff]
      %v208 = vld [vmem:[%s192 + $0x48] sm:$0xff]
      %v209 = vld [vmem:[%s192 + $0x50] sm:$0xff]
      %v210 = vld [vmem:[%s192 + $0x58] sm:$0xff]
      %v211 = vld [vmem:[%s192 + $0x60] sm:$0xff]
      %v212 = vld [vmem:[%s192 + $0x68] sm:$0xff]
      %v213 = vld [vmem:[%s192 + $0x70] sm:$0xff]
      %v214 = vld [vmem:[%s192 + $0x78] sm:$0xff]
      %v215 = vld [vmem:[%s192 + $0x80] sm:$0xff]
      %v216 = vld [vmem:[%s192 + $0x88] sm:$0xff]
      %v217 = vld [vmem:[%s192 + $0x90] sm:$0xff]
      %v218 = vld [vmem:[%s192 + $0x98] sm:$0xff]
      %v219 = vld [vmem:[%s192 + $0xa0] sm:$0xff]
      %v220 = vld [vmem:[%s192 + $0xa8] sm:$0xff]
      %v221 = vld [vmem:[%s192 + $0xb0] sm:$0xff]
      %v222 = vld [vmem:[%s192 + $0xb8] sm:$0xff]
      %v223 = vld [vmem:[%s192 + $0xc0] sm:$0xff]
      %v224 = vld [vmem:[%s192 + $0xc8] sm:$0xff]
      %v225 = vld [vmem:[%s192 + $0xd0] sm:$0xff]
      %v226 = vld [vmem:[%s192 + $0xd8] sm:$0xff]
      %v227 = vld [vmem:[%s192 + $0xe0] sm:$0xff]
      %v228 = vld [vmem:[%s192 + $0xe8] sm:$0xff]
      %v229 = vld [vmem:[%s192 + $0xf0] sm:$0xff]
      %v230 = vld [vmem:[%s192 + $0xf8] sm:$0xff]
      %v231 = vld [vmem:[%s2] sm:$0x1]
      %v233 = vlaneseq
      %v234 = vshrl.u32 %v233, 7
      %v235 = vsub.s32 0, %v234
      %v236 = vrot.slane %v231, %v235
      %v238 = vmul.f32 %v199, %v236
      %v239 = vmul.f32 %v200, %v236
      %v240 = vmul.f32 %v201, %v236
      %v241 = vmul.f32 %v202, %v236
      %v242 = vmul.f32 %v203, %v236
      %v243 = vmul.f32 %v204, %v236
      %v244 = vmul.f32 %v205, %v236
      %v245 = vmul.f32 %v206, %v236
      %v246 = vmul.f32 %v207, %v236
      %v247 = vmul.f32 %v208, %v236
      %v248 = vmul.f32 %v209, %v236
      %v249 = vmul.f32 %v210, %v236
      %v250 = vmul.f32 %v211, %v236
      %v251 = vmul.f32 %v212, %v236
      %v252 = vmul.f32 %v213, %v236
      %v253 = vmul.f32 %v214, %v236
      %v254 = vmul.f32 %v215, %v236
      %v255 = vmul.f32 %v216, %v236
      %v256 = vmul.f32 %v217, %v236
      %v257 = vmul.f32 %v218, %v236
      %v258 = vmul.f32 %v219, %v236
      %v259 = vmul.f32 %v220, %v236
      %v260 = vmul.f32 %v221, %v236
      %v261 = vmul.f32 %v222, %v236
      %v262 = vmul.f32 %v223, %v236
      %v263 = vmul.f32 %v224, %v236
      %v264 = vmul.f32 %v225, %v236
      %v265 = vmul.f32 %v226, %v236
      %v266 = vmul.f32 %v227, %v236
      %v267 = vmul.f32 %v228, %v236
      %v268 = vmul.f32 %v229, %v236
      %v269 = vmul.f32 %v230, %v236
      %v270 = vld [vmem:[%s3] sm:$0x1]
      %v272 = vlaneseq
      %v273 = vshrl.u32 %v272, 7
      %v274 = vsub.s32 0, %v273
      %v275 = vrot.slane %v270, %v274
      %v277 = vadd.f32 %v238, %v275
      %v278 = vadd.f32 %v239, %v275
      %v279 = vadd.f32 %v240, %v275
      %v280 = vadd.f32 %v241, %v275
      %v281 = vadd.f32 %v242, %v275
      %v282 = vadd.f32 %v243, %v275
      %v283 = vadd.f32 %v244, %v275
      %v284 = vadd.f32 %v245, %v275
      %v285 = vadd.f32 %v246, %v275
      %v286 = vadd.f32 %v247, %v275
      %v287 = vadd.f32 %v248, %v275
      %v288 = vadd.f32 %v249, %v275
      %v289 = vadd.f32 %v250, %v275
      %v290 = vadd.f32 %v251, %v275
      %v291 = vadd.f32 %v252, %v275
      %v292 = vadd.f32 %v253, %v275
      %v293 = vadd.f32 %v254, %v275
      %v294 = vadd.f32 %v255, %v275
      %v295 = vadd.f32 %v256, %v275
      %v296 = vadd.f32 %v257, %v275
      %v297 = vadd.f32 %v258, %v275
      %v298 = vadd.f32 %v259, %v275
      %v299 = vadd.f32 %v260, %v275
      %v300 = vadd.f32 %v261, %v275
      %v301 = vadd.f32 %v262, %v275
      %v302 = vadd.f32 %v263, %v275
      %v303 = vadd.f32 %v264, %v275
      %v304 = vadd.f32 %v265, %v275
      %v305 = vadd.f32 %v266, %v275
      %v306 = vadd.f32 %v267, %v275
      %v307 = vadd.f32 %v268, %v275
      %v308 = vadd.f32 %v269, %v275
      %vm309 = vcmp.ge.f32.partialorder %v277, 0.0
      %vm310 = vcmp.ge.f32.partialorder %v278, 0.0
      %vm311 = vcmp.ge.f32.partialorder %v279, 0.0
      %vm312 = vcmp.ge.f32.partialorder %v280, 0.0
      %vm313 = vcmp.ge.f32.partialorder %v281, 0.0
      %vm314 = vcmp.ge.f32.partialorder %v282, 0.0
      %vm315 = vcmp.ge.f32.partialorder %v283, 0.0
      %vm316 = vcmp.ge.f32.partialorder %v284, 0.0
      %vm317 = vcmp.ge.f32.partialorder %v285, 0.0
      %vm318 = vcmp.ge.f32.partialorder %v286, 0.0
      %vm319 = vcmp.ge.f32.partialorder %v287, 0.0
      %vm320 = vcmp.ge.f32.partialorder %v288, 0.0
      %vm321 = vcmp.ge.f32.partialorder %v289, 0.0
      %vm322 = vcmp.ge.f32.partialorder %v290, 0.0
      %vm323 = vcmp.ge.f32.partialorder %v291, 0.0
      %vm324 = vcmp.ge.f32.partialorder %v292, 0.0
      %vm325 = vcmp.ge.f32.partialorder %v293, 0.0
      %vm326 = vcmp.ge.f32.partialorder %v294, 0.0
      %vm327 = vcmp.ge.f32.partialorder %v295, 0.0
      %vm328 = vcmp.ge.f32.partialorder %v296, 0.0
      %vm329 = vcmp.ge.f32.partialorder %v297, 0.0
      %vm330 = vcmp.ge.f32.partialorder %v298, 0.0
      %vm331 = vcmp.ge.f32.partialorder %v299, 0.0
      %vm332 = vcmp.ge.f32.partialorder %v300, 0.0
      %vm333 = vcmp.ge.f32.partialorder %v301, 0.0
      %vm334 = vcmp.ge.f32.partialorder %v302, 0.0
      %vm335 = vcmp.ge.f32.partialorder %v303, 0.0
      %vm336 = vcmp.ge.f32.partialorder %v304, 0.0
      %vm337 = vcmp.ge.f32.partialorder %v305, 0.0
      %vm338 = vcmp.ge.f32.partialorder %v306, 0.0
      %vm339 = vcmp.ge.f32.partialorder %v307, 0.0
      %vm340 = vcmp.ge.f32.partialorder %v308, 0.0
      %v341 = vmul.f32 %v277, 0.01
      %v342 = vmul.f32 %v278, 0.01
      %v343 = vmul.f32 %v279, 0.01
      %v344 = vmul.f32 %v280, 0.01
      %v345 = vmul.f32 %v281, 0.01
      %v346 = vmul.f32 %v282, 0.01
      %v347 = vmul.f32 %v283, 0.01
      %v348 = vmul.f32 %v284, 0.01
      %v349 = vmul.f32 %v285, 0.01
      %v350 = vmul.f32 %v286, 0.01
      %v351 = vmul.f32 %v287, 0.01
      %v352 = vmul.f32 %v288, 0.01
      %v353 = vmul.f32 %v289, 0.01
      %v354 = vmul.f32 %v290, 0.01
      %v355 = vmul.f32 %v291, 0.01
      %v356 = vmul.f32 %v292, 0.01
      %v357 = vmul.f32 %v293, 0.01
      %v358 = vmul.f32 %v294, 0.01
      %v359 = vmul.f32 %v295, 0.01
      %v360 = vmul.f32 %v296, 0.01
      %v361 = vmul.f32 %v297, 0.01
      %v362 = vmul.f32 %v298, 0.01
      %v363 = vmul.f32 %v299, 0.01
      %v364 = vmul.f32 %v300, 0.01
      %v365 = vmul.f32 %v301, 0.01
      %v366 = vmul.f32 %v302, 0.01
      %v367 = vmul.f32 %v303, 0.01
      %v368 = vmul.f32 %v304, 0.01
      %v369 = vmul.f32 %v305, 0.01
      %v370 = vmul.f32 %v306, 0.01
      %v371 = vmul.f32 %v307, 0.01
      %v372 = vmul.f32 %v308, 0.01
      %v373 = vsel %vm309, %v277, %v341
      %v374 = vsel %vm310, %v278, %v342
      %v375 = vsel %vm311, %v279, %v343
      %v376 = vsel %vm312, %v280, %v344
      %v377 = vsel %vm313, %v281, %v345
      %v378 = vsel %vm314, %v282, %v346
      %v379 = vsel %vm315, %v283, %v347
      %v380 = vsel %vm316, %v284, %v348
      %v381 = vsel %vm317, %v285, %v349
      %v382 = vsel %vm318, %v286, %v350
      %v383 = vsel %vm319, %v287, %v351
      %v384 = vsel %vm320, %v288, %v352
      %v385 = vsel %vm321, %v289, %v353
      %v386 = vsel %vm322, %v290, %v354
      %v387 = vsel %vm323, %v291, %v355
      %v388 = vsel %vm324, %v292, %v356
      %v389 = vsel %vm325, %v293, %v357
      %v390 = vsel %vm326, %v294, %v358
      %v391 = vsel %vm327, %v295, %v359
      %v392 = vsel %vm328, %v296, %v360
      %v393 = vsel %vm329, %v297, %v361
      %v394 = vsel %vm330, %v298, %v362
      %v395 = vsel %vm331, %v299, %v363
      %v396 = vsel %vm332, %v300, %v364
      %v397 = vsel %vm333, %v301, %v365
      %v398 = vsel %vm334, %v302, %v366
      %v399 = vsel %vm335, %v303, %v367
      %v400 = vsel %vm336, %v304, %v368
      %v401 = vsel %vm337, %v305, %v369
      %v402 = vsel %vm338, %v306, %v370
      %v403 = vsel %vm339, %v307, %v371
      %v404 = vsel %vm340, %v308, %v372
      %v405 = vrot.slane %v373, 7
      %v406 = vrot.slane %v375, 7
      %v407 = vrot.slane %v377, 7
      %v408 = vrot.slane %v379, 7
      %v409 = vrot.slane %v381, 7
      %v410 = vrot.slane %v383, 7
      %v411 = vrot.slane %v385, 7
      %v412 = vrot.slane %v387, 7
      %v413 = vrot.slane %v389, 7
      %v414 = vrot.slane %v391, 7
      %v415 = vrot.slane %v393, 7
      %v416 = vrot.slane %v395, 7
      %v417 = vrot.slane %v397, 7
      %v418 = vrot.slane %v399, 7
      %v419 = vrot.slane %v401, 7
      %v420 = vrot.slane %v374, 7
      %v421 = vrot.slane %v376, 7
      %v422 = vrot.slane %v378, 7
      %v423 = vrot.slane %v380, 7
      %v424 = vrot.slane %v382, 7
      %v425 = vrot.slane %v384, 7
      %v426 = vrot.slane %v386, 7
      %v427 = vrot.slane %v388, 7
      %v428 = vrot.slane %v390, 7
      %v429 = vrot.slane %v392, 7
      %v430 = vrot.slane %v394, 7
      %v431 = vrot.slane %v396, 7
      %v432 = vrot.slane %v398, 7
      %v433 = vrot.slane %v400, 7
      %v434 = vrot.slane %v402, 7
      %v435 = vlaneseq
      %v436 = vshrl.u32 %v435, 7
      %vm437 = vcmp.lt.s32.totalorder %v436, 1
      %v438 = vsel %vm437, %v405, %v420
      %v439 = vsel %vm437, %v406, %v421
      %v440 = vsel %vm437, %v407, %v422
      %v441 = vsel %vm437, %v408, %v423
      %v442 = vsel %vm437, %v409, %v424
      %v443 = vsel %vm437, %v410, %v425
      %v444 = vsel %vm437, %v411, %v426
      %v445 = vsel %vm437, %v412, %v427
      %v446 = vsel %vm437, %v413, %v428
      %v447 = vsel %vm437, %v414, %v429
      %v448 = vsel %vm437, %v415, %v430
      %v449 = vsel %vm437, %v416, %v431
      %v450 = vsel %vm437, %v417, %v432
      %v451 = vsel %vm437, %v418, %v433
      %v452 = vsel %vm437, %v419, %v434
      %v453 = vsel %vm437, %v420, %v405
      %v454 = vsel %vm437, %v421, %v406
      %v455 = vsel %vm437, %v422, %v407
      %v456 = vsel %vm437, %v423, %v408
      %v457 = vsel %vm437, %v424, %v409
      %v458 = vsel %vm437, %v425, %v410
      %v459 = vsel %vm437, %v426, %v411
      %v460 = vsel %vm437, %v427, %v412
      %v461 = vsel %vm437, %v428, %v413
      %v462 = vsel %vm437, %v429, %v414
      %v463 = vsel %vm437, %v430, %v415
      %v464 = vsel %vm437, %v431, %v416
      %v465 = vsel %vm437, %v432, %v417
      %v466 = vsel %vm437, %v433, %v418
      %v467 = vsel %vm437, %v434, %v419
      %v468 = vadd.s32 %v436, 8
      %vm469 = vcmp.ge.s32.totalorder %v436, 1
      %vm470 = vcmp.ge.s32.totalorder %v468, 1
      %v471 = vsel %vm469, 0.0, 0.0
      %v472 = vsel %vm470, 0.0, 0.0
      %v473 = vsel %vm469, %v453, 0.0
      %v474 = vsel %vm470, %v438, 0.0
      %v475 = vsel %vm469, %v454, 0.0
      %v476 = vsel %vm470, %v439, 0.0
      %v477 = vsel %vm469, %v455, 0.0
      %v478 = vsel %vm470, %v440, 0.0
      %v479 = vsel %vm469, %v456, 0.0
      %v480 = vsel %vm470, %v441, 0.0
      %v481 = vsel %vm469, %v457, 0.0
      %v482 = vsel %vm470, %v442, 0.0
      %v483 = vsel %vm469, %v458, 0.0
      %v484 = vsel %vm470, %v443, 0.0
      %v485 = vsel %vm469, %v459, 0.0
      %v486 = vsel %vm470, %v444, 0.0
      %v487 = vsel %vm469, %v460, 0.0
      %v488 = vsel %vm470, %v445, 0.0
      %v489 = vsel %vm469, %v461, 0.0
      %v490 = vsel %vm470, %v446, 0.0
      %v491 = vsel %vm469, %v462, 0.0
      %v492 = vsel %vm470, %v447, 0.0
      %v493 = vsel %vm469, %v463, 0.0
      %v494 = vsel %vm470, %v448, 0.0
      %v495 = vsel %vm469, %v464, 0.0
      %v496 = vsel %vm470, %v449, 0.0
      %v497 = vsel %vm469, %v465, 0.0
      %v498 = vsel %vm470, %v450, 0.0
      %v499 = vsel %vm469, %v466, 0.0
      %v500 = vsel %vm470, %v451, 0.0
      %v501 = vsel %vm469, %v467, 0.0
      %v502 = vsel %vm470, %v452, 0.0
      %v503 = vrot.slane %v373, 1
      %v504 = vrot.slane %v375, 1
      %v505 = vrot.slane %v377, 1
      %v506 = vrot.slane %v379, 1
      %v507 = vrot.slane %v381, 1
      %v508 = vrot.slane %v383, 1
      %v509 = vrot.slane %v385, 1
      %v510 = vrot.slane %v387, 1
      %v511 = vrot.slane %v389, 1
      %v512 = vrot.slane %v391, 1
      %v513 = vrot.slane %v393, 1
      %v514 = vrot.slane %v395, 1
      %v515 = vrot.slane %v397, 1
      %v516 = vrot.slane %v399, 1
      %v517 = vrot.slane %v401, 1
      %v518 = vrot.slane %v374, 1
      %v519 = vrot.slane %v376, 1
      %v520 = vrot.slane %v378, 1
      %v521 = vrot.slane %v380, 1
      %v522 = vrot.slane %v382, 1
      %v523 = vrot.slane %v384, 1
      %v524 = vrot.slane %v386, 1
      %v525 = vrot.slane %v388, 1
      %v526 = vrot.slane %v390, 1
      %v527 = vrot.slane %v392, 1
      %v528 = vrot.slane %v394, 1
      %v529 = vrot.slane %v396, 1
      %v530 = vrot.slane %v398, 1
      %v531 = vrot.slane %v400, 1
      %v532 = vrot.slane %v402, 1
      %vm533 = vcmp.lt.s32.totalorder %v436, 7
      %v534 = vsel %vm533, %v503, %v518
      %v535 = vsel %vm533, %v504, %v519
      %v536 = vsel %vm533, %v505, %v520
      %v537 = vsel %vm533, %v506, %v521
      %v538 = vsel %vm533, %v507, %v522
      %v539 = vsel %vm533, %v508, %v523
      %v540 = vsel %vm533, %v509, %v524
      %v541 = vsel %vm533, %v510, %v525
      %v542 = vsel %vm533, %v511, %v526
      %v543 = vsel %vm533, %v512, %v527
      %v544 = vsel %vm533, %v513, %v528
      %v545 = vsel %vm533, %v514, %v529
      %v546 = vsel %vm533, %v515, %v530
      %v547 = vsel %vm533, %v516, %v531
      %v548 = vsel %vm533, %v517, %v532
      %v549 = vsel %vm533, %v518, %v503
      %v550 = vsel %vm533, %v519, %v504
      %v551 = vsel %vm533, %v520, %v505
      %v552 = vsel %vm533, %v521, %v506
      %v553 = vsel %vm533, %v522, %v507
      %v554 = vsel %vm533, %v523, %v508
      %v555 = vsel %vm533, %v524, %v509
      %v556 = vsel %vm533, %v525, %v510
      %v557 = vsel %vm533, %v526, %v511
      %v558 = vsel %vm533, %v527, %v512
      %v559 = vsel %vm533, %v528, %v513
      %v560 = vsel %vm533, %v529, %v514
      %v561 = vsel %vm533, %v530, %v515
      %v562 = vsel %vm533, %v531, %v516
      %v563 = vsel %vm533, %v532, %v517
      %vm564 = vcmp.lt.s32.totalorder %v436, 15
      %vm565 = vcmp.lt.s32.totalorder %v468, 15
      %v566 = vsel %vm564, 0.0, 0.0
      %v567 = vsel %vm565, 0.0, 0.0
      %v568 = vsel %vm564, %v534, 0.0
      %v569 = vsel %vm565, %v549, 0.0
      %v570 = vsel %vm564, %v535, 0.0
      %v571 = vsel %vm565, %v550, 0.0
      %v572 = vsel %vm564, %v536, 0.0
      %v573 = vsel %vm565, %v551, 0.0
      %v574 = vsel %vm564, %v537, 0.0
      %v575 = vsel %vm565, %v552, 0.0
      %v576 = vsel %vm564, %v538, 0.0
      %v577 = vsel %vm565, %v553, 0.0
      %v578 = vsel %vm564, %v539, 0.0
      %v579 = vsel %vm565, %v554, 0.0
      %v580 = vsel %vm564, %v540, 0.0
      %v581 = vsel %vm565, %v555, 0.0
      %v582 = vsel %vm564, %v541, 0.0
      %v583 = vsel %vm565, %v556, 0.0
      %v584 = vsel %vm564, %v542, 0.0
      %v585 = vsel %vm565, %v557, 0.0
      %v586 = vsel %vm564, %v543, 0.0
      %v587 = vsel %vm565, %v558, 0.0
      %v588 = vsel %vm564, %v544, 0.0
      %v589 = vsel %vm565, %v559, 0.0
      %v590 = vsel %vm564, %v545, 0.0
      %v591 = vsel %vm565, %v560, 0.0
      %v592 = vsel %vm564, %v546, 0.0
      %v593 = vsel %vm565, %v561, 0.0
      %v594 = vsel %vm564, %v547, 0.0
      %v595 = vsel %vm565, %v562, 0.0
      %v596 = vsel %vm564, %v548, 0.0
      %v597 = vsel %vm565, %v563, 0.0
      %v598 = vrot.slane %v403, 7
      %v599 = vrot.slane %v404, 7
      %v600 = vsel %vm437, %v598, %v599
      %v601 = vsel %vm437, %v599, %v598
      %v602 = vsel %vm469, %v601, 0.0
      %v603 = vsel %vm470, %v600, 0.0
      %v604 = vrot.slane %v403, 1
      %v605 = vrot.slane %v404, 1
      %v606 = vsel %vm533, %v604, %v605
      %v607 = vsel %vm533, %v605, %v604
      %v608 = vsel %vm564, %v606, 0.0
      %v609 = vsel %vm565, %v607, 0.0
      %641 = vrot.lane.b32.xlu0 0.0, 4
      %v642 = vpop.permute.xlu0 %641
      %643 = vrot.lane.b32.xlu0 %v373, 4
      %v644 = vpop.permute.xlu0 %643
      %645 = vrot.lane.b32.xlu0 %v374, 4
      %v646 = vpop.permute.xlu0 %645
      %647 = vrot.lane.b32.xlu0 %v375, 4
      %v648 = vpop.permute.xlu0 %647
      %649 = vrot.lane.b32.xlu0 %v376, 4
      %v650 = vpop.permute.xlu0 %649
      %651 = vrot.lane.b32.xlu0 %v377, 4
      %v652 = vpop.permute.xlu0 %651
      %653 = vrot.lane.b32.xlu0 %v378, 4
      %v654 = vpop.permute.xlu0 %653
      %655 = vrot.lane.b32.xlu0 %v379, 4
      %v656 = vpop.permute.xlu0 %655
      %657 = vrot.lane.b32.xlu0 %v380, 4
      %v658 = vpop.permute.xlu0 %657
      %659 = vrot.lane.b32.xlu0 %v381, 4
      %v660 = vpop.permute.xlu0 %659
      %661 = vrot.lane.b32.xlu0 %v382, 4
      %v662 = vpop.permute.xlu0 %661
      %663 = vrot.lane.b32.xlu0 %v383, 4
      %v664 = vpop.permute.xlu0 %663
      %665 = vrot.lane.b32.xlu0 %v384, 4
      %v666 = vpop.permute.xlu0 %665
      %667 = vrot.lane.b32.xlu0 %v385, 4
      %v668 = vpop.permute.xlu0 %667
      %669 = vrot.lane.b32.xlu0 %v386, 4
      %v670 = vpop.permute.xlu0 %669
      %671 = vrot.lane.b32.xlu0 %v387, 4
      %v672 = vpop.permute.xlu0 %671
      %673 = vrot.lane.b32.xlu0 %v388, 4
      %v674 = vpop.permute.xlu0 %673
      %675 = vrot.lane.b32.xlu0 %v389, 4
      %v676 = vpop.permute.xlu0 %675
      %677 = vrot.lane.b32.xlu0 %v390, 4
      %v678 = vpop.permute.xlu0 %677
      %679 = vrot.lane.b32.xlu0 %v391, 4
      %v680 = vpop.permute.xlu0 %679
      %681 = vrot.lane.b32.xlu0 %v392, 4
      %v682 = vpop.permute.xlu0 %681
      %683 = vrot.lane.b32.xlu0 %v393, 4
      %v684 = vpop.permute.xlu0 %683
      %685 = vrot.lane.b32.xlu0 %v394, 4
      %v686 = vpop.permute.xlu0 %685
      %687 = vrot.lane.b32.xlu0 %v395, 4
      %v688 = vpop.permute.xlu0 %687
      %689 = vrot.lane.b32.xlu0 %v396, 4
      %v690 = vpop.permute.xlu0 %689
      %691 = vrot.lane.b32.xlu0 %v397, 4
      %v692 = vpop.permute.xlu0 %691
      %693 = vrot.lane.b32.xlu0 %v398, 4
      %v694 = vpop.permute.xlu0 %693
      %695 = vrot.lane.b32.xlu0 %v399, 4
      %v696 = vpop.permute.xlu0 %695
      %697 = vrot.lane.b32.xlu0 %v400, 4
      %v698 = vpop.permute.xlu0 %697
      %699 = vrot.lane.b32.xlu0 %v401, 4
      %v700 = vpop.permute.xlu0 %699
      %701 = vrot.lane.b32.xlu0 %v402, 4
      %v702 = vpop.permute.xlu0 %701
      %766 = vrot.lane.b32.xlu0 %v566, 8
      %v767 = vpop.permute.xlu0 %766
      %768 = vrot.lane.b32.xlu0 %v567, 8
      %v769 = vpop.permute.xlu0 %768
      %770 = vrot.lane.b32.xlu0 %v568, 8
      %v771 = vpop.permute.xlu0 %770
      %772 = vrot.lane.b32.xlu0 %v569, 8
      %v773 = vpop.permute.xlu0 %772
      %774 = vrot.lane.b32.xlu0 %v570, 8
      %v775 = vpop.permute.xlu0 %774
      %776 = vrot.lane.b32.xlu0 %v571, 8
      %v777 = vpop.permute.xlu0 %776
      %778 = vrot.lane.b32.xlu0 %v572, 8
      %v779 = vpop.permute.xlu0 %778
      %780 = vrot.lane.b32.xlu0 %v573, 8
      %v781 = vpop.permute.xlu0 %780
      %782 = vrot.lane.b32.xlu0 %v574, 8
      %v783 = vpop.permute.xlu0 %782
      %784 = vrot.lane.b32.xlu0 %v575, 8
      %v785 = vpop.permute.xlu0 %784
      %786 = vrot.lane.b32.xlu0 %v576, 8
      %v787 = vpop.permute.xlu0 %786
      %788 = vrot.lane.b32.xlu0 %v577, 8
      %v789 = vpop.permute.xlu0 %788
      %790 = vrot.lane.b32.xlu0 %v578, 8
      %v791 = vpop.permute.xlu0 %790
      %792 = vrot.lane.b32.xlu0 %v579, 8
      %v793 = vpop.permute.xlu0 %792
      %794 = vrot.lane.b32.xlu0 %v580, 8
      %v795 = vpop.permute.xlu0 %794
      %796 = vrot.lane.b32.xlu0 %v581, 8
      %v797 = vpop.permute.xlu0 %796
      %798 = vrot.lane.b32.xlu0 %v582, 8
      %v799 = vpop.permute.xlu0 %798
      %800 = vrot.lane.b32.xlu0 %v583, 8
      %v801 = vpop.permute.xlu0 %800
      %802 = vrot.lane.b32.xlu0 %v584, 8
      %v803 = vpop.permute.xlu0 %802
      %804 = vrot.lane.b32.xlu0 %v585, 8
      %v805 = vpop.permute.xlu0 %804
      %806 = vrot.lane.b32.xlu0 %v586, 8
      %v807 = vpop.permute.xlu0 %806
      %808 = vrot.lane.b32.xlu0 %v587, 8
      %v809 = vpop.permute.xlu0 %808
      %810 = vrot.lane.b32.xlu0 %v588, 8
      %v811 = vpop.permute.xlu0 %810
      %812 = vrot.lane.b32.xlu0 %v589, 8
      %v813 = vpop.permute.xlu0 %812
      %814 = vrot.lane.b32.xlu0 %v590, 8
      %v815 = vpop.permute.xlu0 %814
      %816 = vrot.lane.b32.xlu0 %v591, 8
      %v817 = vpop.permute.xlu0 %816
      %818 = vrot.lane.b32.xlu0 %v592, 8
      %v819 = vpop.permute.xlu0 %818
      %820 = vrot.lane.b32.xlu0 %v593, 8
      %v821 = vpop.permute.xlu0 %820
      %822 = vrot.lane.b32.xlu0 %v594, 8
      %v823 = vpop.permute.xlu0 %822
      %824 = vrot.lane.b32.xlu0 %v595, 8
      %v825 = vpop.permute.xlu0 %824
      %826 = vrot.lane.b32.xlu0 %v596, 8
      %v827 = vpop.permute.xlu0 %826
      %828 = vrot.lane.b32.xlu0 %v597, 8
      %v829 = vpop.permute.xlu0 %828
      %894 = vrot.lane.b32.xlu0 %v473, 12
      %v895 = vpop.permute.xlu0 %894
      %896 = vrot.lane.b32.xlu0 %v474, 12
      %v897 = vpop.permute.xlu0 %896
      %898 = vrot.lane.b32.xlu0 %v475, 12
      %v899 = vpop.permute.xlu0 %898
      %900 = vrot.lane.b32.xlu0 %v476, 12
      %v901 = vpop.permute.xlu0 %900
      %902 = vrot.lane.b32.xlu0 %v477, 12
      %v903 = vpop.permute.xlu0 %902
      %904 = vrot.lane.b32.xlu0 %v478, 12
      %v905 = vpop.permute.xlu0 %904
      %906 = vrot.lane.b32.xlu0 %v479, 12
      %v907 = vpop.permute.xlu0 %906
      %908 = vrot.lane.b32.xlu0 %v480, 12
      %v909 = vpop.permute.xlu0 %908
      %910 = vrot.lane.b32.xlu0 %v481, 12
      %v911 = vpop.permute.xlu0 %910
      %912 = vrot.lane.b32.xlu0 %v482, 12
      %v913 = vpop.permute.xlu0 %912
      %914 = vrot.lane.b32.xlu0 %v483, 12
      %v915 = vpop.permute.xlu0 %914
      %916 = vrot.lane.b32.xlu0 %v484, 12
      %v917 = vpop.permute.xlu0 %916
      %918 = vrot.lane.b32.xlu0 %v485, 12
      %v919 = vpop.permute.xlu0 %918
      %920 = vrot.lane.b32.xlu0 %v486, 12
      %v921 = vpop.permute.xlu0 %920
      %922 = vrot.lane.b32.xlu0 %v487, 12
      %v923 = vpop.permute.xlu0 %922
      %924 = vrot.lane.b32.xlu0 %v488, 12
      %v925 = vpop.permute.xlu0 %924
      %926 = vrot.lane.b32.xlu0 %v489, 12
      %v927 = vpop.permute.xlu0 %926
      %928 = vrot.lane.b32.xlu0 %v490, 12
      %v929 = vpop.permute.xlu0 %928
      %930 = vrot.lane.b32.xlu0 %v491, 12
      %v931 = vpop.permute.xlu0 %930
      %932 = vrot.lane.b32.xlu0 %v492, 12
      %v933 = vpop.permute.xlu0 %932
      %934 = vrot.lane.b32.xlu0 %v493, 12
      %v935 = vpop.permute.xlu0 %934
      %936 = vrot.lane.b32.xlu0 %v494, 12
      %v937 = vpop.permute.xlu0 %936
      %938 = vrot.lane.b32.xlu0 %v495, 12
      %v939 = vpop.permute.xlu0 %938
      %940 = vrot.lane.b32.xlu0 %v496, 12
      %v941 = vpop.permute.xlu0 %940
      %942 = vrot.lane.b32.xlu0 %v497, 12
      %v943 = vpop.permute.xlu0 %942
      %944 = vrot.lane.b32.xlu0 %v498, 12
      %v945 = vpop.permute.xlu0 %944
      %946 = vrot.lane.b32.xlu0 %v499, 12
      %v947 = vpop.permute.xlu0 %946
      %948 = vrot.lane.b32.xlu0 %v500, 12
      %v949 = vpop.permute.xlu0 %948
      %950 = vrot.lane.b32.xlu0 %v501, 12
      %v951 = vpop.permute.xlu0 %950
      %952 = vrot.lane.b32.xlu0 %v502, 12
      %v953 = vpop.permute.xlu0 %952
      %954 = vrot.lane.b32.xlu0 %v602, 12
      %v955 = vpop.permute.xlu0 %954
      %956 = vrot.lane.b32.xlu0 %v603, 12
      %v957 = vpop.permute.xlu0 %956
      %992 = vrot.lane.b32.xlu0 %v373, 16
      %v993 = vpop.permute.xlu0 %992
      %994 = vrot.lane.b32.xlu0 %v374, 16
      %v995 = vpop.permute.xlu0 %994
      %996 = vrot.lane.b32.xlu0 %v375, 16
      %v997 = vpop.permute.xlu0 %996
      %998 = vrot.lane.b32.xlu0 %v376, 16
      %v999 = vpop.permute.xlu0 %998
      %1000 = vrot.lane.b32.xlu0 %v377, 16
      %v1001 = vpop.permute.xlu0 %1000
      %1002 = vrot.lane.b32.xlu0 %v378, 16
      %v1003 = vpop.permute.xlu0 %1002
      %1004 = vrot.lane.b32.xlu0 %v379, 16
      %v1005 = vpop.permute.xlu0 %1004
      %1006 = vrot.lane.b32.xlu0 %v380, 16
      %v1007 = vpop.permute.xlu0 %1006
      %1008 = vrot.lane.b32.xlu0 %v381, 16
      %v1009 = vpop.permute.xlu0 %1008
      %1010 = vrot.lane.b32.xlu0 %v382, 16
      %v1011 = vpop.permute.xlu0 %1010
      %1012 = vrot.lane.b32.xlu0 %v383, 16
      %v1013 = vpop.permute.xlu0 %1012
      %1014 = vrot.lane.b32.xlu0 %v384, 16
      %v1015 = vpop.permute.xlu0 %1014
      %1016 = vrot.lane.b32.xlu0 %v385, 16
      %v1017 = vpop.permute.xlu0 %1016
      %1018 = vrot.lane.b32.xlu0 %v386, 16
      %v1019 = vpop.permute.xlu0 %1018
      %1020 = vrot.lane.b32.xlu0 %v387, 16
      %v1021 = vpop.permute.xlu0 %1020
      %1022 = vrot.lane.b32.xlu0 %v388, 16
      %v1023 = vpop.permute.xlu0 %1022
      %1024 = vrot.lane.b32.xlu0 %v389, 16
      %v1025 = vpop.permute.xlu0 %1024
      %1026 = vrot.lane.b32.xlu0 %v390, 16
      %v1027 = vpop.permute.xlu0 %1026
      %1028 = vrot.lane.b32.xlu0 %v391, 16
      %v1029 = vpop.permute.xlu0 %1028
      %1030 = vrot.lane.b32.xlu0 %v392, 16
      %v1031 = vpop.permute.xlu0 %1030
      %1032 = vrot.lane.b32.xlu0 %v393, 16
      %v1033 = vpop.permute.xlu0 %1032
      %1034 = vrot.lane.b32.xlu0 %v394, 16
      %v1035 = vpop.permute.xlu0 %1034
      %1036 = vrot.lane.b32.xlu0 %v395, 16
      %v1037 = vpop.permute.xlu0 %1036
      %1038 = vrot.lane.b32.xlu0 %v396, 16
      %v1039 = vpop.permute.xlu0 %1038
      %1040 = vrot.lane.b32.xlu0 %v397, 16
      %v1041 = vpop.permute.xlu0 %1040
      %1042 = vrot.lane.b32.xlu0 %v398, 16
      %v1043 = vpop.permute.xlu0 %1042
      %1044 = vrot.lane.b32.xlu0 %v399, 16
      %v1045 = vpop.permute.xlu0 %1044
      %1046 = vrot.lane.b32.xlu0 %v400, 16
      %v1047 = vpop.permute.xlu0 %1046
      %1048 = vrot.lane.b32.xlu0 %v401, 16
      %v1049 = vpop.permute.xlu0 %1048
      %1050 = vrot.lane.b32.xlu0 %v402, 16
      %v1051 = vpop.permute.xlu0 %1050
      %1052 = vrot.lane.b32.xlu0 %v403, 16
      %v1053 = vpop.permute.xlu0 %1052
      %1054 = vrot.lane.b32.xlu0 %v404, 16
      %v1055 = vpop.permute.xlu0 %1054
      %1090 = vrot.lane.b32.xlu0 %v568, 20
      %v1091 = vpop.permute.xlu0 %1090
      %1092 = vrot.lane.b32.xlu0 %v569, 20
      %v1093 = vpop.permute.xlu0 %1092
      %1094 = vrot.lane.b32.xlu0 %v570, 20
      %v1095 = vpop.permute.xlu0 %1094
      %1096 = vrot.lane.b32.xlu0 %v571, 20
      %v1097 = vpop.permute.xlu0 %1096
      %1098 = vrot.lane.b32.xlu0 %v572, 20
      %v1099 = vpop.permute.xlu0 %1098
      %1100 = vrot.lane.b32.xlu0 %v573, 20
      %v1101 = vpop.permute.xlu0 %1100
      %1102 = vrot.lane.b32.xlu0 %v574, 20
      %v1103 = vpop.permute.xlu0 %1102
      %1104 = vrot.lane.b32.xlu0 %v575, 20
      %v1105 = vpop.permute.xlu0 %1104
      %1106 = vrot.lane.b32.xlu0 %v576, 20
      %v1107 = vpop.permute.xlu0 %1106
      %1108 = vrot.lane.b32.xlu0 %v577, 20
      %v1109 = vpop.permute.xlu0 %1108
      %1110 = vrot.lane.b32.xlu0 %v578, 20
      %v1111 = vpop.permute.xlu0 %1110
      %1112 = vrot.lane.b32.xlu0 %v579, 20
      %v1113 = vpop.permute.xlu0 %1112
      %1114 = vrot.lane.b32.xlu0 %v580, 20
      %v1115 = vpop.permute.xlu0 %1114
      %1116 = vrot.lane.b32.xlu0 %v581, 20
      %v1117 = vpop.permute.xlu0 %1116
      %1118 = vrot.lane.b32.xlu0 %v582, 20
      %v1119 = vpop.permute.xlu0 %1118
      %1120 = vrot.lane.b32.xlu0 %v583, 20
      %v1121 = vpop.permute.xlu0 %1120
      %1122 = vrot.lane.b32.xlu0 %v584, 20
      %v1123 = vpop.permute.xlu0 %1122
      %1124 = vrot.lane.b32.xlu0 %v585, 20
      %v1125 = vpop.permute.xlu0 %1124
      %1126 = vrot.lane.b32.xlu0 %v586, 20
      %v1127 = vpop.permute.xlu0 %1126
      %1128 = vrot.lane.b32.xlu0 %v587, 20
      %v1129 = vpop.permute.xlu0 %1128
      %1130 = vrot.lane.b32.xlu0 %v588, 20
      %v1131 = vpop.permute.xlu0 %1130
      %1132 = vrot.lane.b32.xlu0 %v589, 20
      %v1133 = vpop.permute.xlu0 %1132
      %1134 = vrot.lane.b32.xlu0 %v590, 20
      %v1135 = vpop.permute.xlu0 %1134
      %1136 = vrot.lane.b32.xlu0 %v591, 20
      %v1137 = vpop.permute.xlu0 %1136
      %1138 = vrot.lane.b32.xlu0 %v592, 20
      %v1139 = vpop.permute.xlu0 %1138
      %1140 = vrot.lane.b32.xlu0 %v593, 20
      %v1141 = vpop.permute.xlu0 %1140
      %1142 = vrot.lane.b32.xlu0 %v594, 20
      %v1143 = vpop.permute.xlu0 %1142
      %1144 = vrot.lane.b32.xlu0 %v595, 20
      %v1145 = vpop.permute.xlu0 %1144
      %1146 = vrot.lane.b32.xlu0 %v596, 20
      %v1147 = vpop.permute.xlu0 %1146
      %1148 = vrot.lane.b32.xlu0 %v597, 20
      %v1149 = vpop.permute.xlu0 %1148
      %1150 = vrot.lane.b32.xlu0 %v608, 20
      %v1151 = vpop.permute.xlu0 %1150
      %1152 = vrot.lane.b32.xlu0 %v609, 20
      %v1153 = vpop.permute.xlu0 %1152
      %1188 = vrot.lane.b32.xlu0 %v475, 24
      %v1189 = vpop.permute.xlu0 %1188
      %1190 = vrot.lane.b32.xlu0 %v476, 24
      %v1191 = vpop.permute.xlu0 %1190
      %1192 = vrot.lane.b32.xlu0 %v477, 24
      %v1193 = vpop.permute.xlu0 %1192
      %1194 = vrot.lane.b32.xlu0 %v478, 24
      %v1195 = vpop.permute.xlu0 %1194
      %1196 = vrot.lane.b32.xlu0 %v479, 24
      %v1197 = vpop.permute.xlu0 %1196
      %1198 = vrot.lane.b32.xlu0 %v480, 24
      %v1199 = vpop.permute.xlu0 %1198
      %1200 = vrot.lane.b32.xlu0 %v481, 24
      %v1201 = vpop.permute.xlu0 %1200
      %1202 = vrot.lane.b32.xlu0 %v482, 24
      %v1203 = vpop.permute.xlu0 %1202
      %1204 = vrot.lane.b32.xlu0 %v483, 24
      %v1205 = vpop.permute.xlu0 %1204
      %1206 = vrot.lane.b32.xlu0 %v484, 24
      %v1207 = vpop.permute.xlu0 %1206
      %1208 = vrot.lane.b32.xlu0 %v485, 24
      %v1209 = vpop.permute.xlu0 %1208
      %1210 = vrot.lane.b32.xlu0 %v486, 24
      %v1211 = vpop.permute.xlu0 %1210
      %1212 = vrot.lane.b32.xlu0 %v487, 24
      %v1213 = vpop.permute.xlu0 %1212
      %1214 = vrot.lane.b32.xlu0 %v488, 24
      %v1215 = vpop.permute.xlu0 %1214
      %1216 = vrot.lane.b32.xlu0 %v489, 24
      %v1217 = vpop.permute.xlu0 %1216
      %1218 = vrot.lane.b32.xlu0 %v490, 24
      %v1219 = vpop.permute.xlu0 %1218
      %1220 = vrot.lane.b32.xlu0 %v491, 24
      %v1221 = vpop.permute.xlu0 %1220
      %1222 = vrot.lane.b32.xlu0 %v492, 24
      %v1223 = vpop.permute.xlu0 %1222
      %1224 = vrot.lane.b32.xlu0 %v493, 24
      %v1225 = vpop.permute.xlu0 %1224
      %1226 = vrot.lane.b32.xlu0 %v494, 24
      %v1227 = vpop.permute.xlu0 %1226
      %1228 = vrot.lane.b32.xlu0 %v495, 24
      %v1229 = vpop.permute.xlu0 %1228
      %1230 = vrot.lane.b32.xlu0 %v496, 24
      %v1231 = vpop.permute.xlu0 %1230
      %1232 = vrot.lane.b32.xlu0 %v497, 24
      %v1233 = vpop.permute.xlu0 %1232
      %1234 = vrot.lane.b32.xlu0 %v498, 24
      %v1235 = vpop.permute.xlu0 %1234
      %1236 = vrot.lane.b32.xlu0 %v499, 24
      %v1237 = vpop.permute.xlu0 %1236
      %1238 = vrot.lane.b32.xlu0 %v500, 24
      %v1239 = vpop.permute.xlu0 %1238
      %1240 = vrot.lane.b32.xlu0 %v501, 24
      %v1241 = vpop.permute.xlu0 %1240
      %1242 = vrot.lane.b32.xlu0 %v502, 24
      %v1243 = vpop.permute.xlu0 %1242
      %1244 = vrot.lane.b32.xlu0 %v602, 24
      %v1245 = vpop.permute.xlu0 %1244
      %1246 = vrot.lane.b32.xlu0 %v603, 24
      %v1247 = vpop.permute.xlu0 %1246
      %1248 = vrot.lane.b32.xlu0 %v471, 24
      %v1249 = vpop.permute.xlu0 %1248
      %1250 = vrot.lane.b32.xlu0 %v472, 24
      %v1251 = vpop.permute.xlu0 %1250
      %1284 = vrot.lane.b32.xlu0 %v375, 28
      %v1285 = vpop.permute.xlu0 %1284
      %1286 = vrot.lane.b32.xlu0 %v376, 28
      %v1287 = vpop.permute.xlu0 %1286
      %1288 = vrot.lane.b32.xlu0 %v377, 28
      %v1289 = vpop.permute.xlu0 %1288
      %1290 = vrot.lane.b32.xlu0 %v378, 28
      %v1291 = vpop.permute.xlu0 %1290
      %1292 = vrot.lane.b32.xlu0 %v379, 28
      %v1293 = vpop.permute.xlu0 %1292
      %1294 = vrot.lane.b32.xlu0 %v380, 28
      %v1295 = vpop.permute.xlu0 %1294
      %1296 = vrot.lane.b32.xlu0 %v381, 28
      %v1297 = vpop.permute.xlu0 %1296
      %1298 = vrot.lane.b32.xlu0 %v382, 28
      %v1299 = vpop.permute.xlu0 %1298
      %1300 = vrot.lane.b32.xlu0 %v383, 28
      %v1301 = vpop.permute.xlu0 %1300
      %1302 = vrot.lane.b32.xlu0 %v384, 28
      %v1303 = vpop.permute.xlu0 %1302
      %1304 = vrot.lane.b32.xlu0 %v385, 28
      %v1305 = vpop.permute.xlu0 %1304
      %1306 = vrot.lane.b32.xlu0 %v386, 28
      %v1307 = vpop.permute.xlu0 %1306
      %1308 = vrot.lane.b32.xlu0 %v387, 28
      %v1309 = vpop.permute.xlu0 %1308
      %1310 = vrot.lane.b32.xlu0 %v388, 28
      %v1311 = vpop.permute.xlu0 %1310
      %1312 = vrot.lane.b32.xlu0 %v389, 28
      %v1313 = vpop.permute.xlu0 %1312
      %1314 = vrot.lane.b32.xlu0 %v390, 28
      %v1315 = vpop.permute.xlu0 %1314
      %1316 = vrot.lane.b32.xlu0 %v391, 28
      %v1317 = vpop.permute.xlu0 %1316
      %1318 = vrot.lane.b32.xlu0 %v392, 28
      %v1319 = vpop.permute.xlu0 %1318
      %1320 = vrot.lane.b32.xlu0 %v393, 28
      %v1321 = vpop.permute.xlu0 %1320
      %1322 = vrot.lane.b32.xlu0 %v394, 28
      %v1323 = vpop.permute.xlu0 %1322
      %1324 = vrot.lane.b32.xlu0 %v395, 28
      %v1325 = vpop.permute.xlu0 %1324
      %1326 = vrot.lane.b32.xlu0 %v396, 28
      %v1327 = vpop.permute.xlu0 %1326
      %1328 = vrot.lane.b32.xlu0 %v397, 28
      %v1329 = vpop.permute.xlu0 %1328
      %1330 = vrot.lane.b32.xlu0 %v398, 28
      %v1331 = vpop.permute.xlu0 %1330
      %1332 = vrot.lane.b32.xlu0 %v399, 28
      %v1333 = vpop.permute.xlu0 %1332
      %1334 = vrot.lane.b32.xlu0 %v400, 28
      %v1335 = vpop.permute.xlu0 %1334
      %1336 = vrot.lane.b32.xlu0 %v401, 28
      %v1337 = vpop.permute.xlu0 %1336
      %1338 = vrot.lane.b32.xlu0 %v402, 28
      %v1339 = vpop.permute.xlu0 %1338
      %1340 = vrot.lane.b32.xlu0 %v403, 28
      %v1341 = vpop.permute.xlu0 %1340
      %1342 = vrot.lane.b32.xlu0 %v404, 28
      %v1343 = vpop.permute.xlu0 %1342
      %1344 = vrot.lane.b32.xlu0 0.0, 28
      %v1345 = vpop.permute.xlu0 %1344
      %1377 = vrot.lane.b32.xlu0 %v570, 32
      %v1378 = vpop.permute.xlu0 %1377
      %1379 = vrot.lane.b32.xlu0 %v571, 32
      %v1380 = vpop.permute.xlu0 %1379
      %1381 = vrot.lane.b32.xlu0 %v572, 32
      %v1382 = vpop.permute.xlu0 %1381
      %1383 = vrot.lane.b32.xlu0 %v573, 32
      %v1384 = vpop.permute.xlu0 %1383
      %1385 = vrot.lane.b32.xlu0 %v574, 32
      %v1386 = vpop.permute.xlu0 %1385
      %1387 = vrot.lane.b32.xlu0 %v575, 32
      %v1388 = vpop.permute.xlu0 %1387
      %1389 = vrot.lane.b32.xlu0 %v576, 32
      %v1390 = vpop.permute.xlu0 %1389
      %1391 = vrot.lane.b32.xlu0 %v577, 32
      %v1392 = vpop.permute.xlu0 %1391
      %1393 = vrot.lane.b32.xlu0 %v578, 32
      %v1394 = vpop.permute.xlu0 %1393
      %1395 = vrot.lane.b32.xlu0 %v579, 32
      %v1396 = vpop.permute.xlu0 %1395
      %1397 = vrot.lane.b32.xlu0 %v580, 32
      %v1398 = vpop.permute.xlu0 %1397
      %1399 = vrot.lane.b32.xlu0 %v581, 32
      %v1400 = vpop.permute.xlu0 %1399
      %1401 = vrot.lane.b32.xlu0 %v582, 32
      %v1402 = vpop.permute.xlu0 %1401
      %1403 = vrot.lane.b32.xlu0 %v583, 32
      %v1404 = vpop.permute.xlu0 %1403
      %1405 = vrot.lane.b32.xlu0 %v584, 32
      %v1406 = vpop.permute.xlu0 %1405
      %1407 = vrot.lane.b32.xlu0 %v585, 32
      %v1408 = vpop.permute.xlu0 %1407
      %1409 = vrot.lane.b32.xlu0 %v586, 32
      %v1410 = vpop.permute.xlu0 %1409
      %1411 = vrot.lane.b32.xlu0 %v587, 32
      %v1412 = vpop.permute.xlu0 %1411
      %1413 = vrot.lane.b32.xlu0 %v588, 32
      %v1414 = vpop.permute.xlu0 %1413
      %1415 = vrot.lane.b32.xlu0 %v589, 32
      %v1416 = vpop.permute.xlu0 %1415
      %1417 = vrot.lane.b32.xlu0 %v590, 32
      %v1418 = vpop.permute.xlu0 %1417
      %1419 = vrot.lane.b32.xlu0 %v591, 32
      %v1420 = vpop.permute.xlu0 %1419
      %1421 = vrot.lane.b32.xlu0 %v592, 32
      %v1422 = vpop.permute.xlu0 %1421
      %1423 = vrot.lane.b32.xlu0 %v593, 32
      %v1424 = vpop.permute.xlu0 %1423
      %1425 = vrot.lane.b32.xlu0 %v594, 32
      %v1426 = vpop.permute.xlu0 %1425
      %1427 = vrot.lane.b32.xlu0 %v595, 32
      %v1428 = vpop.permute.xlu0 %1427
      %1429 = vrot.lane.b32.xlu0 %v596, 32
      %v1430 = vpop.permute.xlu0 %1429
      %1431 = vrot.lane.b32.xlu0 %v597, 32
      %v1432 = vpop.permute.xlu0 %1431
      %1433 = vrot.lane.b32.xlu0 %v608, 32
      %v1434 = vpop.permute.xlu0 %1433
      %1435 = vrot.lane.b32.xlu0 %v609, 32
      %v1436 = vpop.permute.xlu0 %1435
      %1437 = vrot.lane.b32.xlu0 %v566, 32
      %v1438 = vpop.permute.xlu0 %1437
      %1439 = vrot.lane.b32.xlu0 %v567, 32
      %v1440 = vpop.permute.xlu0 %1439
      %vm1473 = vcmask 31744
      %v1474 = vsel %vm1473, %v471, %v642
      %v1475 = vsel %vm1473, %v472, %v642
      %v1476 = vsel %vm1473, %v473, %v644
      %v1477 = vsel %vm1473, %v474, %v646
      %v1478 = vsel %vm1473, %v475, %v648
      %v1479 = vsel %vm1473, %v476, %v650
      %v1480 = vsel %vm1473, %v477, %v652
      %v1481 = vsel %vm1473, %v478, %v654
      %v1482 = vsel %vm1473, %v479, %v656
      %v1483 = vsel %vm1473, %v480, %v658
      %v1484 = vsel %vm1473, %v481, %v660
      %v1485 = vsel %vm1473, %v482, %v662
      %v1486 = vsel %vm1473, %v483, %v664
      %v1487 = vsel %vm1473, %v484, %v666
      %v1488 = vsel %vm1473, %v485, %v668
      %v1489 = vsel %vm1473, %v486, %v670
      %v1490 = vsel %vm1473, %v487, %v672
      %v1491 = vsel %vm1473, %v488, %v674
      %v1492 = vsel %vm1473, %v489, %v676
      %v1493 = vsel %vm1473, %v490, %v678
      %v1494 = vsel %vm1473, %v491, %v680
      %v1495 = vsel %vm1473, %v492, %v682
      %v1496 = vsel %vm1473, %v493, %v684
      %v1497 = vsel %vm1473, %v494, %v686
      %v1498 = vsel %vm1473, %v495, %v688
      %v1499 = vsel %vm1473, %v496, %v690
      %v1500 = vsel %vm1473, %v497, %v692
      %v1501 = vsel %vm1473, %v498, %v694
      %v1502 = vsel %vm1473, %v499, %v696
      %v1503 = vsel %vm1473, %v500, %v698
      %v1504 = vsel %vm1473, %v501, %v700
      %v1505 = vsel %vm1473, %v502, %v702
      %vm1506 = vcmask 64512
      %v1507 = vsel %vm1506, %v1474, %v767
      %v1508 = vsel %vm1506, %v1475, %v769
      %v1509 = vsel %vm1506, %v1476, %v771
      %v1510 = vsel %vm1506, %v1477, %v773
      %v1511 = vsel %vm1506, %v1478, %v775
      %v1512 = vsel %vm1506, %v1479, %v777
      %v1513 = vsel %vm1506, %v1480, %v779
      %v1514 = vsel %vm1506, %v1481, %v781
      %v1515 = vsel %vm1506, %v1482, %v783
      %v1516 = vsel %vm1506, %v1483, %v785
      %v1517 = vsel %vm1506, %v1484, %v787
      %v1518 = vsel %vm1506, %v1485, %v789
      %v1519 = vsel %vm1506, %v1486, %v791
      %v1520 = vsel %vm1506, %v1487, %v793
      %v1521 = vsel %vm1506, %v1488, %v795
      %v1522 = vsel %vm1506, %v1489, %v797
      %v1523 = vsel %vm1506, %v1490, %v799
      %v1524 = vsel %vm1506, %v1491, %v801
      %v1525 = vsel %vm1506, %v1492, %v803
      %v1526 = vsel %vm1506, %v1493, %v805
      %v1527 = vsel %vm1506, %v1494, %v807
      %v1528 = vsel %vm1506, %v1495, %v809
      %v1529 = vsel %vm1506, %v1496, %v811
      %v1530 = vsel %vm1506, %v1497, %v813
      %v1531 = vsel %vm1506, %v1498, %v815
      %v1532 = vsel %vm1506, %v1499, %v817
      %v1533 = vsel %vm1506, %v1500, %v819
      %v1534 = vsel %vm1506, %v1501, %v821
      %v1535 = vsel %vm1506, %v1502, %v823
      %v1536 = vsel %vm1506, %v1503, %v825
      %v1537 = vsel %vm1506, %v1504, %v827
      %v1538 = vsel %vm1506, %v1505, %v829
      %vm1539 = vcmask 97280
      %v1540 = vsel %vm1539, %v1507, %v895
      %v1541 = vsel %vm1539, %v1508, %v897
      %v1542 = vsel %vm1539, %v1509, %v899
      %v1543 = vsel %vm1539, %v1510, %v901
      %v1544 = vsel %vm1539, %v1511, %v903
      %v1545 = vsel %vm1539, %v1512, %v905
      %v1546 = vsel %vm1539, %v1513, %v907
      %v1547 = vsel %vm1539, %v1514, %v909
      %v1548 = vsel %vm1539, %v1515, %v911
      %v1549 = vsel %vm1539, %v1516, %v913
      %v1550 = vsel %vm1539, %v1517, %v915
      %v1551 = vsel %vm1539, %v1518, %v917
      %v1552 = vsel %vm1539, %v1519, %v919
      %v1553 = vsel %vm1539, %v1520, %v921
      %v1554 = vsel %vm1539, %v1521, %v923
      %v1555 = vsel %vm1539, %v1522, %v925
      %v1556 = vsel %vm1539, %v1523, %v927
      %v1557 = vsel %vm1539, %v1524, %v929
      %v1558 = vsel %vm1539, %v1525, %v931
      %v1559 = vsel %vm1539, %v1526, %v933
      %v1560 = vsel %vm1539, %v1527, %v935
      %v1561 = vsel %vm1539, %v1528, %v937
      %v1562 = vsel %vm1539, %v1529, %v939
      %v1563 = vsel %vm1539, %v1530, %v941
      %v1564 = vsel %vm1539, %v1531, %v943
      %v1565 = vsel %vm1539, %v1532, %v945
      %v1566 = vsel %vm1539, %v1533, %v947
      %v1567 = vsel %vm1539, %v1534, %v949
      %v1568 = vsel %vm1539, %v1535, %v951
      %v1569 = vsel %vm1539, %v1536, %v953
      %v1570 = vsel %vm1539, %v1537, %v955
      %v1571 = vsel %vm1539, %v1538, %v957
      %vm1572 = vcmask 130048
      %v1573 = vsel %vm1572, %v1540, %v993
      %v1574 = vsel %vm1572, %v1541, %v995
      %v1575 = vsel %vm1572, %v1542, %v997
      %v1576 = vsel %vm1572, %v1543, %v999
      %v1577 = vsel %vm1572, %v1544, %v1001
      %v1578 = vsel %vm1572, %v1545, %v1003
      %v1579 = vsel %vm1572, %v1546, %v1005
      %v1580 = vsel %vm1572, %v1547, %v1007
      %v1581 = vsel %vm1572, %v1548, %v1009
      %v1582 = vsel %vm1572, %v1549, %v1011
      %v1583 = vsel %vm1572, %v1550, %v1013
      %v1584 = vsel %vm1572, %v1551, %v1015
      %v1585 = vsel %vm1572, %v1552, %v1017
      %v1586 = vsel %vm1572, %v1553, %v1019
      %v1587 = vsel %vm1572, %v1554, %v1021
      %v1588 = vsel %vm1572, %v1555, %v1023
      %v1589 = vsel %vm1572, %v1556, %v1025
      %v1590 = vsel %vm1572, %v1557, %v1027
      %v1591 = vsel %vm1572, %v1558, %v1029
      %v1592 = vsel %vm1572, %v1559, %v1031
      %v1593 = vsel %vm1572, %v1560, %v1033
      %v1594 = vsel %vm1572, %v1561, %v1035
      %v1595 = vsel %vm1572, %v1562, %v1037
      %v1596 = vsel %vm1572, %v1563, %v1039
      %v1597 = vsel %vm1572, %v1564, %v1041
      %v1598 = vsel %vm1572, %v1565, %v1043
      %v1599 = vsel %vm1572, %v1566, %v1045
      %v1600 = vsel %vm1572, %v1567, %v1047
      %v1601 = vsel %vm1572, %v1568, %v1049
      %v1602 = vsel %vm1572, %v1569, %v1051
      %v1603 = vsel %vm1572, %v1570, %v1053
      %v1604 = vsel %vm1572, %v1571, %v1055
      %vm1605 = vcmask 162816
      %v1606 = vsel %vm1605, %v1573, %v1091
      %v1607 = vsel %vm1605, %v1574, %v1093
      %v1608 = vsel %vm1605, %v1575, %v1095
      %v1609 = vsel %vm1605, %v1576, %v1097
      %v1610 = vsel %vm1605, %v1577, %v1099
      %v1611 = vsel %vm1605, %v1578, %v1101
      %v1612 = vsel %vm1605, %v1579, %v1103
      %v1613 = vsel %vm1605, %v1580, %v1105
      %v1614 = vsel %vm1605, %v1581, %v1107
      %v1615 = vsel %vm1605, %v1582, %v1109
      %v1616 = vsel %vm1605, %v1583, %v1111
      %v1617 = vsel %vm1605, %v1584, %v1113
      %v1618 = vsel %vm1605, %v1585, %v1115
      %v1619 = vsel %vm1605, %v1586, %v1117
      %v1620 = vsel %vm1605, %v1587, %v1119
      %v1621 = vsel %vm1605, %v1588, %v1121
      %v1622 = vsel %vm1605, %v1589, %v1123
      %v1623 = vsel %vm1605, %v1590, %v1125
      %v1624 = vsel %vm1605, %v1591, %v1127
      %v1625 = vsel %vm1605, %v1592, %v1129
      %v1626 = vsel %vm1605, %v1593, %v1131
      %v1627 = vsel %vm1605, %v1594, %v1133
      %v1628 = vsel %vm1605, %v1595, %v1135
      %v1629 = vsel %vm1605, %v1596, %v1137
      %v1630 = vsel %vm1605, %v1597, %v1139
      %v1631 = vsel %vm1605, %v1598, %v1141
      %v1632 = vsel %vm1605, %v1599, %v1143
      %v1633 = vsel %vm1605, %v1600, %v1145
      %v1634 = vsel %vm1605, %v1601, %v1147
      %v1635 = vsel %vm1605, %v1602, %v1149
      %v1636 = vsel %vm1605, %v1603, %v1151
      %v1637 = vsel %vm1605, %v1604, %v1153
      %vm1638 = vcmask 195584
      %v1639 = vsel %vm1638, %v1606, %v1189
      %v1640 = vsel %vm1638, %v1607, %v1191
      %v1641 = vsel %vm1638, %v1608, %v1193
      %v1642 = vsel %vm1638, %v1609, %v1195
      %v1643 = vsel %vm1638, %v1610, %v1197
      %v1644 = vsel %vm1638, %v1611, %v1199
      %v1645 = vsel %vm1638, %v1612, %v1201
      %v1646 = vsel %vm1638, %v1613, %v1203
      %v1647 = vsel %vm1638, %v1614, %v1205
      %v1648 = vsel %vm1638, %v1615, %v1207
      %v1649 = vsel %vm1638, %v1616, %v1209
      %v1650 = vsel %vm1638, %v1617, %v1211
      %v1651 = vsel %vm1638, %v1618, %v1213
      %v1652 = vsel %vm1638, %v1619, %v1215
      %v1653 = vsel %vm1638, %v1620, %v1217
      %v1654 = vsel %vm1638, %v1621, %v1219
      %v1655 = vsel %vm1638, %v1622, %v1221
      %v1656 = vsel %vm1638, %v1623, %v1223
      %v1657 = vsel %vm1638, %v1624, %v1225
      %v1658 = vsel %vm1638, %v1625, %v1227
      %v1659 = vsel %vm1638, %v1626, %v1229
      %v1660 = vsel %vm1638, %v1627, %v1231
      %v1661 = vsel %vm1638, %v1628, %v1233
      %v1662 = vsel %vm1638, %v1629, %v1235
      %v1663 = vsel %vm1638, %v1630, %v1237
      %v1664 = vsel %vm1638, %v1631, %v1239
      %v1665 = vsel %vm1638, %v1632, %v1241
      %v1666 = vsel %vm1638, %v1633, %v1243
      %v1667 = vsel %vm1638, %v1634, %v1245
      %v1668 = vsel %vm1638, %v1635, %v1247
      %v1669 = vsel %vm1638, %v1636, %v1249
      %v1670 = vsel %vm1638, %v1637, %v1251
      %vm1671 = vcmask 228352
      %v1672 = vsel %vm1671, %v1639, %v1285
      %v1673 = vsel %vm1671, %v1640, %v1287
      %v1674 = vsel %vm1671, %v1641, %v1289
      %v1675 = vsel %vm1671, %v1642, %v1291
      %v1676 = vsel %vm1671, %v1643, %v1293
      %v1677 = vsel %vm1671, %v1644, %v1295
      %v1678 = vsel %vm1671, %v1645, %v1297
      %v1679 = vsel %vm1671, %v1646, %v1299
      %v1680 = vsel %vm1671, %v1647, %v1301
      %v1681 = vsel %vm1671, %v1648, %v1303
      %v1682 = vsel %vm1671, %v1649, %v1305
      %v1683 = vsel %vm1671, %v1650, %v1307
      %v1684 = vsel %vm1671, %v1651, %v1309
      %v1685 = vsel %vm1671, %v1652, %v1311
      %v1686 = vsel %vm1671, %v1653, %v1313
      %v1687 = vsel %vm1671, %v1654, %v1315
      %v1688 = vsel %vm1671, %v1655, %v1317
      %v1689 = vsel %vm1671, %v1656, %v1319
      %v1690 = vsel %vm1671, %v1657, %v1321
      %v1691 = vsel %vm1671, %v1658, %v1323
      %v1692 = vsel %vm1671, %v1659, %v1325
      %v1693 = vsel %vm1671, %v1660, %v1327
      %v1694 = vsel %vm1671, %v1661, %v1329
      %v1695 = vsel %vm1671, %v1662, %v1331
      %v1696 = vsel %vm1671, %v1663, %v1333
      %v1697 = vsel %vm1671, %v1664, %v1335
      %v1698 = vsel %vm1671, %v1665, %v1337
      %v1699 = vsel %vm1671, %v1666, %v1339
      %v1700 = vsel %vm1671, %v1667, %v1341
      %v1701 = vsel %vm1671, %v1668, %v1343
      %v1702 = vsel %vm1671, %v1669, %v1345
      %v1703 = vsel %vm1671, %v1670, %v1345
      %vm1704 = vcmask 261120
      %v1705 = vsel %vm1704, %v1672, %v1378
      %v1706 = vsel %vm1704, %v1673, %v1380
      %v1707 = vsel %vm1704, %v1674, %v1382
      %v1708 = vsel %vm1704, %v1675, %v1384
      %v1709 = vsel %vm1704, %v1676, %v1386
      %v1710 = vsel %vm1704, %v1677, %v1388
      %v1711 = vsel %vm1704, %v1678, %v1390
      %v1712 = vsel %vm1704, %v1679, %v1392
      %v1713 = vsel %vm1704, %v1680, %v1394
      %v1714 = vsel %vm1704, %v1681, %v1396
      %v1715 = vsel %vm1704, %v1682, %v1398
      %v1716 = vsel %vm1704, %v1683, %v1400
      %v1717 = vsel %vm1704, %v1684, %v1402
      %v1718 = vsel %vm1704, %v1685, %v1404
      %v1719 = vsel %vm1704, %v1686, %v1406
      %v1720 = vsel %vm1704, %v1687, %v1408
      %v1721 = vsel %vm1704, %v1688, %v1410
      %v1722 = vsel %vm1704, %v1689, %v1412
      %v1723 = vsel %vm1704, %v1690, %v1414
      %v1724 = vsel %vm1704, %v1691, %v1416
      %v1725 = vsel %vm1704, %v1692, %v1418
      %v1726 = vsel %vm1704, %v1693, %v1420
      %v1727 = vsel %vm1704, %v1694, %v1422
      %v1728 = vsel %vm1704, %v1695, %v1424
      %v1729 = vsel %vm1704, %v1696, %v1426
      %v1730 = vsel %vm1704, %v1697, %v1428
      %v1731 = vsel %vm1704, %v1698, %v1430
      %v1732 = vsel %vm1704, %v1699, %v1432
      %v1733 = vsel %vm1704, %v1700, %v1434
      %v1734 = vsel %vm1704, %v1701, %v1436
      %v1735 = vsel %vm1704, %v1702, %v1438
      %v1736 = vsel %vm1704, %v1703, %v1440
      %v1737 = vpack.c.bf16 %v1706, %v1705
      %v1738 = vpack.c.bf16 %v1708, %v1707
      %v1739 = vpack.c.bf16 %v1710, %v1709
      %v1740 = vpack.c.bf16 %v1712, %v1711
      %v1741 = vpack.c.bf16 %v1714, %v1713
      %v1742 = vpack.c.bf16 %v1716, %v1715
      %v1743 = vpack.c.bf16 %v1718, %v1717
      %v1744 = vpack.c.bf16 %v1720, %v1719
      %v1745 = vpack.c.bf16 %v1722, %v1721
      %v1746 = vpack.c.bf16 %v1724, %v1723
      %v1747 = vpack.c.bf16 %v1726, %v1725
      %v1748 = vpack.c.bf16 %v1728, %v1727
      %v1749 = vpack.c.bf16 %v1730, %v1729
      %v1750 = vpack.c.bf16 %v1732, %v1731
      %v1751 = vpack.c.bf16 %v1734, %v1733
      %v1752 = vpack.c.bf16 %v1736, %v1735
      %v1753 = vld [vmem:[%s1] sm:$0xf]
      %v1754 = vld [vmem:[%s1 + $0x4] sm:$0xf]
      %v1755 = vld [vmem:[%s1 + $0x8] sm:$0xf]
      %v1756 = vld [vmem:[%s1 + $0xc] sm:$0xf]
      %v1757 = vld [vmem:[%s1 + $0x10] sm:$0x3]
      %v1763 = vunpack.c.l.b16 %v1753
      %v1764 = vunpack.c.l.b16 %v1754
      %v1765 = vunpack.c.l.b16 %v1755
      %v1766 = vunpack.c.l.b16 %v1756
      %v1767 = vunpack.c.l.b16 %v1757
      %v1768 = vpack.c.b16 %v1764, %v1763
      %v1769 = vpack.c.b16 %v1766, %v1765
      %v1770 = vpack.c.b16 %v1767, %v1767
      %vm1773 = vcmask 293888
      %v1775 = vsel %vm1773, %v1737, 0
      %v1778 = vsel %vm1773, %v1738, 0
      %v1781 = vsel %vm1773, %v1739, 0
      %v1784 = vsel %vm1773, %v1740, 0
      %v1787 = vsel %vm1773, %v1741, 0
      %v1790 = vsel %vm1773, %v1742, 0
      %v1793 = vsel %vm1773, %v1743, 0
      %v1796 = vsel %vm1773, %v1744, 0
      %v1799 = vsel %vm1773, %v1745, 0
      %v1802 = vsel %vm1773, %v1746, 0
      %v1805 = vsel %vm1773, %v1747, 0
      %v1808 = vsel %vm1773, %v1748, 0
      %v1811 = vsel %vm1773, %v1749, 0
      %v1814 = vsel %vm1773, %v1750, 0
      %v1817 = vsel %vm1773, %v1751, 0
      %v1820 = vsel %vm1773, %v1752, 0
      %vm1822 = vcmask 1041408
      %v1824 = vsel %vm1822, %v1770, 0
      %1826 = vmatprep.subr.bf16.mxu0 0
      %1827 = vmatpush1.bf16.msra.mxu0 %v1768
      %1828 = vmatprep.subr.bf16.mxu0 0
      %1829 = vmatpush1.bf16.msra.mxu0 %v1769
      %1830 = vmatprep.subr.bf16.mxu0 0
      %1831 = vmatpush1.bf16.msra.mxu0 %v1824
      %1832 = vmatprep.subr.bf16.mxu0 0
      %1833 = vmatpush1.bf16.msra.mxu0 0
      %1834 = vmatprep.subr.bf16.mxu0 0
      %1835 = vmatpush1.bf16.msra.mxu0 0
      %1836 = vmatprep.subr.bf16.mxu0 0
      %1837 = vmatpush1.bf16.msra.mxu0 0
      %1838 = vmatprep.subr.bf16.mxu0 0
      %1839 = vmatpush1.bf16.msra.mxu0 0
      %1840 = vmatprep.subr.bf16.mxu0 0
      %1841 = vmatpush1.bf16.msra.mxu0 0
      %1842 = vmatprep.subr.bf16.mxu0 0
      %1843 = vmatpush1.bf16.msra.mxu0 0
      %1844 = vmatprep.subr.bf16.mxu0 0
      %1845 = vmatpush1.bf16.msra.mxu0 0
      %1846 = vmatprep.subr.bf16.mxu0 0
      %1847 = vmatpush1.bf16.msra.mxu0 0
      %1848 = vmatprep.subr.bf16.mxu0 0
      %1849 = vmatpush1.bf16.msra.mxu0 0
      %1850 = vmatprep.subr.bf16.mxu0 0
      %1851 = vmatpush1.bf16.msra.mxu0 0
      %1852 = vmatprep.subr.bf16.mxu0 0
      %1853 = vmatpush1.bf16.msra.mxu0 0
      %1854 = vmatprep.subr.bf16.mxu0 0
      %1855 = vmatpush1.bf16.msra.mxu0 0
      %1856 = vmatprep.subr.bf16.mxu0 0
      %1857 = vmatpush1.bf16.msra.mxu0 0
      %1858 = vmatprep.mubr.bf16.mxu0 0
      %1859 = vmatmul.mubr.bf16.gmra.mrb[0].mxu0 %v1775
      %v1860 = vpop.f32.mrb[0].mxu0
      %v1861 = vadd.f32 0.0, %v1860
      %v1862 = vpop.f32.mrb[0].mxu0
      %v1863 = vpop.f32.mrb[0].mxu0
      %v1864 = vadd.f32 0.0, %v1863
      %v1865 = vpop.f32.mrb[0].mxu0
      %1866 = vmatprep.mubr.bf16.mxu0 0
      %1867 = vmatmul.mubr.bf16.gmra.mrb[0].mxu0 %v1778
      %v1868 = vpop.f32.mrb[0].mxu0
      %v1869 = vadd.f32 0.0, %v1868
      %v1870 = vpop.f32.mrb[0].mxu0
      %v1871 = vpop.f32.mrb[0].mxu0
      %v1872 = vadd.f32 0.0, %v1871
      %v1873 = vpop.f32.mrb[0].mxu0
      %1874 = vmatprep.mubr.bf16.mxu0 0
      %1875 = vmatmul.mubr.bf16.gmra.mrb[0].mxu0 %v1781
      %v1876 = vpop.f32.mrb[0].mxu0
      %v1877 = vadd.f32 0.0, %v1876
      %v1878 = vpop.f32.mrb[0].mxu0
      %v1879 = vpop.f32.mrb[0].mxu0
      %v1880 = vadd.f32 0.0, %v1879
      %v1881 = vpop.f32.mrb[0].mxu0
      %1882 = vmatprep.mubr.bf16.mxu0 0
      %1883 = vmatmul.mubr.bf16.gmra.mrb[0].mxu0 %v1784
      %v1884 = vpop.f32.mrb[0].mxu0
      %v1885 = vadd.f32 0.0, %v1884
      %v1886 = vpop.f32.mrb[0].mxu0
      %v1887 = vpop.f32.mrb[0].mxu0
      %v1888 = vadd.f32 0.0, %v1887
      %v1889 = vpop.f32.mrb[0].mxu0
      %1890 = vmatprep.mubr.bf16.mxu0 0
      %1891 = vmatmul.mubr.bf16.gmra.mrb[0].mxu0 %v1787
      %v1892 = vpop.f32.mrb[0].mxu0
      %v1893 = vadd.f32 0.0, %v1892
      %v1894 = vpop.f32.mrb[0].mxu0
      %v1895 = vpop.f32.mrb[0].mxu0
      %v1896 = vadd.f32 0.0, %v1895
      %v1897 = vpop.f32.mrb[0].mxu0
      %1898 = vmatprep.mubr.bf16.mxu0 0
      %1899 = vmatmul.mubr.bf16.gmra.mrb[0].mxu0 %v1790
      %v1900 = vpop.f32.mrb[0].mxu0
      %v1901 = vadd.f32 0.0, %v1900
      %v1902 = vpop.f32.mrb[0].mxu0
      %v1903 = vpop.f32.mrb[0].mxu0
      %v1904 = vadd.f32 0.0, %v1903
      %v1905 = vpop.f32.mrb[0].mxu0
      %1906 = vmatprep.mubr.bf16.mxu0 0
      %1907 = vmatmul.mubr.bf16.gmra.mrb[0].mxu0 %v1793
      %v1908 = vpop.f32.mrb[0].mxu0
      %v1909 = vadd.f32 0.0, %v1908
      %v1910 = vpop.f32.mrb[0].mxu0
      %v1911 = vpop.f32.mrb[0].mxu0
      %v1912 = vadd.f32 0.0, %v1911
      %v1913 = vpop.f32.mrb[0].mxu0
      %1914 = vmatprep.mubr.bf16.mxu0 0
      %1915 = vmatmul.mubr.bf16.gmra.mrb[0].mxu0 %v1796
      %v1916 = vpop.f32.mrb[0].mxu0
      %v1917 = vadd.f32 0.0, %v1916
      %v1918 = vpop.f32.mrb[0].mxu0
      %v1919 = vpop.f32.mrb[0].mxu0
      %v1920 = vadd.f32 0.0, %v1919
      %v1921 = vpop.f32.mrb[0].mxu0
      %1922 = vmatprep.mubr.bf16.mxu0 0
      %1923 = vmatmul.mubr.bf16.gmra.mrb[0].mxu0 %v1799
      %v1924 = vpop.f32.mrb[0].mxu0
      %v1925 = vadd.f32 0.0, %v1924
      %v1926 = vpop.f32.mrb[0].mxu0
      %v1927 = vpop.f32.mrb[0].mxu0
      %v1928 = vadd.f32 0.0, %v1927
      %v1929 = vpop.f32.mrb[0].mxu0
      %1930 = vmatprep.mubr.bf16.mxu0 0
      %1931 = vmatmul.mubr.bf16.gmra.mrb[0].mxu0 %v1802
      %v1932 = vpop.f32.mrb[0].mxu0
      %v1933 = vadd.f32 0.0, %v1932
      %v1934 = vpop.f32.mrb[0].mxu0
      %v1935 = vpop.f32.mrb[0].mxu0
      %v1936 = vadd.f32 0.0, %v1935
      %v1937 = vpop.f32.mrb[0].mxu0
      %1938 = vmatprep.mubr.bf16.mxu0 0
      %1939 = vmatmul.mubr.bf16.gmra.mrb[0].mxu0 %v1805
      %v1940 = vpop.f32.mrb[0].mxu0
      %v1941 = vadd.f32 0.0, %v1940
      %v1942 = vpop.f32.mrb[0].mxu0
      %v1943 = vpop.f32.mrb[0].mxu0
      %v1944 = vadd.f32 0.0, %v1943
      %v1945 = vpop.f32.mrb[0].mxu0
      %1946 = vmatprep.mubr.bf16.mxu0 0
      %1947 = vmatmul.mubr.bf16.gmra.mrb[0].mxu0 %v1808
      %v1948 = vpop.f32.mrb[0].mxu0
      %v1949 = vadd.f32 0.0, %v1948
      %v1950 = vpop.f32.mrb[0].mxu0
      %v1951 = vpop.f32.mrb[0].mxu0
      %v1952 = vadd.f32 0.0, %v1951
      %v1953 = vpop.f32.mrb[0].mxu0
      %1954 = vmatprep.mubr.bf16.mxu0 0
      %1955 = vmatmul.mubr.bf16.gmra.mrb[0].mxu0 %v1811
      %v1956 = vpop.f32.mrb[0].mxu0
      %v1957 = vadd.f32 0.0, %v1956
      %v1958 = vpop.f32.mrb[0].mxu0
      %v1959 = vpop.f32.mrb[0].mxu0
      %v1960 = vadd.f32 0.0, %v1959
      %v1961 = vpop.f32.mrb[0].mxu0
      %1962 = vmatprep.mubr.bf16.mxu0 0
      %1963 = vmatmul.mubr.bf16.gmra.mrb[0].mxu0 %v1814
      %v1964 = vpop.f32.mrb[0].mxu0
      %v1965 = vadd.f32 0.0, %v1964
      %v1966 = vpop.f32.mrb[0].mxu0
      %v1967 = vpop.f32.mrb[0].mxu0
      %v1968 = vadd.f32 0.0, %v1967
      %v1969 = vpop.f32.mrb[0].mxu0
      %1970 = vmatprep.mubr.bf16.mxu0 0
      %1971 = vmatmul.mubr.bf16.gmra.mrb[0].mxu0 %v1817
      %v1972 = vpop.f32.mrb[0].mxu0
      %v1973 = vadd.f32 0.0, %v1972
      %v1974 = vpop.f32.mrb[0].mxu0
      %v1975 = vpop.f32.mrb[0].mxu0
      %v1976 = vadd.f32 0.0, %v1975
      %v1977 = vpop.f32.mrb[0].mxu0
      %1978 = vmatprep.mubr.bf16.mxu0 0
      %1979 = vmatmul.mubr.bf16.gmra.mrb[0].mxu0 %v1820
      %v1980 = vpop.f32.mrb[0].mxu0
      %v1981 = vadd.f32 0.0, %v1980
      %v1982 = vpop.f32.mrb[0].mxu0
      %v1983 = vpop.f32.mrb[0].mxu0
      %v1984 = vadd.f32 0.0, %v1983
      %v1985 = vpop.f32.mrb[0].mxu0
      %1986 = vdwg.mxu0
      %1987 = vst.msk [vmem:[%s197] sm:$0xff] %vm1506, %v1861
      %1988 = vst.msk [vmem:[%s197 + $0x8] sm:$0xff] %vm1506, %v1864
      %1989 = vst.msk [vmem:[%s197 + $0x10] sm:$0xff] %vm1506, %v1869
      %1990 = vst.msk [vmem:[%s197 + $0x18] sm:$0xff] %vm1506, %v1872
      %1991 = vst.msk [vmem:[%s197 + $0x20] sm:$0xff] %vm1506, %v1877
      %1992 = vst.msk [vmem:[%s197 + $0x28] sm:$0xff] %vm1506, %v1880
      %1993 = vst.msk [vmem:[%s197 + $0x30] sm:$0xff] %vm1506, %v1885
      %1994 = vst.msk [vmem:[%s197 + $0x38] sm:$0xff] %vm1506, %v1888
      %1995 = vst.msk [vmem:[%s197 + $0x40] sm:$0xff] %vm1506, %v1893
      %1996 = vst.msk [vmem:[%s197 + $0x48] sm:$0xff] %vm1506, %v1896
      %1997 = vst.msk [vmem:[%s197 + $0x50] sm:$0xff] %vm1506, %v1901
      %1998 = vst.msk [vmem:[%s197 + $0x58] sm:$0xff] %vm1506, %v1904
      %1999 = vst.msk [vmem:[%s197 + $0x60] sm:$0xff] %vm1506, %v1909
      %2000 = vst.msk [vmem:[%s197 + $0x68] sm:$0xff] %vm1506, %v1912
      %2001 = vst.msk [vmem:[%s197 + $0x70] sm:$0xff] %vm1506, %v1917
      %2002 = vst.msk [vmem:[%s197 + $0x78] sm:$0xff] %vm1506, %v1920
      %2003 = vst.msk [vmem:[%s197 + $0x80] sm:$0xff] %vm1506, %v1925
      %2004 = vst.msk [vmem:[%s197 + $0x88] sm:$0xff] %vm1506, %v1928
      %2005 = vst.msk [vmem:[%s197 + $0x90] sm:$0xff] %vm1506, %v1933
      %2006 = vst.msk [vmem:[%s197 + $0x98] sm:$0xff] %vm1506, %v1936
      %2007 = vst.msk [vmem:[%s197 + $0xa0] sm:$0xff] %vm1506, %v1941
      %2008 = vst.msk [vmem:[%s197 + $0xa8] sm:$0xff] %vm1506, %v1944
      %2009 = vst.msk [vmem:[%s197 + $0xb0] sm:$0xff] %vm1506, %v1949
      %2010 = vst.msk [vmem:[%s197 + $0xb8] sm:$0xff] %vm1506, %v1952
      %2011 = vst.msk [vmem:[%s197 + $0xc0] sm:$0xff] %vm1506, %v1957
      %2012 = vst.msk [vmem:[%s197 + $0xc8] sm:$0xff] %vm1506, %v1960
      %2013 = vst.msk [vmem:[%s197 + $0xd0] sm:$0xff] %vm1506, %v1965
      %2014 = vst.msk [vmem:[%s197 + $0xd8] sm:$0xff] %vm1506, %v1968
      %2015 = vst.msk [vmem:[%s197 + $0xe0] sm:$0xff] %vm1506, %v1973
      %2016 = vst.msk [vmem:[%s197 + $0xe8] sm:$0xff] %vm1506, %v1976
      %2017 = vst.msk [vmem:[%s197 + $0xf0] sm:$0xff] %vm1506, %v1981
      %2018 = vst.msk [vmem:[%s197 + $0xf8] sm:$0xff] %vm1506, %v1984
      %p2019 = scmp.lt.s32.totalorder %s15, 1
      %s2020 = scalar_select %p2019, %s15, 1
      %s2021 = smul.addr %s2020, 32
      %s2022 = smul.addr %s2021, 8
      %s2023 = scalar_lea.vmem %s4, %s2022
      // Predicated region
      $region37: #{encoder_block.2} parent=35 // pred_check
        %p2024 = pneg %p122
      $region38: #{encoder_block.2} parent=35 // pred_check_branch
        %2026 = sbr.rel (%p2024) target = $region40
      $region39: #{encoder_block.2} parent=35 // pred_region
        _
      $region40: #{encoder_block.2} parent=35 // pred_fallthru
        _
    $region36: #{encoder_block.2} parent=5 // pred_fallthru
      _
    %p2027 = scmp.le.s32.totalorder 2, %s10
    // Predicated region
    $region41: #{encoder_block.2} parent=5 // pred_check
      %p2028 = pneg %p2027
    $region42: #{encoder_block.2} parent=5 // pred_check_branch
      %2030 = sbr.rel (%p2028) target = $region44
    $region43: #{encoder_block.2} parent=5 // pred_region
      %s2031 = ssub.s32 %s10, 2
      // Predicated region
      $region45: #{encoder_block.2} parent=43 // pred_check
        %p2032 = pneg %p128
      $region46: #{encoder_block.2} parent=43 // pred_check_branch
        %2034 = sbr.rel (%p2032) target = $region48
      $region47: #{encoder_block.2} parent=43 // pred_region
        %p2035 = scmp.lt.s32.totalorder %s16, 1
        %s2036 = scalar_select %p2035, %s16, 1
        %s2037 = smul.addr %s2036, 32
        %s2038 = smul.addr %s2037, 8
        %s2039 = scalar_lea.vmem %s4, %s2038
      $region48: #{encoder_block.2} parent=43 // pred_fallthru
        _
    $region44: #{encoder_block.2} parent=5 // pred_fallthru
      _
  $region6: #{encoder_block.2} parent=0 // loop_footer
    %s14 = sadd.s32 1, %s10
  $region7: #{encoder_block.2} parent=0 // loop_footer_branch
    %9 = sbr.rel target = $region3
  $region8: #{encoder_block.2} parent=0 // loop_exit
    _

// kernel: encoder_block.3
$region0: #{encoder_block.3}
  #allocation0 [shape = 'u32[]', space=smem, size = 0x4, offset = 0x4, fixed_abs, tag = 'smem constant byte address 0x4 - core index']
  #allocation1 [shape = 'u32[144,128]{1,0:T(1,128)}', space=vmem, size = 0x12000, scoped, tag = 'internal scratch']
  %s0 = inlined_call_operand.vmem [shape: f32[2,16,16,8], index: 0, kind: input, shape index: {}]
  %s1 = inlined_call_operand.vmem [shape: f32[2,16,16,4], index: 1, kind: input, shape index: {}]
  %s2 = inlined_call_operand.vmem [shape: bf16[72,8], index: 2, kind: input, shape index: {}]
  %s3 = inlined_call_operand.vmem [shape: bf16[4,8], index: 3, kind: input, shape index: {}]
  %s4 = inlined_call_operand.vmem [shape: f32[1,8], index: 4, kind: input, shape index: {}]
  %s5 = inlined_call_operand.vmem [shape: f32[1,8], index: 5, kind: input, shape index: {}]
  %s6 = inlined_call_operand.vmem [shape: f32[1,8], index: 6, kind: input, shape index: {}]
  %s7 = inlined_call_operand.vmem [shape: f32[2,8,8,8], index: 7, kind: output, shape index: {0}]
  %s8 = inlined_call_operand.vmem [shape: f32[2,16,16,8], index: 8, kind: output, shape index: {1}]
  %9 = xla_tuple %s7, %s8
  %s10 = sld [smem:[#allocation0]]
  $region69: #{encoder_block.3} parent=0
    _
  %s12 = ssub.s32 1, %s10
  %s13 = scalar_select 0, %s12, %s10
  loop: start=0, step=1, limit=4
  $region2: #{encoder_block.3} parent=0 // loop_pre_header
    _
  $region3: #{encoder_block.3} parent=0 // loop_header
    %s15 = sphi 0, %s19
    %p16 = scmp.ge.s32.totalorder %s15, 4
    %s25 = sphi 0, %s27
    %s28 = sphi 0, %s25
    %s29 = sphi 0, %s28
    %s45 = sphi 0, %s29
    %s51 = sphi 0, %s53
    %s54 = sphi 0, %s51
    %s55 = sphi 0, %s54
    %s71 = sphi 0, %s55
    %s75 = sphi 0, %s75
    %s77 = sphi 0, %s75
    %s78 = sphi 0, %s77
    %s92 = sphi 0, %s78
    %s96 = sphi 0, %s96
    %s98 = sphi 0, %s96
    %s99 = sphi 0, %s98
    %s113 = sphi 0, %s99
    %s117 = sphi 0, %s117
    %s119 = sphi 0, %s117
    %s120 = sphi 0, %s119
    %s134 = sphi 0, %s120
    %s138 = sphi 0, %s138
    %s140 = sphi 0, %s138
    %s141 = sphi 0, %s140
    %s155 = sphi 0, %s141
    %s159 = sphi 0, %s159
    %s161 = sphi 0, %s159
    %s162 = sphi 0, %s161
    %s176 = sphi 0, %s162
    %s182 = sphi 0, %s184
    %s185 = sphi 0, %s182
    %s186 = sphi 0, %s185
    %s202 = sphi 0, %s186
    %s208 = sphi 0, %s210
    %s211 = sphi 0, %s208
    %s212 = sphi 0, %s211
    %s228 = sphi 0, %s212
  $region4: #{encoder_block.3} parent=0 // loop_header_branch
    %18 = sbr.rel (%p16) target = $region8
  $region5: #{encoder_block.3} parent=0 // loop_body
    %s20 = ssub.s32 %s15, 1
    %s21 = ssub.s32 %s15, 2
    %s22 = sadd.s32 %s15, 1
    %s23 = ssub.s32 %s15, %s22
    %p24 = scmp.eq.s32.totalorder %s23, 0
    %s26 = sadd.s32 %s25, 1
    %s27 = scalar_select %p24, %s25, %s26
    %p30 = pneg %p24
    %p31 = scmp.eq.s32.totalorder %s15, 1
    %p32 = por %p30, %p31
    %p33 = scmp.ne.s32.totalorder %s25, %s28
    %p34 = scmp.eq.s32.totalorder %s15, 0
    %p35 = por %p33, %p34
    %p36 = scmp.ne.s32.totalorder %s25, %s28
    %p37 = scmp.eq.s32.totalorder %s20, 1
    %p38 = por %p36, %p37
    %p39 = scmp.ne.s32.totalorder %s28, %s29
    %p40 = scmp.eq.s32.totalorder %s20, 0
    %p41 = por %p39, %p40
    %p42 = scmp.ne.s32.totalorder %s28, %s29
    %p43 = scmp.eq.s32.totalorder %s21, 1
    %p44 = por %p42, %p43
    %p46 = scmp.ne.s32.totalorder %s29, %s45
    %p47 = scmp.eq.s32.totalorder %s21, 0
    %p48 = por %p46, %p47
    %s49 = ssub.s32 %s15, %s22
    %p50 = scmp.eq.s32.totalorder %s49, 0
    %s52 = sadd.s32 %s51, 1
    %s53 = scalar_select %p50, %s51, %s52
    %p56 = pneg %p50
    %p57 = scmp.eq.s32.totalorder %s15, 1
    %p58 = por %p56, %p57
    %p59 = scmp.ne.s32.totalorder %s51, %s54
    %p60 = scmp.eq.s32.totalorder %s15, 0
    %p61 = por %p59, %p60
    %p62 = scmp.ne.s32.totalorder %s51, %s54
    %p63 = scmp.eq.s32.totalorder %s20, 1
    %p64 = por %p62, %p63
    %p65 = scmp.ne.s32.totalorder %s54, %s55
    %p66 = scmp.eq.s32.totalorder %s20, 0
    %p67 = por %p65, %p66
    %p68 = scmp.ne.s32.totalorder %s54, %s55
    %p69 = scmp.eq.s32.totalorder %s21, 1
    %p70 = por %p68, %p69
    %p72 = scmp.ne.s32.totalorder %s55, %s71
    %p73 = scmp.eq.s32.totalorder %s21, 0
    %p74 = por %p72, %p73
    %s76 = sadd.s32 %s75, 1
    %p79 = scmp.eq.s32.totalorder %s15, 1
    %p80 = scmp.ne.s32.totalorder %s75, %s77
    %p81 = scmp.eq.s32.totalorder %s15, 0
    %p82 = por %p80, %p81
    %p83 = scmp.ne.s32.totalorder %s75, %s77
    %p84 = scmp.eq.s32.totalorder %s20, 1
    %p85 = por %p83, %p84
    %p86 = scmp.ne.s32.totalorder %s77, %s78
    %p87 = scmp.eq.s32.totalorder %s20, 0
    %p88 = por %p86, %p87
    %p89 = scmp.ne.s32.totalorder %s77, %s78
    %p90 = scmp.eq.s32.totalorder %s21, 1
    %p91 = por %p89, %p90
    %p93 = scmp.ne.s32.totalorder %s78, %s92
    %p94 = scmp.eq.s32.totalorder %s21, 0
    %p95 = por %p93, %p94
    %s97 = sadd.s32 %s96, 1
    %p100 = scmp.eq.s32.totalorder %s15, 1
    %p101 = scmp.ne.s32.totalorder %s96, %s98
    %p102 = scmp.eq.s32.totalorder %s15, 0
    %p103 = por %p101, %p102
    %p104 = scmp.ne.s32.totalorder %s96, %s98
    %p105 = scmp.eq.s32.totalorder %s20, 1
    %p106 = por %p104, %p105
    %p107 = scmp.ne.s32.totalorder %s98, %s99
    %p108 = scmp.eq.s32.totalorder %s20, 0
    %p109 = por %p107, %p108
    %p110 = scmp.ne.s32.totalorder %s98, %s99
    %p111 = scmp.eq.s32.totalorder %s21, 1
    %p112 = por %p110, %p111
    %p114 = scmp.ne.s32.totalorder %s99, %s113
    %p115 = scmp.eq.s32.totalorder %s21, 0
    %p116 = por %p114, %p115
    %s118 = sadd.s32 %s117, 1
    %p121 = scmp.eq.s32.totalorder %s15, 1
    %p122 = scmp.ne.s32.totalorder %s117, %s119
    %p123 = scmp.eq.s32.totalorder %s15, 0
    %p124 = por %p122, %p123
    %p125 = scmp.ne.s32.totalorder %s117, %s119
    %p126 = scmp.eq.s32.totalorder %s20, 1
    %p127 = por %p125, %p126
    %p128 = scmp.ne.s32.totalorder %s119, %s120
    %p129 = scmp.eq.s32.totalorder %s20, 0
    %p130 = por %p128, %p129
    %p131 = scmp.ne.s32.totalorder %s119, %s120
    %p132 = scmp.eq.s32.totalorder %s21, 1
    %p133 = por %p131, %p132
    %p135 = scmp.ne.s32.totalorder %s120, %s134
    %p136 = scmp.eq.s32.totalorder %s21, 0
    %p137 = por %p135, %p136
    %s139 = sadd.s32 %s138, 1
    %p142 = scmp.eq.s32.totalorder %s15, 1
    %p143 = scmp.ne.s32.totalorder %s138, %s140
    %p144 = scmp.eq.s32.totalorder %s15, 0
    %p145 = por %p143, %p144
    %p146 = scmp.ne.s32.totalorder %s138, %s140
    %p147 = scmp.eq.s32.totalorder %s20, 1
    %p148 = por %p146, %p147
    %p149 = scmp.ne.s32.totalorder %s140, %s141
    %p150 = scmp.eq.s32.totalorder %s20, 0
    %p151 = por %p149, %p150
    %p152 = scmp.ne.s32.totalorder %s140, %s141
    %p153 = scmp.eq.s32.totalorder %s21, 1
    %p154 = por %p152, %p153
    %p156 = scmp.ne.s32.totalorder %s141, %s155
    %p157 = scmp.eq.s32.totalorder %s21, 0
    %p158 = por %p156, %p157
    %s160 = sadd.s32 %s159, 1
    %p163 = scmp.eq.s32.totalorder %s15, 1
    %p164 = scmp.ne.s32.totalorder %s159, %s161
    %p165 = scmp.eq.s32.totalorder %s15, 0
    %p166 = por %p164, %p165
    %p167 = scmp.ne.s32.totalorder %s159, %s161
    %p168 = scmp.eq.s32.totalorder %s20, 1
    %p169 = por %p167, %p168
    %p170 = scmp.ne.s32.totalorder %s161, %s162
    %p171 = scmp.eq.s32.totalorder %s20, 0
    %p172 = por %p170, %p171
    %p173 = scmp.ne.s32.totalorder %s161, %s162
    %p174 = scmp.eq.s32.totalorder %s21, 1
    %p175 = por %p173, %p174
    %p177 = scmp.ne.s32.totalorder %s162, %s176
    %p178 = scmp.eq.s32.totalorder %s21, 0
    %p179 = por %p177, %p178
    %s180 = ssub.s32 %s15, %s22
    %p181 = scmp.eq.s32.totalorder %s180, 0
    %s183 = sadd.s32 %s182, 1
    %s184 = scalar_select %p181, %s182, %s183
    %p187 = pneg %p181
    %p188 = scmp.eq.s32.totalorder %s15, 1
    %p189 = por %p187, %p188
    %p190 = scmp.ne.s32.totalorder %s182, %s185
    %p191 = scmp.eq.s32.totalorder %s15, 0
    %p192 = por %p190, %p191
    %p193 = scmp.ne.s32.totalorder %s182, %s185
    %p194 = scmp.eq.s32.totalorder %s20, 1
    %p195 = por %p193, %p194
    %p196 = scmp.ne.s32.totalorder %s185, %s186
    %p197 = scmp.eq.s32.totalorder %s20, 0
    %p198 = por %p196, %p197
    %p199 = scmp.ne.s32.totalorder %s185, %s186
    %p200 = scmp.eq.s32.totalorder %s21, 1
    %p201 = por %p199, %p200
    %p203 = scmp.ne.s32.totalorder %s186, %s202
    %p204 = scmp.eq.s32.totalorder %s21, 0
    %p205 = por %p203, %p204
    %s206 = ssub.s32 %s15, %s22
    %p207 = scmp.eq.s32.totalorder %s206, 0
    %s209 = sadd.s32 %s208, 1
    %s210 = scalar_select %p207, %s208, %s209
    %p213 = pneg %p207
    %p214 = scmp.eq.s32.totalorder %s15, 1
    %p215 = por %p213, %p214
    %p216 = scmp.ne.s32.totalorder %s208, %s211
    %p217 = scmp.eq.s32.totalorder %s15, 0
    %p218 = por %p216, %p217
    %p219 = scmp.ne.s32.totalorder %s208, %s211
    %p220 = scmp.eq.s32.totalorder %s20, 1
    %p221 = por %p219, %p220
    %p222 = scmp.ne.s32.totalorder %s211, %s212
    %p223 = scmp.eq.s32.totalorder %s20, 0
    %p224 = por %p222, %p223
    %p225 = scmp.ne.s32.totalorder %s211, %s212
    %p226 = scmp.eq.s32.totalorder %s21, 1
    %p227 = por %p225, %p226
    %p229 = scmp.ne.s32.totalorder %s212, %s228
    %p230 = scmp.eq.s32.totalorder %s21, 0
    %p231 = por %p229, %p230
    %p232 = scmp.le.s32.totalorder 1, %s15
    %p233 = scmp.lt.s32.totalorder %s15, 3
    %p234 = pnand %p232, %p233
    %p235 = pneg %p234
    // Predicated region
    $region9: #{encoder_block.3} parent=5 // pred_check
      _
    $region10: #{encoder_block.3} parent=5 // pred_check_branch
      %237 = sbr.rel (%p234) target = $region12
    $region11: #{encoder_block.3} parent=5 // pred_region
      %s238 = ssub.s32 %s15, 1
      // Predicated region
      $region13: #{encoder_block.3} parent=11 // pred_check
        %p239 = pneg %p88
      $region14: #{encoder_block.3} parent=11 // pred_check_branch
        %241 = sbr.rel (%p239) target = $region16
      $region15: #{encoder_block.3} parent=11 // pred_region
        _
      $region16: #{encoder_block.3} parent=11 // pred_fallthru
        _
      // Predicated region
      $region17: #{encoder_block.3} parent=11 // pred_check
        %p242 = pneg %p109
      $region18: #{encoder_block.3} parent=11 // pred_check_branch
        %244 = sbr.rel (%p242) target = $region20
      $region19: #{encoder_block.3} parent=11 // pred_region
        _
      $region20: #{encoder_block.3} parent=11 // pred_fallthru
        _
      // Predicated region
      $region21: #{encoder_block.3} parent=11 // pred_check
        %p245 = pneg %p130
      $region22: #{encoder_block.3} parent=11 // pred_check_branch
        %247 = sbr.rel (%p245) target = $region24
      $region23: #{encoder_block.3} parent=11 // pred_region
        _
      $region24: #{encoder_block.3} parent=11 // pred_fallthru
        _
      // Predicated region
      $region25: #{encoder_block.3} parent=11 // pred_check
        %p248 = pneg %p151
      $region26: #{encoder_block.3} parent=11 // pred_check_branch
        %250 = sbr.rel (%p248) target = $region28
      $region27: #{encoder_block.3} parent=11 // pred_region
        _
      $region28: #{encoder_block.3} parent=11 // pred_fallthru
        _
      // Predicated region
      $region29: #{encoder_block.3} parent=11 // pred_check
        %p251 = pneg %p172
      $region30: #{encoder_block.3} parent=11 // pred_check_branch
        %253 = sbr.rel (%p251) target = $region32
      $region31: #{encoder_block.3} parent=11 // pred_region
        _
      $region32: #{encoder_block.3} parent=11 // pred_fallthru
        _
    $region12: #{encoder_block.3} parent=5 // pred_fallthru
      _
    %p254 = scmp.lt.s32.totalorder %s15, 2
    // Predicated region
    $region33: #{encoder_block.3} parent=5 // pred_check
      %p255 = pneg %p254
    $region34: #{encoder_block.3} parent=5 // pred_check_branch
      %257 = sbr.rel (%p255) target = $region36
    $region35: #{encoder_block.3} parent=5 // pred_region
      // Predicated region
      $region37: #{encoder_block.3} parent=35 // pred_check
        %p258 = pneg %p35
      $region38: #{encoder_block.3} parent=35 // pred_check_branch
        %260 = sbr.rel (%p258) target = $region40
      $region39: #{encoder_block.3} parent=35 // pred_region
        %p261 = scmp.lt.s32.totalorder %s15, 1
        %s262 = scalar_select %p261, %s15, 1
        %s263 = smul.addr %s262, 32
        %s264 = smul.addr %s263, 8
        %s265 = scalar_lea.vmem %s0, %s264
      $region40: #{encoder_block.3} parent=35 // pred_fallthru
        _
      // Predicated region
      $region41: #{encoder_block.3} parent=35 // pred_check
        %p266 = pneg %p61
      $region42: #{encoder_block.3} parent=35 // pred_check_branch
        %268 = sbr.rel (%p266) target = $region44
      $region43: #{encoder_block.3} parent=35 // pred_region
        %p269 = scmp.lt.s32.totalorder %s15, 1
        %s270 = scalar_select %p269, %s15, 1
        %s271 = smul.addr %s270, 32
        %s272 = smul.addr %s271, 8
        %s273 = scalar_lea.vmem %s1, %s272
      $region44: #{encoder_block.3} parent=35 // pred_fallthru
        _
    $region36: #{encoder_block.3} parent=5 // pred_fallthru
      _
    %p274 = scmp.le.s32.totalorder 1, %s15
    %p275 = scmp.lt.s32.totalorder %s15, 3
    %p276 = pnand %p274, %p275
    %p277 = pneg %p276
    // Predicated region
    $region45: #{encoder_block.3} parent=5 // pred_check
      _
    $region46: #{encoder_block.3} parent=5 // pred_check_branch
      %279 = sbr.rel (%p276) target = $region48
    $region47: #{encoder_block.3} parent=5 // pred_region
      %s280 = ssub.s32 %s15, 1
      %p281 = scmp.lt.s32.totalorder %s20, 1
      %s282 = scalar_select %p281, %s20, 1
      %s283 = smul.addr %s282, 32
      %s284 = smul.addr %s283, 8
      %s285 = scalar_lea.vmem %s0, %s284
      %p286 = pneg %p41
      %p287 = pneg %p38
      %p288 = scmp.lt.s32.totalorder %s20, 1
      %s289 = scalar_select %p288, %s20, 1
      %s290 = smul.addr %s289, 32
      %s291 = smul.addr %s290, 8
      %s292 = scalar_lea.vmem %s1, %s291
      %p293 = pneg %p67
      %p294 = pneg %p64
      %p295 = pneg %p88
      %p296 = pneg %p85
      %p297 = pneg %p109
      %p298 = pneg %p106
      %p299 = pneg %p130
      %p300 = pneg %p127
      %p301 = pneg %p151
      %p302 = pneg %p148
      %p303 = pneg %p172
      %p304 = pneg %p169
      %p305 = pneg %p198
      %p306 = pneg %p195
      %p307 = scmp.lt.s32.totalorder %s20, 1
      %s308 = scalar_select %p307, %s20, 1
      %s309 = smul.addr %s308, 8
      %s310 = smul.addr %s309, 8
      %s311 = scalar_lea.vmem %s7, %s310
      %p312 = pneg %p224
      %p313 = pneg %p221
      %p314 = scmp.lt.s32.totalorder %s20, 1
      %s315 = scalar_select %p314, %s20, 1
      %s316 = smul.addr %s315, 32
      %s317 = smul.addr %s316, 8
      %s318 = scalar_lea.vmem %s8, %s317
      %p319 = scmp.lt.s32.totalorder %s20, 1
      %s320 = scalar_select %p319, %s20, 1
      %s321 = smul.addr %s320, 32
      %s322 = smul.addr %s321, 8
      %s323 = scalar_lea.vmem %s0, %s322
      %p324 = scmp.lt.s32.totalorder %s20, 1
      %s325 = scalar_select %p324, %s20, 1
      %s326 = smul.addr %s325, 32
      %s327 = smul.addr %s326, 8
      %s328 = scalar_lea.vmem %s1, %s327
      %p329 = scmp.lt.s32.totalorder %s20, 1
      %s330 = scalar_select %p329, %s20, 1
      %s331 = smul.addr %s330, 8
      %s332 = smul.addr %s331, 8
      %s333 = scalar_lea.vmem %s7, %s332
      %p334 = scmp.lt.s32.totalorder %s20, 1
      %s335 = scalar_select %p334, %s20, 1
      %s336 = smul.addr %s335, 32
      %s337 = smul.addr %s336, 8
      %s338 = scalar_lea.vmem %s8, %s337
      %v340 = vld [vmem:[%s328] sm:$0xff]
      %v341 = vld [vmem:[%s328 + $0x8] sm:$0xff]
      %v342 = vld [vmem:[%s328 + $0x10] sm:$0xff]
      %v343 = vld [vmem:[%s328 + $0x18] sm:$0xff]
      %v344 = vld [vmem:[%s328 + $0x20] sm:$0xff]
      %v345 = vld [vmem:[%s328 + $0x28] sm:$0xff]
      %v346 = vld [vmem:[%s328 + $0x30] sm:$0xff]
      %v347 = vld [vmem:[%s328 + $0x38] sm:$0xff]
      %v348 = vld [vmem:[%s328 + $0x40] sm:$0xff]
      %v349 = vld [vmem:[%s328 + $0x48] sm:$0xff]
      %v350 = vld [vmem:[%s328 + $0x50] sm:$0xff]
      %v351 = vld [vmem:[%s328 + $0x58] sm:$0xff]
      %v352 = vld [vmem:[%s328 + $0x60] sm:$0xff]
      %v353 = vld [vmem:[%s328 + $0x68] sm:$0xff]
      %v354 = vld [vmem:[%s328 + $0x70] sm:$0xff]
      %v355 = vld [vmem:[%s328 + $0x78] sm:$0xff]
      %v356 = vld [vmem:[%s328 + $0x80] sm:$0xff]
      %v357 = vld [vmem:[%s328 + $0x88] sm:$0xff]
      %v358 = vld [vmem:[%s328 + $0x90] sm:$0xff]
      %v359 = vld [vmem:[%s328 + $0x98] sm:$0xff]
      %v360 = vld [vmem:[%s328 + $0xa0] sm:$0xff]
      %v361 = vld [vmem:[%s328 + $0xa8] sm:$0xff]
      %v362 = vld [vmem:[%s328 + $0xb0] sm:$0xff]
      %v363 = vld [vmem:[%s328 + $0xb8] sm:$0xff]
      %v364 = vld [vmem:[%s328 + $0xc0] sm:$0xff]
      %v365 = vld [vmem:[%s328 + $0xc8] sm:$0xff]
      %v366 = vld [vmem:[%s328 + $0xd0] sm:$0xff]
      %v367 = vld [vmem:[%s328 + $0xd8] sm:$0xff]
      %v368 = vld [vmem:[%s328 + $0xe0] sm:$0xff]
      %v369 = vld [vmem:[%s328 + $0xe8] sm:$0xff]
      %v370 = vld [vmem:[%s328 + $0xf0] sm:$0xff]
      %v371 = vld [vmem:[%s328 + $0xf8] sm:$0xff]
      %v372 = vpack.c.bf16 %v341, %v340
      %v373 = vpack.c.bf16 %v343, %v342
      %v374 = vpack.c.bf16 %v345, %v344
      %v375 = vpack.c.bf16 %v347, %v346
      %v376 = vpack.c.bf16 %v349, %v348
      %v377 = vpack.c.bf16 %v351, %v350
      %v378 = vpack.c.bf16 %v353, %v352
      %v379 = vpack.c.bf16 %v355, %v354
      %v380 = vpack.c.bf16 %v357, %v356
      %v381 = vpack.c.bf16 %v359, %v358
      %v382 = vpack.c.bf16 %v361, %v360
      %v383 = vpack.c.bf16 %v363, %v362
      %v384 = vpack.c.bf16 %v365, %v364
      %v385 = vpack.c.bf16 %v367, %v366
      %v386 = vpack.c.bf16 %v369, %v368
      %v387 = vpack.c.bf16 %v371, %v370
      %v388 = vld [vmem:[%s3] sm:$0x3]
      %vm389 = vcmask 31744
      %v391 = vsel %vm389, %v372, 0
      %v394 = vsel %vm389, %v373, 0
      %v397 = vsel %vm389, %v374, 0
      %v400 = vsel %vm389, %v375, 0
      %v403 = vsel %vm389, %v376, 0
      %v406 = vsel %vm389, %v377, 0
      %v409 = vsel %vm389, %v378, 0
      %v412 = vsel %vm389, %v379, 0
      %v415 = vsel %vm389, %v380, 0
      %v418 = vsel %vm389, %v381, 0
      %v421 = vsel %vm389, %v382, 0
      %v424 = vsel %vm389, %v383, 0
      %v427 = vsel %vm389, %v384, 0
      %v430 = vsel %vm389, %v385, 0
      %v433 = vsel %vm389, %v386, 0
      %v436 = vsel %vm389, %v387, 0
      %vm438 = vcmask 1041408
      %v440 = vsel %vm438, %v388, 0
      %442 = vmatprep.subr.bf16.mxu0 0
      %443 = vmatpush1.bf16.msra.mxu0 %v440
      %444 = vmatprep.subr.bf16.mxu0 0
      %445 = vmatpush1.bf16.msra.mxu0 0
      %446 = vmatprep.subr.bf16.mxu0 0
      %447 = vmatpush1.bf16.msra.mxu0 0
      %448 = vmatprep.subr.bf16.mxu0 0
      %449 = vmatpush1.bf16.msra.mxu0 0
      %450 = vmatprep.subr.bf16.mxu0 0
      %451 = vmatpush1.bf16.msra.mxu0 0
      %452 = vmatprep.subr.bf16.mxu0 0
      %453 = vmatpush1.bf16.msra.mxu0 0
      %454 = vmatprep.subr.bf16.mxu0 0
      %455 = vmatpush1.bf16.msra.mxu0 0
      %456 = vmatprep.subr.bf16.mxu0 0
      %457 = vmatpush1.bf16.msra.mxu0 0
      %458 = vmatprep.subr.bf16.mxu0 0
      %459 = vmatpush1.bf16.msra.mxu0 0
      %460 = vmatprep.subr.bf16.mxu0 0
      %461 = vmatpush1.bf16.msra.mxu0 0
      %462 = vmatprep.subr.bf16.mxu0 0
      %463 = vmatpush1.bf16.msra.mxu0 0
      %464 = vmatprep.subr.bf16.mxu0 0
      %465 = vmatpush1.bf16.msra.mxu0 0
      %466 = vmatprep.subr.bf16.mxu0 0
      %467 = vmatpush1.bf16.msra.mxu0 0
      %468 = vmatprep.subr.bf16.mxu0 0
      %469 = vmatpush1.bf16.msra.mxu0 0
      %470 = vmatprep.subr.bf16.mxu0 0
      %471 = vmatpush1.bf16.msra.mxu0 0
      %472 = vmatprep.subr.bf16.mxu0 0
      %473 = vmatpush1.bf16.msra.mxu0 0
      %474 = vmatprep.mubr.bf16.mxu0 0
      %475 = vmatmul.mubr.bf16.gmra.mrb[0].mxu0 %v391
      %v476 = vpop.f32.mrb[0].mxu0
      %v477 = vadd.f32 0.0, %v476
      %v478 = vpop.f32.mrb[0].mxu0
      %v479 = vpop.f32.mrb[0].mxu0
      %v480 = vadd.f32 0.0, %v479
      %v481 = vpop.f32.mrb[0].mxu0
      %482 = vmatprep.mubr.bf16.mxu0 0
      %483 = vmatmul.mubr.bf16.gmra.mrb[0].mxu0 %v394
      %v484 = vpop.f32.mrb[0].mxu0
      %v485 = vadd.f32 0.0, %v484
      %v486 = vpop.f32.mrb[0].mxu0
      %v487 = vpop.f32.mrb[0].mxu0
      %v488 = vadd.f32 0.0, %v487
      %v489 = vpop.f32.mrb[0].mxu0
      %490 = vmatprep.mubr.bf16.mxu0 0
      %491 = vmatmul.mubr.bf16.gmra.mrb[0].mxu0 %v397
      %v492 = vpop.f32.mrb[0].mxu0
      %v493 = vadd.f32 0.0, %v492
      %v494 = vpop.f32.mrb[0].mxu0
      %v495 = vpop.f32.mrb[0].mxu0
      %v496 = vadd.f32 0.0, %v495
      %v497 = vpop.f32.mrb[0].mxu0
      %498 = vmatprep.mubr.bf16.mxu0 0
      %499 = vmatmul.mubr.bf16.gmra.mrb[0].mxu0 %v400
      %v500 = vpop.f32.mrb[0].mxu0
      %v501 = vadd.f32 0.0, %v500
      %v502 = vpop.f32.mrb[0].mxu0
      %v503 = vpop.f32.mrb[0].mxu0
      %v504 = vadd.f32 0.0, %v503
      %v505 = vpop.f32.mrb[0].mxu0
      %506 = vmatprep.mubr.bf16.mxu0 0
      %507 = vmatmul.mubr.bf16.gmra.mrb[0].mxu0 %v403
      %v508 = vpop.f32.mrb[0].mxu0
      %v509 = vadd.f32 0.0, %v508
      %v510 = vpop.f32.mrb[0].mxu0
      %v511 = vpop.f32.mrb[0].mxu0
      %v512 = vadd.f32 0.0, %v511
      %v513 = vpop.f32.mrb[0].mxu0
      %514 = vmatprep.mubr.bf16.mxu0 0
      %515 = vmatmul.mubr.bf16.gmra.mrb[0].mxu0 %v406
      %v516 = vpop.f32.mrb[0].mxu0
      %v517 = vadd.f32 0.0, %v516
      %v518 = vpop.f32.mrb[0].mxu0
      %v519 = vpop.f32.mrb[0].mxu0
      %v520 = vadd.f32 0.0, %v519
      %v521 = vpop.f32.mrb[0].mxu0
      %522 = vmatprep.mubr.bf16.mxu0 0
      %523 = vmatmul.mubr.bf16.gmra.mrb[0].mxu0 %v409
      %v524 = vpop.f32.mrb[0].mxu0
      %v525 = vadd.f32 0.0, %v524
      %v526 = vpop.f32.mrb[0].mxu0
      %v527 = vpop.f32.mrb[0].mxu0
      %v528 = vadd.f32 0.0, %v527
      %v529 = vpop.f32.mrb[0].mxu0
      %530 = vmatprep.mubr.bf16.mxu0 0
      %531 = vmatmul.mubr.bf16.gmra.mrb[0].mxu0 %v412
      %v532 = vpop.f32.mrb[0].mxu0
      %v533 = vadd.f32 0.0, %v532
      %v534 = vpop.f32.mrb[0].mxu0
      %v535 = vpop.f32.mrb[0].mxu0
      %v536 = vadd.f32 0.0, %v535
      %v537 = vpop.f32.mrb[0].mxu0
      %538 = vmatprep.mubr.bf16.mxu0 0
      %539 = vmatmul.mubr.bf16.gmra.mrb[0].mxu0 %v415
      %v540 = vpop.f32.mrb[0].mxu0
      %v541 = vadd.f32 0.0, %v540
      %v542 = vpop.f32.mrb[0].mxu0
      %v543 = vpop.f32.mrb[0].mxu0
      %v544 = vadd.f32 0.0, %v543
      %v545 = vpop.f32.mrb[0].mxu0
      %546 = vmatprep.mubr.bf16.mxu0 0
      %547 = vmatmul.mubr.bf16.gmra.mrb[0].mxu0 %v418
      %v548 = vpop.f32.mrb[0].mxu0
      %v549 = vadd.f32 0.0, %v548
      %v550 = vpop.f32.mrb[0].mxu0
      %v551 = vpop.f32.mrb[0].mxu0
      %v552 = vadd.f32 0.0, %v551
      %v553 = vpop.f32.mrb[0].mxu0
      %554 = vmatprep.mubr.bf16.mxu0 0
      %555 = vmatmul.mubr.bf16.gmra.mrb[0].mxu0 %v421
      %v556 = vpop.f32.mrb[0].mxu0
      %v557 = vadd.f32 0.0, %v556
      %v558 = vpop.f32.mrb[0].mxu0
      %v559 = vpop.f32.mrb[0].mxu0
      %v560 = vadd.f32 0.0, %v559
      %v561 = vpop.f32.mrb[0].mxu0
      %562 = vmatprep.mubr.bf16.mxu0 0
      %563 = vmatmul.mubr.bf16.gmra.mrb[0].mxu0 %v424
      %v564 = vpop.f32.mrb[0].mxu0
      %v565 = vadd.f32 0.0, %v564
      %v566 = vpop.f32.mrb[0].mxu0
      %v567 = vpop.f32.mrb[0].mxu0
      %v568 = vadd.f32 0.0, %v567
      %v569 = vpop.f32.mrb[0].mxu0
      %570 = vmatprep.mubr.bf16.mxu0 0
      %571 = vmatmul.mubr.bf16.gmra.mrb[0].mxu0 %v427
      %v572 = vpop.f32.mrb[0].mxu0
      %v573 = vadd.f32 0.0, %v572
      %v574 = vpop.f32.mrb[0].mxu0
      %v575 = vpop.f32.mrb[0].mxu0
      %v576 = vadd.f32 0.0, %v575
      %v577 = vpop.f32.mrb[0].mxu0
      %578 = vmatprep.mubr.bf16.mxu0 0
      %579 = vmatmul.mubr.bf16.gmra.mrb[0].mxu0 %v430
      %v580 = vpop.f32.mrb[0].mxu0
      %v581 = vadd.f32 0.0, %v580
      %v582 = vpop.f32.mrb[0].mxu0
      %v583 = vpop.f32.mrb[0].mxu0
      %v584 = vadd.f32 0.0, %v583
      %v585 = vpop.f32.mrb[0].mxu0
      %586 = vmatprep.mubr.bf16.mxu0 0
      %587 = vmatmul.mubr.bf16.gmra.mrb[0].mxu0 %v433
      %v588 = vpop.f32.mrb[0].mxu0
      %v589 = vadd.f32 0.0, %v588
      %v590 = vpop.f32.mrb[0].mxu0
      %v591 = vpop.f32.mrb[0].mxu0
      %v592 = vadd.f32 0.0, %v591
      %v593 = vpop.f32.mrb[0].mxu0
      %594 = vmatprep.mubr.bf16.mxu0 0
      %595 = vmatmul.mubr.bf16.gmra.mrb[0].mxu0 %v436
      %v596 = vpop.f32.mrb[0].mxu0
      %v597 = vadd.f32 0.0, %v596
      %v598 = vpop.f32.mrb[0].mxu0
      %v599 = vpop.f32.mrb[0].mxu0
      %v600 = vadd.f32 0.0, %v599
      %v601 = vpop.f32.mrb[0].mxu0
      %602 = vdwg.mxu0
      %v603 = vld [vmem:[%s4] sm:$0x1]
      %v605 = vlaneseq
      %v606 = vshrl.u32 %v605, 7
      %v607 = vsub.s32 0, %v606
      %v608 = vrot.slane %v603, %v607
      %v610 = vadd.f32 %v477, %v608
      %v611 = vadd.f32 %v480, %v608
      %v612 = vadd.f32 %v485, %v608
      %v613 = vadd.f32 %v488, %v608
      %v614 = vadd.f32 %v493, %v608
      %v615 = vadd.f32 %v496, %v608
      %v616 = vadd.f32 %v501, %v608
      %v617 = vadd.f32 %v504, %v608
      %v618 = vadd.f32 %v509, %v608
      %v619 = vadd.f32 %v512, %v608
      %v620 = vadd.f32 %v517, %v608
      %v621 = vadd.f32 %v520, %v608
      %v622 = vadd.f32 %v525, %v608
      %v623 = vadd.f32 %v528, %v608
      %v624 = vadd.f32 %v533, %v608
      %v625 = vadd.f32 %v536, %v608
      %v626 = vadd.f32 %v541, %v608
      %v627 = vadd.f32 %v544, %v608
      %v628 = vadd.f32 %v549, %v608
      %v629 = vadd.f32 %v552, %v608
      %v630 = vadd.f32 %v557, %v608
      %v631 = vadd.f32 %v560, %v608
      %v632 = vadd.f32 %v565, %v608
      %v633 = vadd.f32 %v568, %v608
      %v634 = vadd.f32 %v573, %v608
      %v635 = vadd.f32 %v576, %v608
      %v636 = vadd.f32 %v581, %v608
      %v637 = vadd.f32 %v584, %v608
      %v638 = vadd.f32 %v589, %v608
      %v639 = vadd.f32 %v592, %v608
      %v640 = vadd.f32 %v597, %v608
      %v641 = vadd.f32 %v600, %v608
      %v642 = vld [vmem:[%s323] sm:$0xff]
      %v643 = vld [vmem:[%s323 + $0x8] sm:$0xff]
      %v644 = vld [vmem:[%s323 + $0x10] sm:$0xff]
      %v645 = vld [vmem:[%s323 + $0x18] sm:$0xff]
      %v646 = vld [vmem:[%s323 + $0x20] sm:$0xff]
      %v647 = vld [vmem:[%s323 + $0x28] sm:$0xff]
      %v648 = vld [vmem:[%s323 + $0x30] sm:$0xff]
      %v649 = vld [vmem:[%s323 + $0x38] sm:$0xff]
      %v650 = vld [vmem:[%s323 + $0x40] sm:$0xff]
      %v651 = vld [vmem:[%s323 + $0x48] sm:$0xff]
      %v652 = vld [vmem:[%s323 + $0x50] sm:$0xff]
      %v653 = vld [vmem:[%s323 + $0x58] sm:$0xff]
      %v654 = vld [vmem:[%s323 + $0x60] sm:$0xff]
      %v655 = vld [vmem:[%s323 + $0x68] sm:$0xff]
      %v656 = vld [vmem:[%s323 + $0x70] sm:$0xff]
      %v657 = vld [vmem:[%s323 + $0x78] sm:$0xff]
      %v658 = vld [vmem:[%s323 + $0x80] sm:$0xff]
      %v659 = vld [vmem:[%s323 + $0x88] sm:$0xff]
      %v660 = vld [vmem:[%s323 + $0x90] sm:$0xff]
      %v661 = vld [vmem:[%s323 + $0x98] sm:$0xff]
      %v662 = vld [vmem:[%s323 + $0xa0] sm:$0xff]
      %v663 = vld [vmem:[%s323 + $0xa8] sm:$0xff]
      %v664 = vld [vmem:[%s323 + $0xb0] sm:$0xff]
      %v665 = vld [vmem:[%s323 + $0xb8] sm:$0xff]
      %v666 = vld [vmem:[%s323 + $0xc0] sm:$0xff]
      %v667 = vld [vmem:[%s323 + $0xc8] sm:$0xff]
      %v668 = vld [vmem:[%s323 + $0xd0] sm:$0xff]
      %v669 = vld [vmem:[%s323 + $0xd8] sm:$0xff]
      %v670 = vld [vmem:[%s323 + $0xe0] sm:$0xff]
      %v671 = vld [vmem:[%s323 + $0xe8] sm:$0xff]
      %v672 = vld [vmem:[%s323 + $0xf0] sm:$0xff]
      %v673 = vld [vmem:[%s323 + $0xf8] sm:$0xff]
      %v674 = vld [vmem:[%s5] sm:$0x1]
      %v676 = vlaneseq
      %v677 = vshrl.u32 %v676, 7
      %v678 = vsub.s32 0, %v677
      %v679 = vrot.slane %v674, %v678
      %v681 = vmul.f32 %v642, %v679
      %v682 = vmul.f32 %v643, %v679
      %v683 = vmul.f32 %v644, %v679
      %v684 = vmul.f32 %v645, %v679
      %v685 = vmul.f32 %v646, %v679
      %v686 = vmul.f32 %v647, %v679
      %v687 = vmul.f32 %v648, %v679
      %v688 = vmul.f32 %v649, %v679
      %v689 = vmul.f32 %v650, %v679
      %v690 = vmul.f32 %v651, %v679
      %v691 = vmul.f32 %v652, %v679
      %v692 = vmul.f32 %v653, %v679
      %v693 = vmul.f32 %v654, %v679
      %v694 = vmul.f32 %v655, %v679
      %v695 = vmul.f32 %v656, %v679
      %v696 = vmul.f32 %v657, %v679
      %v697 = vmul.f32 %v658, %v679
      %v698 = vmul.f32 %v659, %v679
      %v699 = vmul.f32 %v660, %v679
      %v700 = vmul.f32 %v661, %v679
      %v701 = vmul.f32 %v662, %v679
      %v702 = vmul.f32 %v663, %v679
      %v703 = vmul.f32 %v664, %v679
      %v704 = vmul.f32 %v665, %v679
      %v705 = vmul.f32 %v666, %v679
      %v706 = vmul.f32 %v667, %v679
      %v707 = vmul.f32 %v668, %v679
      %v708 = vmul.f32 %v669, %v679
      %v709 = vmul.f32 %v670, %v679
      %v710 = vmul.f32 %v671, %v679
      %v711 = vmul.f32 %v672, %v679
      %v712 = vmul.f32 %v673, %v679
      %v713 = vld [vmem:[%s6] sm:$0x1]
      %v715 = vlaneseq
      %v716 = vshrl.u32 %v715, 7
      %v717 = vsub.s32 0, %v716
      %v718 = vrot.slane %v713, %v717
      %v720 = vadd.f32 %v681, %v718
      %v721 = vadd.f32 %v682, %v718
      %v722 = vadd.f32 %v683, %v718
      %v723 = vadd.f32 %v684, %v718
      %v724 = vadd.f32 %v685, %v718
      %v725 = vadd.f32 %v686, %v718
      %v726 = vadd.f32 %v687, %v718
      %v727 = vadd.f32 %v688, %v718
      %v728 = vadd.f32 %v689, %v718
      %v729 = vadd.f32 %v690, %v718
      %v730 = vadd.f32 %v691, %v718
      %v731 = vadd.f32 %v692, %v718
      %v732 = vadd.f32 %v693, %v718
      %v733 = vadd.f32 %v694, %v718
      %v734 = vadd.f32 %v695, %v718
      %v735 = vadd.f32 %v696, %v718
      %v736 = vadd.f32 %v697, %v718
      %v737 = vadd.f32 %v698, %v718
      %v738 = vadd.f32 %v699, %v718
      %v739 = vadd.f32 %v700, %v718
      %v740 = vadd.f32 %v701, %v718
      %v741 = vadd.f32 %v702, %v718
      %v742 = vadd.f32 %v703, %v718
      %v743 = vadd.f32 %v704, %v718
      %v744 = vadd.f32 %v705, %v718
      %v745 = vadd.f32 %v706, %v718
      %v746 = vadd.f32 %v707, %v718
      %v747 = vadd.f32 %v708, %v718
      %v748 = vadd.f32 %v709, %v718
      %v749 = vadd.f32 %v710, %v718
      %v750 = vadd.f32 %v711, %v718
      %v751 = vadd.f32 %v712, %v718
      %vm752 = vcmp.ge.f32.partialorder %v720, 0.0
      %vm753 = vcmp.ge.f32.partialorder %v721, 0.0
      %vm754 = vcmp.ge.f32.partialorder %v722, 0.0
      %vm755 = vcmp.ge.f32.partialorder %v723, 0.0
      %vm756 = vcmp.ge.f32.partialorder %v724, 0.0
      %vm757 = vcmp.ge.f32.partialorder %v725, 0.0
      %vm758 = vcmp.ge.f32.partialorder %v726, 0.0
      %vm759 = vcmp.ge.f32.partialorder %v727, 0.0
      %vm760 = vcmp.ge.f32.partialorder %v728, 0.0
      %vm761 = vcmp.ge.f32.partialorder %v729, 0.0
      %vm762 = vcmp.ge.f32.partialorder %v730, 0.0
      %vm763 = vcmp.ge.f32.partialorder %v731, 0.0
      %vm764 = vcmp.ge.f32.partialorder %v732, 0.0
      %vm765 = vcmp.ge.f32.partialorder %v733, 0.0
      %vm766 = vcmp.ge.f32.partialorder %v734, 0.0
      %vm767 = vcmp.ge.f32.partialorder %v735, 0.0
      %vm768 = vcmp.ge.f32.partialorder %v736, 0.0
      %vm769 = vcmp.ge.f32.partialorder %v737, 0.0
      %vm770 = vcmp.ge.f32.partialorder %v738, 0.0
      %vm771 = vcmp.ge.f32.partialorder %v739, 0.0
      %vm772 = vcmp.ge.f32.partialorder %v740, 0.0
      %vm773 = vcmp.ge.f32.partialorder %v741, 0.0
      %vm774 = vcmp.ge.f32.partialorder %v742, 0.0
      %vm775 = vcmp.ge.f32.partialorder %v743, 0.0
      %vm776 = vcmp.ge.f32.partialorder %v744, 0.0
      %vm777 = vcmp.ge.f32.partialorder %v745, 0.0
      %vm778 = vcmp.ge.f32.partialorder %v746, 0.0
      %vm779 = vcmp.ge.f32.partialorder %v747, 0.0
      %vm780 = vcmp.ge.f32.partialorder %v748, 0.0
      %vm781 = vcmp.ge.f32.partialorder %v749, 0.0
      %vm782 = vcmp.ge.f32.partialorder %v750, 0.0
      %vm783 = vcmp.ge.f32.partialorder %v751, 0.0
      %v784 = vmul.f32 %v720, 0.01
      %v785 = vmul.f32 %v721, 0.01
      %v786 = vmul.f32 %v722, 0.01
      %v787 = vmul.f32 %v723, 0.01
      %v788 = vmul.f32 %v724, 0.01
      %v789 = vmul.f32 %v725, 0.01
      %v790 = vmul.f32 %v726, 0.01
      %v791 = vmul.f32 %v727, 0.01
      %v792 = vmul.f32 %v728, 0.01
      %v793 = vmul.f32 %v729, 0.01
      %v794 = vmul.f32 %v730, 0.01
      %v795 = vmul.f32 %v731, 0.01
      %v796 = vmul.f32 %v732, 0.01
      %v797 = vmul.f32 %v733, 0.01
      %v798 = vmul.f32 %v734, 0.01
      %v799 = vmul.f32 %v735, 0.01
      %v800 = vmul.f32 %v736, 0.01
      %v801 = vmul.f32 %v737, 0.01
      %v802 = vmul.f32 %v738, 0.01
      %v803 = vmul.f32 %v739, 0.01
      %v804 = vmul.f32 %v740, 0.01
      %v805 = vmul.f32 %v741, 0.01
      %v806 = vmul.f32 %v742, 0.01
      %v807 = vmul.f32 %v743, 0.01
      %v808 = vmul.f32 %v744, 0.01
      %v809 = vmul.f32 %v745, 0.01
      %v810 = vmul.f32 %v746, 0.01
      %v811 = vmul.f32 %v747, 0.01
      %v812 = vmul.f32 %v748, 0.01
      %v813 = vmul.f32 %v749, 0.01
      %v814 = vmul.f32 %v750, 0.01
      %v815 = vmul.f32 %v751, 0.01
      %v816 = vsel %vm752, %v720, %v784
      %v817 = vsel %vm753, %v721, %v785
      %v818 = vsel %vm754, %v722, %v786
      %v819 = vsel %vm755, %v723, %v787
      %v820 = vsel %vm756, %v724, %v788
      %v821 = vsel %vm757, %v725, %v789
      %v822 = vsel %vm758, %v726, %v790
      %v823 = vsel %vm759, %v727, %v791
      %v824 = vsel %vm760, %v728, %v792
      %v825 = vsel %vm761, %v729, %v793
      %v826 = vsel %vm762, %v730, %v794
      %v827 = vsel %vm763, %v731, %v795
      %v828 = vsel %vm764, %v732, %v796
      %v829 = vsel %vm765, %v733, %v797
      %v830 = vsel %vm766, %v734, %v798
      %v831 = vsel %vm767, %v735, %v799
      %v832 = vsel %vm768, %v736, %v800
      %v833 = vsel %vm769, %v737, %v801
      %v834 = vsel %vm770, %v738, %v802
      %v835 = vsel %vm771, %v739, %v803
      %v836 = vsel %vm772, %v740, %v804
      %v837 = vsel %vm773, %v741, %v805
      %v838 = vsel %vm774, %v742, %v806
      %v839 = vsel %vm775, %v743, %v807
      %v840 = vsel %vm776, %v744, %v808
      %v841 = vsel %vm777, %v745, %v809
      %v842 = vsel %vm778, %v746, %v810
      %v843 = vsel %vm779, %v747, %v811
      %v844 = vsel %vm780, %v748, %v812
      %v845 = vsel %vm781, %v749, %v813
      %v846 = vsel %vm782, %v750, %v814
      %v847 = vsel %vm783, %v751, %v815
      %v848 = vrot.slane %v816, 7
      %v849 = vrot.slane %v818, 7
      %v850 = vrot.slane %v820, 7
      %v851 = vrot.slane %v822, 7
      %v852 = vrot.slane %v824, 7
      %v853 = vrot.slane %v826, 7
      %v854 = vrot.slane %v828, 7
      %v855 = vrot.slane %v830, 7
      %v856 = vrot.slane %v832, 7
      %v857 = vrot.slane %v834, 7
      %v858 = vrot.slane %v836, 7
      %v859 = vrot.slane %v838, 7
      %v860 = vrot.slane %v840, 7
      %v861 = vrot.slane %v842, 7
      %v862 = vrot.slane %v844, 7
      %v863 = vrot.slane %v817, 7
      %v864 = vrot.slane %v819, 7
      %v865 = vrot.slane %v821, 7
      %v866 = vrot.slane %v823, 7
      %v867 = vrot.slane %v825, 7
      %v868 = vrot.slane %v827, 7
      %v869 = vrot.slane %v829, 7
      %v870 = vrot.slane %v831, 7
      %v871 = vrot.slane %v833, 7
      %v872 = vrot.slane %v835, 7
      %v873 = vrot.slane %v837, 7
      %v874 = vrot.slane %v839, 7
      %v875 = vrot.slane %v841, 7
      %v876 = vrot.slane %v843, 7
      %v877 = vrot.slane %v845, 7
      %v878 = vlaneseq
      %v879 = vshrl.u32 %v878, 7
      %vm880 = vcmp.lt.s32.totalorder %v879, 1
      %v881 = vsel %vm880, %v848, %v863
      %v882 = vsel %vm880, %v849, %v864
      %v883 = vsel %vm880, %v850, %v865
      %v884 = vsel %vm880, %v851, %v866
      %v885 = vsel %vm880, %v852, %v867
      %v886 = vsel %vm880, %v853, %v868
      %v887 = vsel %vm880, %v854, %v869
      %v888 = vsel %vm880, %v855, %v870
      %v889 = vsel %vm880, %v856, %v871
      %v890 = vsel %vm880, %v857, %v872
      %v891 = vsel %vm880, %v858, %v873
      %v892 = vsel %vm880, %v859, %v874
      %v893 = vsel %vm880, %v860, %v875
      %v894 = vsel %vm880, %v861, %v876
      %v895 = vsel %vm880, %v862, %v877
      %v896 = vsel %vm880, %v863, %v848
      %v897 = vsel %vm880, %v864, %v849
      %v898 = vsel %vm880, %v865, %v850
      %v899 = vsel %vm880, %v866, %v851
      %v900 = vsel %vm880, %v867, %v852
      %v901 = vsel %vm880, %v868, %v853
      %v902 = vsel %vm880, %v869, %v854
      %v903 = vsel %vm880, %v870, %v855
      %v904 = vsel %vm880, %v871, %v856
      %v905 = vsel %vm880, %v872, %v857
      %v906 = vsel %vm880, %v873, %v858
      %v907 = vsel %vm880, %v874, %v859
      %v908 = vsel %vm880, %v875, %v860
      %v909 = vsel %vm880, %v876, %v861
      %v910 = vsel %vm880, %v877, %v862
      %v911 = vadd.s32 %v879, 8
      %vm912 = vcmp.ge.s32.totalorder %v879, 1
      %vm913 = vcmp.ge.s32.totalorder %v911, 1
      %v914 = vsel %vm912, 0.0, 0.0
      %v915 = vsel %vm913, 0.0, 0.0
      %v916 = vsel %vm912, %v896, 0.0
      %v917 = vsel %vm913, %v881, 0.0
      %v918 = vsel %vm912, %v897, 0.0
      %v919 = vsel %vm913, %v882, 0.0
      %v920 = vsel %vm912, %v898, 0.0
      %v921 = vsel %vm913, %v883, 0.0
      %v922 = vsel %vm912, %v899, 0.0
      %v923 = vsel %vm913, %v884, 0.0
      %v924 = vsel %vm912, %v900, 0.0
      %v925 = vsel %vm913, %v885, 0.0
      %v926 = vsel %vm912, %v901, 0.0
      %v927 = vsel %vm913, %v886, 0.0
      %v928 = vsel %vm912, %v902, 0.0
      %v929 = vsel %vm913, %v887, 0.0
      %v930 = vsel %vm912, %v903, 0.0
      %v931 = vsel %vm913, %v888, 0.0
      %v932 = vsel %vm912, %v904, 0.0
      %v933 = vsel %vm913, %v889, 0.0
      %v934 = vsel %vm912, %v905, 0.0
      %v935 = vsel %vm913, %v890, 0.0
      %v936 = vsel %vm912, %v906, 0.0
      %v937 = vsel %vm913, %v891, 0.0
      %v938 = vsel %vm912, %v907, 0.0
      %v939 = vsel %vm913, %v892, 0.0
      %v940 = vsel %vm912, %v908, 0.0
      %v941 = vsel %vm913, %v893, 0.0
      %v942 = vsel %vm912, %v909, 0.0
      %v943 = vsel %vm913, %v894, 0.0
      %v944 = vsel %vm912, %v910, 0.0
      %v945 = vsel %vm913, %v895, 0.0
      %v946 = vrot.slane %v816, 1
      %v947 = vrot.slane %v818, 1
      %v948 = vrot.slane %v820, 1
      %v949 = vrot.slane %v822, 1
      %v950 = vrot.slane %v824, 1
      %v951 = vrot.slane %v826, 1
      %v952 = vrot.slane %v828, 1
      %v953 = vrot.slane %v830, 1
      %v954 = vrot.slane %v832, 1
      %v955 = vrot.slane %v834, 1
      %v956 = vrot.slane %v836, 1
      %v957 = vrot.slane %v838, 1
      %v958 = vrot.slane %v840, 1
      %v959 = vrot.slane %v842, 1
      %v960 = vrot.slane %v844, 1
      %v961 = vrot.slane %v817, 1
      %v962 = vrot.slane %v819, 1
      %v963 = vrot.slane %v821, 1
      %v964 = vrot.slane %v823, 1
      %v965 = vrot.slane %v825, 1
      %v966 = vrot.slane %v827, 1
      %v967 = vrot.slane %v829, 1
      %v968 = vrot.slane %v831, 1
      %v969 = vrot.slane %v833, 1
      %v970 = vrot.slane %v835, 1
      %v971 = vrot.slane %v837, 1
      %v972 = vrot.slane %v839, 1
      %v973 = vrot.slane %v841, 1
      %v974 = vrot.slane %v843, 1
      %v975 = vrot.slane %v845, 1
      %vm976 = vcmp.lt.s32.totalorder %v879, 7
      %v977 = vsel %vm976, %v946, %v961
      %v978 = vsel %vm976, %v947, %v962
      %v979 = vsel %vm976, %v948, %v963
      %v980 = vsel %vm976, %v949, %v964
      %v981 = vsel %vm976, %v950, %v965
      %v982 = vsel %vm976, %v951, %v966
      %v983 = vsel %vm976, %v952, %v967
      %v984 = vsel %vm976, %v953, %v968
      %v985 = vsel %vm976, %v954, %v969
      %v986 = vsel %vm976, %v955, %v970
      %v987 = vsel %vm976, %v956, %v971
      %v988 = vsel %vm976, %v957, %v972
      %v989 = vsel %vm976, %v958, %v973
      %v990 = vsel %vm976, %v959, %v974
      %v991 = vsel %vm976, %v960, %v975
      %v992 = vsel %vm976, %v961, %v946
      %v993 = vsel %vm976, %v962, %v947
      %v994 = vsel %vm976, %v963, %v948
      %v995 = vsel %vm976, %v964, %v949
      %v996 = vsel %vm976, %v965, %v950
      %v997 = vsel %vm976, %v966, %v951
      %v998 = vsel %vm976, %v967, %v952
      %v999 = vsel %vm976, %v968, %v953
      %v1000 = vsel %vm976, %v969, %v954
      %v1001 = vsel %vm976, %v970, %v955
      %v1002 = vsel %vm976, %v971, %v956
      %v1003 = vsel %vm976, %v972, %v957
      %v1004 = vsel %vm976, %v973, %v958
      %v1005 = vsel %vm976, %v974, %v959
      %v1006 = vsel %vm976, %v975, %v960
      %vm1007 = vcmp.lt.s32.totalorder %v879, 15
      %vm1008 = vcmp.lt.s32.totalorder %v911, 15
      %v1009 = vsel %vm1007, 0.0, 0.0
      %v1010 = vsel %vm1008, 0.0, 0.0
      %v1011 = vsel %vm1007, %v977, 0.0
      %v1012 = vsel %vm1008, %v992, 0.0
      %v1013 = vsel %vm1007, %v978, 0.0
      %v1014 = vsel %vm1008, %v993, 0.0
      %v1015 = vsel %vm1007, %v979, 0.0
      %v1016 = vsel %vm1008, %v994, 0.0
      %v1017 = vsel %vm1007, %v980, 0.0
      %v1018 = vsel %vm1008, %v995, 0.0
      %v1019 = vsel %vm1007, %v981, 0.0
      %v1020 = vsel %vm1008, %v996, 0.0
      %v1021 = vsel %vm1007, %v982, 0.0
      %v1022 = vsel %vm1008, %v997, 0.0
      %v1023 = vsel %vm1007, %v983, 0.0
      %v1024 = vsel %vm1008, %v998, 0.0
      %v1025 = vsel %vm1007, %v984, 0.0
      %v1026 = vsel %vm1008, %v999, 0.0
      %v1027 = vsel %vm1007, %v985, 0.0
      %v1028 = vsel %vm1008, %v1000, 0.0
      %v1029 = vsel %vm1007, %v986, 0.0
      %v1030 = vsel %vm1008, %v1001, 0.0
      %v1031 = vsel %vm1007, %v987, 0.0
      %v1032 = vsel %vm1008, %v1002, 0.0
      %v1033 = vsel %vm1007, %v988, 0.0
      %v1034 = vsel %vm1008, %v1003, 0.0
      %v1035 = vsel %vm1007, %v989, 0.0
      %v1036 = vsel %vm1008, %v1004, 0.0
      %v1037 = vsel %vm1007, %v990, 0.0
      %v1038 = vsel %vm1008, %v1005, 0.0
      %v1039 = vsel %vm1007, %v991, 0.0
      %v1040 = vsel %vm1008, %v1006, 0.0
      %v1041 = vrot.slane %v846, 7
      %v1042 = vrot.slane %v847, 7
      %v1043 = vsel %vm880, %v1041, %v1042
      %v1044 = vsel %vm880, %v1042, %v1041
      %v1045 = vsel %vm912, %v1044, 0.0
      %v1046 = vsel %vm913, %v1043, 0.0
      %v1047 = vrot.slane %v846, 1
      %v1048 = vrot.slane %v847, 1
      %v1049 = vsel %vm976, %v1047, %v1048
      %v1050 = vsel %vm976, %v1048, %v1047
      %v1051 = vsel %vm1007, %v1049, 0.0
      %v1052 = vsel %vm1008, %v1050, 0.0
      %1084 = vrot.lane.b32.xlu0 0.0, 8
      %v1085 = vpop.permute.xlu0 %1084
      %1086 = vrot.lane.b32.xlu0 %v816, 8
      %v1087 = vpop.permute.xlu0 %1086
      %1088 = vrot.lane.b32.xlu0 %v817, 8
      %v1089 = vpop.permute.xlu0 %1088
      %1090 = vrot.lane.b32.xlu0 %v818, 8
      %v1091 = vpop.permute.xlu0 %1090
      %1092 = vrot.lane.b32.xlu0 %v819, 8
      %v1093 = vpop.permute.xlu0 %1092
      %1094 = vrot.lane.b32.xlu0 %v820, 8
      %v1095 = vpop.permute.xlu0 %1094
      %1096 = vrot.lane.b32.xlu0 %v821, 8
      %v1097 = vpop.permute.xlu0 %1096
      %1098 = vrot.lane.b32.xlu0 %v822, 8
      %v1099 = vpop.permute.xlu0 %1098
      %1100 = vrot.lane.b32.xlu0 %v823, 8
      %v1101 = vpop.permute.xlu0 %1100
      %1102 = vrot.lane.b32.xlu0 %v824, 8
      %v1103 = vpop.permute.xlu0 %1102
      %1104 = vrot.lane.b32.xlu0 %v825, 8
      %v1105 = vpop.permute.xlu0 %1104
      %1106 = vrot.lane.b32.xlu0 %v826, 8
      %v1107 = vpop.permute.xlu0 %1106
      %1108 = vrot.lane.b32.xlu0 %v827, 8
      %v1109 = vpop.permute.xlu0 %1108
      %1110 = vrot.lane.b32.xlu0 %v828, 8
      %v1111 = vpop.permute.xlu0 %1110
      %1112 = vrot.lane.b32.xlu0 %v829, 8
      %v1113 = vpop.permute.xlu0 %1112
      %1114 = vrot.lane.b32.xlu0 %v830, 8
      %v1115 = vpop.permute.xlu0 %1114
      %1116 = vrot.lane.b32.xlu0 %v831, 8
      %v1117 = vpop.permute.xlu0 %1116
      %1118 = vrot.lane.b32.xlu0 %v832, 8
      %v1119 = vpop.permute.xlu0 %1118
      %1120 = vrot.lane.b32.xlu0 %v833, 8
      %v1121 = vpop.permute.xlu0 %1120
      %1122 = vrot.lane.b32.xlu0 %v834, 8
      %v1123 = vpop.permute.xlu0 %1122
      %1124 = vrot.lane.b32.xlu0 %v835, 8
      %v1125 = vpop.permute.xlu0 %1124
      %1126 = vrot.lane.b32.xlu0 %v836, 8
      %v1127 = vpop.permute.xlu0 %1126
      %1128 = vrot.lane.b32.xlu0 %v837, 8
      %v1129 = vpop.permute.xlu0 %1128
      %1130 = vrot.lane.b32.xlu0 %v838, 8
      %v1131 = vpop.permute.xlu0 %1130
      %1132 = vrot.lane.b32.xlu0 %v839, 8
      %v1133 = vpop.permute.xlu0 %1132
      %1134 = vrot.lane.b32.xlu0 %v840, 8
      %v1135 = vpop.permute.xlu0 %1134
      %1136 = vrot.lane.b32.xlu0 %v841, 8
      %v1137 = vpop.permute.xlu0 %1136
      %1138 = vrot.lane.b32.xlu0 %v842, 8
      %v1139 = vpop.permute.xlu0 %1138
      %1140 = vrot.lane.b32.xlu0 %v843, 8
      %v1141 = vpop.permute.xlu0 %1140
      %1142 = vrot.lane.b32.xlu0 %v844, 8
      %v1143 = vpop.permute.xlu0 %1142
      %1144 = vrot.lane.b32.xlu0 %v845, 8
      %v1145 = vpop.permute.xlu0 %1144
      %1209 = vrot.lane.b32.xlu0 %v1009, 16
      %v1210 = vpop.permute.xlu0 %1209
      %1211 = vrot.lane.b32.xlu0 %v1010, 16
      %v1212 = vpop.permute.xlu0 %1211
      %1213 = vrot.lane.b32.xlu0 %v1011, 16
      %v1214 = vpop.permute.xlu0 %1213
      %1215 = vrot.lane.b32.xlu0 %v1012, 16
      %v1216 = vpop.permute.xlu0 %1215
      %1217 = vrot.lane.b32.xlu0 %v1013, 16
      %v1218 = vpop.permute.xlu0 %1217
      %1219 = vrot.lane.b32.xlu0 %v1014, 16
      %v1220 = vpop.permute.xlu0 %1219
      %1221 = vrot.lane.b32.xlu0 %v1015, 16
      %v1222 = vpop.permute.xlu0 %1221
      %1223 = vrot.lane.b32.xlu0 %v1016, 16
      %v1224 = vpop.permute.xlu0 %1223
      %1225 = vrot.lane.b32.xlu0 %v1017, 16
      %v1226 = vpop.permute.xlu0 %1225
      %1227 = vrot.lane.b32.xlu0 %v1018, 16
      %v1228 = vpop.permute.xlu0 %1227
      %1229 = vrot.lane.b32.xlu0 %v1019, 16
      %v1230 = vpop.permute.xlu0 %1229
      %1231 = vrot.lane.b32.xlu0 %v1020, 16
      %v1232 = vpop.permute.xlu0 %1231
      %1233 = vrot.lane.b32.xlu0 %v1021, 16
      %v1234 = vpop.permute.xlu0 %1233
      %1235 = vrot.lane.b32.xlu0 %v1022, 16
      %v1236 = vpop.permute.xlu0 %1235
      %1237 = vrot.lane.b32.xlu0 %v1023, 16
      %v1238 = vpop.permute.xlu0 %1237
      %1239 = vrot.lane.b32.xlu0 %v1024, 16
      %v1240 = vpop.permute.xlu0 %1239
      %1241 = vrot.lane.b32.xlu0 %v1025, 16
      %v1242 = vpop.permute.xlu0 %1241
      %1243 = vrot.lane.b32.xlu0 %v1026, 16
      %v1244 = vpop.permute.xlu0 %1243
      %1245 = vrot.lane.b32.xlu0 %v1027, 16
      %v1246 = vpop.permute.xlu0 %1245
      %1247 = vrot.lane.b32.xlu0 %v1028, 16
      %v1248 = vpop.permute.xlu0 %1247
      %1249 = vrot.lane.b32.xlu0 %v1029, 16
      %v1250 = vpop.permute.xlu0 %1249
      %1251 = vrot.lane.b32.xlu0 %v1030, 16
      %v1252 = vpop.permute.xlu0 %1251
      %1253 = vrot.lane.b32.xlu0 %v1031, 16
      %v1254 = vpop.permute.xlu0 %1253
      %1255 = vrot.lane.b32.xlu0 %v1032, 16
      %v1256 = vpop.permute.xlu0 %1255
      %1257 = vrot.lane.b32.xlu0 %v1033, 16
      %v1258 = vpop.permute.xlu0 %1257
      %1259 = vrot.lane.b32.xlu0 %v1034, 16
      %v1260 = vpop.permute.xlu0 %1259
      %1261 = vrot.lane.b32.xlu0 %v1035, 16
      %v1262 = vpop.permute.xlu0 %1261
      %1263 = vrot.lane.b32.xlu0 %v1036, 16
      %v1264 = vpop.permute.xlu0 %1263
      %1265 = vrot.lane.b32.xlu0 %v1037, 16
      %v1266 = vpop.permute.xlu0 %1265
      %1267 = vrot.lane.b32.xlu0 %v1038, 16
      %v1268 = vpop.permute.xlu0 %1267
      %1269 = vrot.lane.b32.xlu0 %v1039, 16
      %v1270 = vpop.permute.xlu0 %1269
      %1271 = vrot.lane.b32.xlu0 %v1040, 16
      %v1272 = vpop.permute.xlu0 %1271
      %1337 = vrot.lane.b32.xlu0 %v916, 24
      %v1338 = vpop.permute.xlu0 %1337
      %1339 = vrot.lane.b32.xlu0 %v917, 24
      %v1340 = vpop.permute.xlu0 %1339
      %1341 = vrot.lane.b32.xlu0 %v918, 24
      %v1342 = vpop.permute.xlu0 %1341
      %1343 = vrot.lane.b32.xlu0 %v919, 24
      %v1344 = vpop.permute.xlu0 %1343
      %1345 = vrot.lane.b32.xlu0 %v920, 24
      %v1346 = vpop.permute.xlu0 %1345
      %1347 = vrot.lane.b32.xlu0 %v921, 24
      %v1348 = vpop.permute.xlu0 %1347
      %1349 = vrot.lane.b32.xlu0 %v922, 24
      %v1350 = vpop.permute.xlu0 %1349
      %1351 = vrot.lane.b32.xlu0 %v923, 24
      %v1352 = vpop.permute.xlu0 %1351
      %1353 = vrot.lane.b32.xlu0 %v924, 24
      %v1354 = vpop.permute.xlu0 %1353
      %1355 = vrot.lane.b32.xlu0 %v925, 24
      %v1356 = vpop.permute.xlu0 %1355
      %1357 = vrot.lane.b32.xlu0 %v926, 24
      %v1358 = vpop.permute.xlu0 %1357
      %1359 = vrot.lane.b32.xlu0 %v927, 24
      %v1360 = vpop.permute.xlu0 %1359
      %1361 = vrot.lane.b32.xlu0 %v928, 24
      %v1362 = vpop.permute.xlu0 %1361
      %1363 = vrot.lane.b32.xlu0 %v929, 24
      %v1364 = vpop.permute.xlu0 %1363
      %1365 = vrot.lane.b32.xlu0 %v930, 24
      %v1366 = vpop.permute.xlu0 %1365
      %1367 = vrot.lane.b32.xlu0 %v931, 24
      %v1368 = vpop.permute.xlu0 %1367
      %1369 = vrot.lane.b32.xlu0 %v932, 24
      %v1370 = vpop.permute.xlu0 %1369
      %1371 = vrot.lane.b32.xlu0 %v933, 24
      %v1372 = vpop.permute.xlu0 %1371
      %1373 = vrot.lane.b32.xlu0 %v934, 24
      %v1374 = vpop.permute.xlu0 %1373
      %1375 = vrot.lane.b32.xlu0 %v935, 24
      %v1376 = vpop.permute.xlu0 %1375
      %1377 = vrot.lane.b32.xlu0 %v936, 24
      %v1378 = vpop.permute.xlu0 %1377
      %1379 = vrot.lane.b32.xlu0 %v937, 24
      %v1380 = vpop.permute.xlu0 %1379
      %1381 = vrot.lane.b32.xlu0 %v938, 24
      %v1382 = vpop.permute.xlu0 %1381
      %1383 = vrot.lane.b32.xlu0 %v939, 24
      %v1384 = vpop.permute.xlu0 %1383
      %1385 = vrot.lane.b32.xlu0 %v940, 24
      %v1386 = vpop.permute.xlu0 %1385
      %1387 = vrot.lane.b32.xlu0 %v941, 24
      %v1388 = vpop.permute.xlu0 %1387
      %1389 = vrot.lane.b32.xlu0 %v942, 24
      %v1390 = vpop.permute.xlu0 %1389
      %1391 = vrot.lane.b32.xlu0 %v943, 24
      %v1392 = vpop.permute.xlu0 %1391
      %1393 = vrot.lane.b32.xlu0 %v944, 24
      %v1394 = vpop.permute.xlu0 %1393
      %1395 = vrot.lane.b32.xlu0 %v945, 24
      %v1396 = vpop.permute.xlu0 %1395
      %1397 = vrot.lane.b32.xlu0 %v1045, 24
      %v1398 = vpop.permute.xlu0 %1397
      %1399 = vrot.lane.b32.xlu0 %v1046, 24
      %v1400 = vpop.permute.xlu0 %1399
      %1435 = vrot.lane.b32.xlu0 %v816, 32
      %v1436 = vpop.permute.xlu0 %1435
      %1437 = vrot.lane.b32.xlu0 %v817, 32
      %v1438 = vpop.permute.xlu0 %1437
      %1439 = vrot.lane.b32.xlu0 %v818, 32
      %v1440 = vpop.permute.xlu0 %1439
      %1441 = vrot.lane.b32.xlu0 %v819, 32
      %v1442 = vpop.permute.xlu0 %1441
      %1443 = vrot.lane.b32.xlu0 %v820, 32
      %v1444 = vpop.permute.xlu0 %1443
      %1445 = vrot.lane.b32.xlu0 %v821, 32
      %v1446 = vpop.permute.xlu0 %1445
      %1447 = vrot.lane.b32.xlu0 %v822, 32
      %v1448 = vpop.permute.xlu0 %1447
      %1449 = vrot.lane.b32.xlu0 %v823, 32
      %v1450 = vpop.permute.xlu0 %1449
      %1451 = vrot.lane.b32.xlu0 %v824, 32
      %v1452 = vpop.permute.xlu0 %1451
      %1453 = vrot.lane.b32.xlu0 %v825, 32
      %v1454 = vpop.permute.xlu0 %1453
      %1455 = vrot.lane.b32.xlu0 %v826, 32
      %v1456 = vpop.permute.xlu0 %1455
      %1457 = vrot.lane.b32.xlu0 %v827, 32
      %v1458 = vpop.permute.xlu0 %1457
      %1459 = vrot.lane.b32.xlu0 %v828, 32
      %v1460 = vpop.permute.xlu0 %1459
      %1461 = vrot.lane.b32.xlu0 %v829, 32
      %v1462 = vpop.permute.xlu0 %1461
      %1463 = vrot.lane.b32.xlu0 %v830, 32
      %v1464 = vpop.permute.xlu0 %1463
      %1465 = vrot.lane.b32.xlu0 %v831, 32
      %v1466 = vpop.permute.xlu0 %1465
      %1467 = vrot.lane.b32.xlu0 %v832, 32
      %v1468 = vpop.permute.xlu0 %1467
      %1469 = vrot.lane.b32.xlu0 %v833, 32
      %v1470 = vpop.permute.xlu0 %1469
      %1471 = vrot.lane.b32.xlu0 %v834, 32
      %v1472 = vpop.permute.xlu0 %1471
      %1473 = vrot.lane.b32.xlu0 %v835, 32
      %v1474 = vpop.permute.xlu0 %1473
      %1475 = vrot.lane.b32.xlu0 %v836, 32
      %v1476 = vpop.permute.xlu0 %1475
      %1477 = vrot.lane.b32.xlu0 %v837, 32
      %v1478 = vpop.permute.xlu0 %1477
      %1479 = vrot.lane.b32.xlu0 %v838, 32
      %v1480 = vpop.permute.xlu0 %1479
      %1481 = vrot.lane.b32.xlu0 %v839, 32
      %v1482 = vpop.permute.xlu0 %1481
      %1483 = vrot.lane.b32.xlu0 %v840, 32
      %v1484 = vpop.permute.xlu0 %1483
      %1485 = vrot.lane.b32.xlu0 %v841, 32
      %v1486 = vpop.permute.xlu0 %1485
      %1487 = vrot.lane.b32.xlu0 %v842, 32
      %v1488 = vpop.permute.xlu0 %1487
      %1489 = vrot.lane.b32.xlu0 %v843, 32
      %v1490 = vpop.permute.xlu0 %1489
      %1491 = vrot.lane.b32.xlu0 %v844, 32
      %v1492 = vpop.permute.xlu0 %1491
      %1493 = vrot.lane.b32.xlu0 %v845, 32
      %v1494 = vpop.permute.xlu0 %1493
      %1495 = vrot.lane.b32.xlu0 %v846, 32
      %v1496 = vpop.permute.xlu0 %1495
      %1497 = vrot.lane.b32.xlu0 %v847, 32
      %v1498 = vpop.permute.xlu0 %1497
      %1533 = vrot.lane.b32.xlu0 %v1011, 40
      %v1534 = vpop.permute.xlu0 %1533
      %1535 = vrot.lane.b32.xlu0 %v1012, 40
      %v1536 = vpop.permute.xlu0 %1535
      %1537 = vrot.lane.b32.xlu0 %v1013, 40
      %v1538 = vpop.permute.xlu0 %1537
      %1539 = vrot.lane.b32.xlu0 %v1014, 40
      %v1540 = vpop.permute.xlu0 %1539
      %1541 = vrot.lane.b32.xlu0 %v1015, 40
      %v1542 = vpop.permute.xlu0 %1541
      %1543 = vrot.lane.b32.xlu0 %v1016, 40
      %v1544 = vpop.permute.xlu0 %1543
      %1545 = vrot.lane.b32.xlu0 %v1017, 40
      %v1546 = vpop.permute.xlu0 %1545
      %1547 = vrot.lane.b32.xlu0 %v1018, 40
      %v1548 = vpop.permute.xlu0 %1547
      %1549 = vrot.lane.b32.xlu0 %v1019, 40
      %v1550 = vpop.permute.xlu0 %1549
      %1551 = vrot.lane.b32.xlu0 %v1020, 40
      %v1552 = vpop.permute.xlu0 %1551
      %1553 = vrot.lane.b32.xlu0 %v1021, 40
      %v1554 = vpop.permute.xlu0 %1553
      %1555 = vrot.lane.b32.xlu0 %v1022, 40
      %v1556 = vpop.permute.xlu0 %1555
      %1557 = vrot.lane.b32.xlu0 %v1023, 40
      %v1558 = vpop.permute.xlu0 %1557
      %1559 = vrot.lane.b32.xlu0 %v1024, 40
      %v1560 = vpop.permute.xlu0 %1559
      %1561 = vrot.lane.b32.xlu0 %v1025, 40
      %v1562 = vpop.permute.xlu0 %1561
      %1563 = vrot.lane.b32.xlu0 %v1026, 40
      %v1564 = vpop.permute.xlu0 %1563
      %1565 = vrot.lane.b32.xlu0 %v1027, 40
      %v1566 = vpop.permute.xlu0 %1565
      %1567 = vrot.lane.b32.xlu0 %v1028, 40
      %v1568 = vpop.permute.xlu0 %1567
      %1569 = vrot.lane.b32.xlu0 %v1029, 40
      %v1570 = vpop.permute.xlu0 %1569
      %1571 = vrot.lane.b32.xlu0 %v1030, 40
      %v1572 = vpop.permute.xlu0 %1571
      %1573 = vrot.lane.b32.xlu0 %v1031, 40
      %v1574 = vpop.permute.xlu0 %1573
      %1575 = vrot.lane.b32.xlu0 %v1032, 40
      %v1576 = vpop.permute.xlu0 %1575
      %1577 = vrot.lane.b32.xlu0 %v1033, 40
      %v1578 = vpop.permute.xlu0 %1577
      %1579 = vrot.lane.b32.xlu0 %v1034, 40
      %v1580 = vpop.permute.xlu0 %1579
      %1581 = vrot.lane.b32.xlu0 %v1035, 40
      %v1582 = vpop.permute.xlu0 %1581
      %1583 = vrot.lane.b32.xlu0 %v1036, 40
      %v1584 = vpop.permute.xlu0 %1583
      %1585 = vrot.lane.b32.xlu0 %v1037, 40
      %v1586 = vpop.permute.xlu0 %1585
      %1587 = vrot.lane.b32.xlu0 %v1038, 40
      %v1588 = vpop.permute.xlu0 %1587
      %1589 = vrot.lane.b32.xlu0 %v1039, 40
      %v1590 = vpop.permute.xlu0 %1589
      %1591 = vrot.lane.b32.xlu0 %v1040, 40
      %v1592 = vpop.permute.xlu0 %1591
      %1593 = vrot.lane.b32.xlu0 %v1051, 40
      %v1594 = vpop.permute.xlu0 %1593
      %1595 = vrot.lane.b32.xlu0 %v1052, 40
      %v1596 = vpop.permute.xlu0 %1595
      %1631 = vrot.lane.b32.xlu0 %v918, 48
      %v1632 = vpop.permute.xlu0 %1631
      %1633 = vrot.lane.b32.xlu0 %v919, 48
      %v1634 = vpop.permute.xlu0 %1633
      %1635 = vrot.lane.b32.xlu0 %v920, 48
      %v1636 = vpop.permute.xlu0 %1635
      %1637 = vrot.lane.b32.xlu0 %v921, 48
      %v1638 = vpop.permute.xlu0 %1637
      %1639 = vrot.lane.b32.xlu0 %v922, 48
      %v1640 = vpop.permute.xlu0 %1639
      %1641 = vrot.lane.b32.xlu0 %v923, 48
      %v1642 = vpop.permute.xlu0 %1641
      %1643 = vrot.lane.b32.xlu0 %v924, 48
      %v1644 = vpop.permute.xlu0 %1643
      %1645 = vrot.lane.b32.xlu0 %v925, 48
      %v1646 = vpop.permute.xlu0 %1645
      %1647 = vrot.lane.b32.xlu0 %v926, 48
      %v1648 = vpop.permute.xlu0 %1647
      %1649 = vrot.lane.b32.xlu0 %v927, 48
      %v1650 = vpop.permute.xlu0 %1649
      %1651 = vrot.lane.b32.xlu0 %v928, 48
      %v1652 = vpop.permute.xlu0 %1651
      %1653 = vrot.lane.b32.xlu0 %v929, 48
      %v1654 = vpop.permute.xlu0 %1653
      %1655 = vrot.lane.b32.xlu0 %v930, 48
      %v1656 = vpop.permute.xlu0 %1655
      %1657 = vrot.lane.b32.xlu0 %v931, 48
      %v1658 = vpop.permute.xlu0 %1657
      %1659 = vrot.lane.b32.xlu0 %v932, 48
      %v1660 = vpop.permute.xlu0 %1659
      %1661 = vrot.lane.b32.xlu0 %v933, 48
      %v1662 = vpop.permute.xlu0 %1661
      %1663 = vrot.lane.b32.xlu0 %v934, 48
      %v1664 = vpop.permute.xlu0 %1663
      %1665 = vrot.lane.b32.xlu0 %v935, 48
      %v1666 = vpop.permute.xlu0 %1665
      %1667 = vrot.lane.b32.xlu0 %v936, 48
      %v1668 = vpop.permute.xlu0 %1667
      %1669 = vrot.lane.b32.xlu0 %v937, 48
      %v1670 = vpop.permute.xlu0 %1669
      %1671 = vrot.lane.b32.xlu0 %v938, 48
      %v1672 = vpop.permute.xlu0 %1671
      %1673 = vrot.lane.b32.xlu0 %v939, 48
      %v1674 = vpop.permute.xlu0 %1673
      %1675 = vrot.lane.b32.xlu0 %v940, 48
      %v1676 = vpop.permute.xlu0 %1675
      %1677 = vrot.lane.b32.xlu0 %v941, 48
      %v1678 = vpop.permute.xlu0 %1677
      %1679 = vrot.lane.b32.xlu0 %v942, 48
      %v1680 = vpop.permute.xlu0 %1679
      %1681 = vrot.lane.b32.xlu0 %v943, 48
      %v1682 = vpop.permute.xlu0 %1681
      %1683 = vrot.lane.b32.xlu0 %v944, 48
      %v1684 = vpop.permute.xlu0 %1683
      %1685 = vrot.lane.b32.xlu0 %v945, 48
      %v1686 = vpop.permute.xlu0 %1685
      %1687 = vrot.lane.b32.xlu0 %v1045, 48
      %v1688 = vpop.permute.xlu0 %1687
      %1689 = vrot.lane.b32.xlu0 %v1046, 48
      %v1690 = vpop.permute.xlu0 %1689
      %1691 = vrot.lane.b32.xlu0 %v914, 48
      %v1692 = vpop.permute.xlu0 %1691
      %1693 = vrot.lane.b32.xlu0 %v915, 48
      %v1694 = vpop.permute.xlu0 %1693
      %1727 = vrot.lane.b32.xlu0 %v818, 56
      %v1728 = vpop.permute.xlu0 %1727
      %1729 = vrot.lane.b32.xlu0 %v819, 56
      %v1730 = vpop.permute.xlu0 %1729
      %1731 = vrot.lane.b32.xlu0 %v820, 56
      %v1732 = vpop.permute.xlu0 %1731
      %1733 = vrot.lane.b32.xlu0 %v821, 56
      %v1734 = vpop.permute.xlu0 %1733
      %1735 = vrot.lane.b32.xlu0 %v822, 56
      %v1736 = vpop.permute.xlu0 %1735
      %1737 = vrot.lane.b32.xlu0 %v823, 56
      %v1738 = vpop.permute.xlu0 %1737
      %1739 = vrot.lane.b32.xlu0 %v824, 56
      %v1740 = vpop.permute.xlu0 %1739
      %1741 = vrot.lane.b32.xlu0 %v825, 56
      %v1742 = vpop.permute.xlu0 %1741
      %1743 = vrot.lane.b32.xlu0 %v826, 56
      %v1744 = vpop.permute.xlu0 %1743
      %1745 = vrot.lane.b32.xlu0 %v827, 56
      %v1746 = vpop.permute.xlu0 %1745
      %1747 = vrot.lane.b32.xlu0 %v828, 56
      %v1748 = vpop.permute.xlu0 %1747
      %1749 = vrot.lane.b32.xlu0 %v829, 56
      %v1750 = vpop.permute.xlu0 %1749
      %1751 = vrot.lane.b32.xlu0 %v830, 56
      %v1752 = vpop.permute.xlu0 %1751
      %1753 = vrot.lane.b32.xlu0 %v831, 56
      %v1754 = vpop.permute.xlu0 %1753
      %1755 = vrot.lane.b32.xlu0 %v832, 56
      %v1756 = vpop.permute.xlu0 %1755
      %1757 = vrot.lane.b32.xlu0 %v833, 56
      %v1758 = vpop.permute.xlu0 %1757
      %1759 = vrot.lane.b32.xlu0 %v834, 56
      %v1760 = vpop.permute.xlu0 %1759
      %1761 = vrot.lane.b32.xlu0 %v835, 56
      %v1762 = vpop.permute.xlu0 %1761
      %1763 = vrot.lane.b32.xlu0 %v836, 56
      %v1764 = vpop.permute.xlu0 %1763
      %1765 = vrot.lane.b32.xlu0 %v837, 56
      %v1766 = vpop.permute.xlu0 %1765
      %1767 = vrot.lane.b32.xlu0 %v838, 56
      %v1768 = vpop.permute.xlu0 %1767
      %1769 = vrot.lane.b32.xlu0 %v839, 56
      %v1770 = vpop.permute.xlu0 %1769
      %1771 = vrot.lane.b32.xlu0 %v840, 56
      %v1772 = vpop.permute.xlu0 %1771
      %1773 = vrot.lane.b32.xlu0 %v841, 56
      %v1774 = vpop.permute.xlu0 %1773
      %1775 = vrot.lane.b32.xlu0 %v842, 56
      %v1776 = vpop.permute.xlu0 %1775
      %1777 = vrot.lane.b32.xlu0 %v843, 56
      %v1778 = vpop.permute.xlu0 %1777
      %1779 = vrot.lane.b32.xlu0 %v844, 56
      %v1780 = vpop.permute.xlu0 %1779
      %1781 = vrot.lane.b32.xlu0 %v845, 56
      %v1782 = vpop.permute.xlu0 %1781
      %1783 = vrot.lane.b32.xlu0 %v846, 56
      %v1784 = vpop.permute.xlu0 %1783
      %1785 = vrot.lane.b32.xlu0 %v847, 56
      %v1786 = vpop.permute.xlu0 %1785
      %1787 = vrot.lane.b32.xlu0 0.0, 56
      %v1788 = vpop.permute.xlu0 %1787
      %1820 = vrot.lane.b32.xlu0 %v1013, 64
      %v1821 = vpop.permute.xlu0 %1820
      %1822 = vrot.lane.b32.xlu0 %v1014, 64
      %v1823 = vpop.permute.xlu0 %1822
      %1824 = vrot.lane.b32.xlu0 %v1015, 64
      %v1825 = vpop.permute.xlu0 %1824
      %1826 = vrot.lane.b32.xlu0 %v1016, 64
      %v1827 = vpop.permute.xlu0 %1826
      %1828 = vrot.lane.b32.xlu0 %v1017, 64
      %v1829 = vpop.permute.xlu0 %1828
      %1830 = vrot.lane.b32.xlu0 %v1018, 64
      %v1831 = vpop.permute.xlu0 %1830
      %1832 = vrot.lane.b32.xlu0 %v1019, 64
      %v1833 = vpop.permute.xlu0 %1832
      %1834 = vrot.lane.b32.xlu0 %v1020, 64
      %v1835 = vpop.permute.xlu0 %1834
      %1836 = vrot.lane.b32.xlu0 %v1021, 64
      %v1837 = vpop.permute.xlu0 %1836
      %1838 = vrot.lane.b32.xlu0 %v1022, 64
      %v1839 = vpop.permute.xlu0 %1838
      %1840 = vrot.lane.b32.xlu0 %v1023, 64
      %v1841 = vpop.permute.xlu0 %1840
      %1842 = vrot.lane.b32.xlu0 %v1024, 64
      %v1843 = vpop.permute.xlu0 %1842
      %1844 = vrot.lane.b32.xlu0 %v1025, 64
      %v1845 = vpop.permute.xlu0 %1844
      %1846 = vrot.lane.b32.xlu0 %v1026, 64
      %v1847 = vpop.permute.xlu0 %1846
      %1848 = vrot.lane.b32.xlu0 %v1027, 64
      %v1849 = vpop.permute.xlu0 %1848
      %1850 = vrot.lane.b32.xlu0 %v1028, 64
      %v1851 = vpop.permute.xlu0 %1850
      %1852 = vrot.lane.b32.xlu0 %v1029, 64
      %v1853 = vpop.permute.xlu0 %1852
      %1854 = vrot.lane.b32.xlu0 %v1030, 64
      %v1855 = vpop.permute.xlu0 %1854
      %1856 = vrot.lane.b32.xlu0 %v1031, 64
      %v1857 = vpop.permute.xlu0 %1856
      %1858 = vrot.lane.b32.xlu0 %v1032, 64
      %v1859 = vpop.permute.xlu0 %1858
      %1860 = vrot.lane.b32.xlu0 %v1033, 64
      %v1861 = vpop.permute.xlu0 %1860
      %1862 = vrot.lane.b32.xlu0 %v1034, 64
      %v1863 = vpop.permute.xlu0 %1862
      %1864 = vrot.lane.b32.xlu0 %v1035, 64
      %v1865 = vpop.permute.xlu0 %1864
      %1866 = vrot.lane.b32.xlu0 %v1036, 64
      %v1867 = vpop.permute.xlu0 %1866
      %1868 = vrot.lane.b32.xlu0 %v1037, 64
      %v1869 = vpop.permute.xlu0 %1868
      %1870 = vrot.lane.b32.xlu0 %v1038, 64
      %v1871 = vpop.permute.xlu0 %1870
      %1872 = vrot.lane.b32.xlu0 %v1039, 64
      %v1873 = vpop.permute.xlu0 %1872
      %1874 = vrot.lane.b32.xlu0 %v1040, 64
      %v1875 = vpop.permute.xlu0 %1874
      %1876 = vrot.lane.b32.xlu0 %v1051, 64
      %v1877 = vpop.permute.xlu0 %1876
      %1878 = vrot.lane.b32.xlu0 %v1052, 64
      %v1879 = vpop.permute.xlu0 %1878
      %1880 = vrot.lane.b32.xlu0 %v1009, 64
      %v1881 = vpop.permute.xlu0 %1880
      %1882 = vrot.lane.b32.xlu0 %v1010, 64
      %v1883 = vpop.permute.xlu0 %1882
      %vm1916 = vcmask 64512
      %v1917 = vsel %vm1916, %v914, %v1085
      %v1918 = vsel %vm1916, %v915, %v1085
      %v1919 = vsel %vm1916, %v916, %v1087
      %v1920 = vsel %vm1916, %v917, %v1089
      %v1921 = vsel %vm1916, %v918, %v1091
      %v1922 = vsel %vm1916, %v919, %v1093
      %v1923 = vsel %vm1916, %v920, %v1095
      %v1924 = vsel %vm1916, %v921, %v1097
      %v1925 = vsel %vm1916, %v922, %v1099
      %v1926 = vsel %vm1916, %v923, %v1101
      %v1927 = vsel %vm1916, %v924, %v1103
      %v1928 = vsel %vm1916, %v925, %v1105
      %v1929 = vsel %vm1916, %v926, %v1107
      %v1930 = vsel %vm1916, %v927, %v1109
      %v1931 = vsel %vm1916, %v928, %v1111
      %v1932 = vsel %vm1916, %v929, %v1113
      %v1933 = vsel %vm1916, %v930, %v1115
      %v1934 = vsel %vm1916, %v931, %v1117
      %v1935 = vsel %vm1916, %v932, %v1119
      %v1936 = vsel %vm1916, %v933, %v1121
      %v1937 = vsel %vm1916, %v934, %v1123
      %v1938 = vsel %vm1916, %v935, %v1125
      %v1939 = vsel %vm1916, %v936, %v1127
      %v1940 = vsel %vm1916, %v937, %v1129
      %v1941 = vsel %vm1916, %v938, %v1131
      %v1942 = vsel %vm1916, %v939, %v1133
      %v1943 = vsel %vm1916, %v940, %v1135
      %v1944 = vsel %vm1916, %v941, %v1137
      %v1945 = vsel %vm1916, %v942, %v1139
      %v1946 = vsel %vm1916, %v943, %v1141
      %v1947 = vsel %vm1916, %v944, %v1143
      %v1948 = vsel %vm1916, %v945, %v1145
      %vm1949 = vcmask 130048
      %v1950 = vsel %vm1949, %v1917, %v1210
      %v1951 = vsel %vm1949, %v1918, %v1212
      %v1952 = vsel %vm1949, %v1919, %v1214
      %v1953 = vsel %vm1949, %v1920, %v1216
      %v1954 = vsel %vm1949, %v1921, %v1218
      %v1955 = vsel %vm1949, %v1922, %v1220
      %v1956 = vsel %vm1949, %v1923, %v1222
      %v1957 = vsel %vm1949, %v1924, %v1224
      %v1958 = vsel %vm1949, %v1925, %v1226
      %v1959 = vsel %vm1949, %v1926, %v1228
      %v1960 = vsel %vm1949, %v1927, %v1230
      %v1961 = vsel %vm1949, %v1928, %v1232
      %v1962 = vsel %vm1949, %v1929, %v1234
      %v1963 = vsel %vm1949, %v1930, %v1236
      %v1964 = vsel %vm1949, %v1931, %v1238
      %v1965 = vsel %vm1949, %v1932, %v1240
      %v1966 = vsel %vm1949, %v1933, %v1242
      %v1967 = vsel %vm1949, %v1934, %v1244
      %v1968 = vsel %vm1949, %v1935, %v1246
      %v1969 = vsel %vm1949, %v1936, %v1248
      %v1970 = vsel %vm1949, %v1937, %v1250
      %v1971 = vsel %vm1949, %v1938, %v1252
      %v1972 = vsel %vm1949, %v1939, %v1254
      %v1973 = vsel %vm1949, %v1940, %v1256
      %v1974 = vsel %vm1949, %v1941, %v1258
      %v1975 = vsel %vm1949, %v1942, %v1260
      %v1976 = vsel %vm1949, %v1943, %v1262
      %v1977 = vsel %vm1949, %v1944, %v1264
      %v1978 = vsel %vm1949, %v1945, %v1266
      %v1979 = vsel %vm1949, %v1946, %v1268
      %v1980 = vsel %vm1949, %v1947, %v1270
      %v1981 = vsel %vm1949, %v1948, %v1272
      %vm1982 = vcmask 195584
      %v1983 = vsel %vm1982, %v1950, %v1338
      %v1984 = vsel %vm1982, %v1951, %v1340
      %v1985 = vsel %vm1982, %v1952, %v1342
      %v1986 = vsel %vm1982, %v1953, %v1344
      %v1987 = vsel %vm1982, %v1954, %v1346
      %v1988 = vsel %vm1982, %v1955, %v1348
      %v1989 = vsel %vm1982, %v1956, %v1350
      %v1990 = vsel %vm1982, %v1957, %v1352
      %v1991 = vsel %vm1982, %v1958, %v1354
      %v1992 = vsel %vm1982, %v1959, %v1356
      %v1993 = vsel %vm1982, %v1960, %v1358
      %v1994 = vsel %vm1982, %v1961, %v1360
      %v1995 = vsel %vm1982, %v1962, %v1362
      %v1996 = vsel %vm1982, %v1963, %v1364
      %v1997 = vsel %vm1982, %v1964, %v1366
      %v1998 = vsel %vm1982, %v1965, %v1368
      %v1999 = vsel %vm1982, %v1966, %v1370
      %v2000 = vsel %vm1982, %v1967, %v1372
      %v2001 = vsel %vm1982, %v1968, %v1374
      %v2002 = vsel %vm1982, %v1969, %v1376
      %v2003 = vsel %vm1982, %v1970, %v1378
      %v2004 = vsel %vm1982, %v1971, %v1380
      %v2005 = vsel %vm1982, %v1972, %v1382
      %v2006 = vsel %vm1982, %v1973, %v1384
      %v2007 = vsel %vm1982, %v1974, %v1386
      %v2008 = vsel %vm1982, %v1975, %v1388
      %v2009 = vsel %vm1982, %v1976, %v1390
      %v2010 = vsel %vm1982, %v1977, %v1392
      %v2011 = vsel %vm1982, %v1978, %v1394
      %v2012 = vsel %vm1982, %v1979, %v1396
      %v2013 = vsel %vm1982, %v1980, %v1398
      %v2014 = vsel %vm1982, %v1981, %v1400
      %vm2015 = vcmask 261120
      %v2016 = vsel %vm2015, %v1983, %v1436
      %v2017 = vsel %vm2015, %v1984, %v1438
      %v2018 = vsel %vm2015, %v1985, %v1440
      %v2019 = vsel %vm2015, %v1986, %v1442
      %v2020 = vsel %vm2015, %v1987, %v1444
      %v2021 = vsel %vm2015, %v1988, %v1446
      %v2022 = vsel %vm2015, %v1989, %v1448
      %v2023 = vsel %vm2015, %v1990, %v1450
      %v2024 = vsel %vm2015, %v1991, %v1452
      %v2025 = vsel %vm2015, %v1992, %v1454
      %v2026 = vsel %vm2015, %v1993, %v1456
      %v2027 = vsel %vm2015, %v1994, %v1458
      %v2028 = vsel %vm2015, %v1995, %v1460
      %v2029 = vsel %vm2015, %v1996, %v1462
      %v2030 = vsel %vm2015, %v1997, %v1464
      %v2031 = vsel %vm2015, %v1998, %v1466
      %v2032 = vsel %vm2015, %v1999, %v1468
      %v2033 = vsel %vm2015, %v2000, %v1470
      %v2034 = vsel %vm2015, %v2001, %v1472
      %v2035 = vsel %vm2015, %v2002, %v1474
      %v2036 = vsel %vm2015, %v2003, %v1476
      %v2037 = vsel %vm2015, %v2004, %v1478
      %v2038 = vsel %vm2015, %v2005, %v1480
      %v2039 = vsel %vm2015, %v2006, %v1482
      %v2040 = vsel %vm2015, %v2007, %v1484
      %v2041 = vsel %vm2015, %v2008, %v1486
      %v2042 = vsel %vm2015, %v2009, %v1488
      %v2043 = vsel %vm2015, %v2010, %v1490
      %v2044 = vsel %vm2015, %v2011, %v1492
      %v2045 = vsel %vm2015, %v2012, %v1494
      %v2046 = vsel %vm2015, %v2013, %v1496
      %v2047 = vsel %vm2015, %v2014, %v1498
      %vm2048 = vcmask 326656
      %v2049 = vsel %vm2048, %v2016, %v1534
      %v2050 = vsel %vm2048, %v2017, %v1536
      %v2051 = vsel %vm2048, %v2018, %v1538
      %v2052 = vsel %vm2048, %v2019, %v1540
      %v2053 = vsel %vm2048, %v2020, %v1542
      %v2054 = vsel %vm2048, %v2021, %v1544
      %v2055 = vsel %vm2048, %v2022, %v1546
      %v2056 = vsel %vm2048, %v2023, %v1548
      %v2057 = vsel %vm2048, %v2024, %v1550
      %v2058 = vsel %vm2048, %v2025, %v1552
      %v2059 = vsel %vm2048, %v2026, %v1554
      %v2060 = vsel %vm2048, %v2027, %v1556
      %v2061 = vsel %vm2048, %v2028, %v1558
      %v2062 = vsel %vm2048, %v2029, %v1560
      %v2063 = vsel %vm2048, %v2030, %v1562
      %v2064 = vsel %vm2048, %v2031, %v1564
      %v2065 = vsel %vm2048, %v2032, %v1566
      %v2066 = vsel %vm2048, %v2033, %v1568
      %v2067 = vsel %vm2048, %v2034, %v1570
      %v2068 = vsel %vm2048, %v2035, %v1572
      %v2069 = vsel %vm2048, %v2036, %v1574
      %v2070 = vsel %vm2048, %v2037, %v1576
      %v2071 = vsel %vm2048, %v2038, %v1578
      %v2072 = vsel %vm2048, %v2039, %v1580
      %v2073 = vsel %vm2048, %v2040, %v1582
      %v2074 = vsel %vm2048, %v2041, %v1584
      %v2075 = vsel %vm2048, %v2042, %v1586
      %v2076 = vsel %vm2048, %v2043, %v1588
      %v2077 = vsel %vm2048, %v2044, %v1590
      %v2078 = vsel %vm2048, %v2045, %v1592
      %v2079 = vsel %vm2048, %v2046, %v1594
      %v2080 = vsel %vm2048, %v2047, %v1596
      %vm2081 = vcmask 392192
      %v2082 = vsel %vm2081, %v2049, %v1632
      %v2083 = vsel %vm2081, %v2050, %v1634
      %v2084 = vsel %vm2081, %v2051, %v1636
      %v2085 = vsel %vm2081, %v2052, %v1638
      %v2086 = vsel %vm2081, %v2053, %v1640
      %v2087 = vsel %vm2081, %v2054, %v1642
      %v2088 = vsel %vm2081, %v2055, %v1644
      %v2089 = vsel %vm2081, %v2056, %v1646
      %v2090 = vsel %vm2081, %v2057, %v1648
      %v2091 = vsel %vm2081, %v2058, %v1650
      %v2092 = vsel %vm2081, %v2059, %v1652
      %v2093 = vsel %vm2081, %v2060, %v1654
      %v2094 = vsel %vm2081, %v2061, %v1656
      %v2095 = vsel %vm2081, %v2062, %v1658
      %v2096 = vsel %vm2081, %v2063, %v1660
      %v2097 = vsel %vm2081, %v2064, %v1662
      %v2098 = vsel %vm2081, %v2065, %v1664
      %v2099 = vsel %vm2081, %v2066, %v1666
      %v2100 = vsel %vm2081, %v2067, %v1668
      %v2101 = vsel %vm2081, %v2068, %v1670
      %v2102 = vsel %vm2081, %v2069, %v1672
      %v2103 = vsel %vm2081, %v2070, %v1674
      %v2104 = vsel %vm2081, %v2071, %v1676
      %v2105 = vsel %vm2081, %v2072, %v1678
      %v2106 = vsel %vm2081, %v2073, %v1680
      %v2107 = vsel %vm2081, %v2074, %v1682
      %v2108 = vsel %vm2081, %v2075, %v1684
      %v2109 = vsel %vm2081, %v2076, %v1686
      %v2110 = vsel %vm2081, %v2077, %v1688
      %v2111 = vsel %vm2081, %v2078, %v1690
      %v2112 = vsel %vm2081, %v2079, %v1692
      %v2113 = vsel %vm2081, %v2080, %v1694
      %vm2114 = vcmask 457728
      %v2115 = vsel %vm2114, %v2082, %v1728
      %v2116 = vsel %vm2114, %v2083, %v1730
      %v2117 = vsel %vm2114, %v2084, %v1732
      %v2118 = vsel %vm2114, %v2085, %v1734
      %v2119 = vsel %vm2114, %v2086, %v1736
      %v2120 = vsel %vm2114, %v2087, %v1738
      %v2121 = vsel %vm2114, %v2088, %v1740
      %v2122 = vsel %vm2114, %v2089, %v1742
      %v2123 = vsel %vm2114, %v2090, %v1744
      %v2124 = vsel %vm2114, %v2091, %v1746
      %v2125 = vsel %vm2114, %v2092, %v1748
      %v2126 = vsel %vm2114, %v2093, %v1750
      %v2127 = vsel %vm2114, %v2094, %v1752
      %v2128 = vsel %vm2114, %v2095, %v1754
      %v2129 = vsel %vm2114, %v2096, %v1756
      %v2130 = vsel %vm2114, %v2097, %v1758
      %v2131 = vsel %vm2114, %v2098, %v1760
      %v2132 = vsel %vm2114, %v2099, %v1762
      %v2133 = vsel %vm2114, %v2100, %v1764
      %v2134 = vsel %vm2114, %v2101, %v1766
      %v2135 = vsel %vm2114, %v2102, %v1768
      %v2136 = vsel %vm2114, %v2103, %v1770
      %v2137 = vsel %vm2114, %v2104, %v1772
      %v2138 = vsel %vm2114, %v2105, %v1774
      %v2139 = vsel %vm2114, %v2106, %v1776
      %v2140 = vsel %vm2114, %v2107, %v1778
      %v2141 = vsel %vm2114, %v2108, %v1780
      %v2142 = vsel %vm2114, %v2109, %v1782
      %v2143 = vsel %vm2114, %v2110, %v1784
      %v2144 = vsel %vm2114, %v2111, %v1786
      %v2145 = vsel %vm2114, %v2112, %v1788
      %v2146 = vsel %vm2114, %v2113, %v1788
      %vm2147 = vcmask 523264
      %v2148 = vsel %vm2147, %v2115, %v1821
      %v2149 = vsel %vm2147, %v2116, %v1823
      %v2150 = vsel %vm2147, %v2117, %v1825
      %v2151 = vsel %vm2147, %v2118, %v1827
      %v2152 = vsel %vm2147, %v2119, %v1829
      %v2153 = vsel %vm2147, %v2120, %v1831
      %v2154 = vsel %vm2147, %v2121, %v1833
      %v2155 = vsel %vm2147, %v2122, %v1835
      %v2156 = vsel %vm2147, %v2123, %v1837
      %v2157 = vsel %vm2147, %v2124, %v1839
      %v2158 = vsel %vm2147, %v2125, %v1841
      %v2159 = vsel %vm2147, %v2126, %v1843
      %v2160 = vsel %vm2147, %v2127, %v1845
      %v2161 = vsel %vm2147, %v2128, %v1847
      %v2162 = vsel %vm2147, %v2129, %v1849
      %v2163 = vsel %vm2147, %v2130, %v1851
      %v2164 = vsel %vm2147, %v2131, %v1853
      %v2165 = vsel %vm2147, %v2132, %v1855
      %v2166 = vsel %vm2147, %v2133, %v1857
      %v2167 = vsel %vm2147, %v2134, %v1859
      %v2168 = vsel %vm2147, %v2135, %v1861
      %v2169 = vsel %vm2147, %v2136, %v1863
      %v2170 = vsel %vm2147, %v2137, %v1865
      %v2171 = vsel %vm2147, %v2138, %v1867
      %v2172 = vsel %vm2147, %v2139, %v1869
      %v2173 = vsel %vm2147, %v2140, %v1871
      %v2174 = vsel %vm2147, %v2141, %v1873
      %v2175 = vsel %vm2147, %v2142, %v1875
      %v2176 = vsel %vm2147, %v2143, %v1877
      %v2177 = vsel %vm2147, %v2144, %v1879
      %v2178 = vsel %vm2147, %v2145, %v1881
      %v2179 = vsel %vm2147, %v2146, %v1883
      %v2180 = vpack.c.bf16 %v2149, %v2148
      %v2181 = vpack.c.bf16 %v2151, %v2150
      %v2182 = vpack.c.bf16 %v2153, %v2152
      %v2183 = vpack.c.bf16 %v2155, %v2154
      %v2184 = vpack.c.bf16 %v2157, %v2156
      %v2185 = vpack.c.bf16 %v2159, %v2158
      %v2186 = vpack.c.bf16 %v2161, %v2160
      %v2187 = vpack.c.bf16 %v2163, %v2162
      %v2188 = vpack.c.bf16 %v2165, %v2164
      %v2189 = vpack.c.bf16 %v2167, %v2166
      %v2190 = vpack.c.bf16 %v2169, %v2168
      %v2191 = vpack.c.bf16 %v2171, %v2170
      %v2192 = vpack.c.bf16 %v2173, %v2172
      %v2193 = vpack.c.bf16 %v2175, %v2174
      %v2194 = vpack.c.bf16 %v2177, %v2176
      %v2195 = vpack.c.bf16 %v2179, %v2178
      %v2196 = vld [vmem:[%s2] sm:$0xf]
      %v2197 = vld [vmem:[%s2 + $0x4] sm:$0xf]
      %v2198 = vld [vmem:[%s2 + $0x8] sm:$0xf]
      %v2199 = vld [vmem:[%s2 + $0xc] sm:$0xf]
      %v2200 = vld [vmem:[%s2 + $0x10] sm:$0xf]
      %v2201 = vld [vmem:[%s2 + $0x14] sm:$0xf]
      %v2202 = vld [vmem:[%s2 + $0x18] sm:$0xf]
      %v2203 = vld [vmem:[%s2 + $0x1c] sm:$0xf]
      %v2204 = vld [vmem:[%s2 + $0x20] sm:$0xf]
      %v2214 = vunpack.c.l.b16 %v2196
      %v2215 = vunpack.c.l.b16 %v2197
      %v2216 = vunpack.c.l.b16 %v2198
      %v2217 = vunpack.c.l.b16 %v2199
      %v2218 = vunpack.c.l.b16 %v2200
      %v2219 = vunpack.c.l.b16 %v2201
      %v2220 = vunpack.c.l.b16 %v2202
      %v2221 = vunpack.c.l.b16 %v2203
      %v2222 = vunpack.c.l.b16 %v2204
      %v2223 = vpack.c.b16 %v2215, %v2214
      %v2224 = vpack.c.b16 %v2217, %v2216
      %v2225 = vpack.c.b16 %v2219, %v2218
      %v2226 = vpack.c.b16 %v2221, %v2220
      %v2227 = vpack.c.b16 %v2222, %v2222
      %vm2232 = vcmask 588800
      %v2234 = vsel %vm2232, %v2180, 0
      %v2237 = vsel %vm2232, %v2181, 0
      %v2240 = vsel %vm2232, %v2182, 0
      %v2243 = vsel %vm2232, %v2183, 0
      %v2246 = vsel %vm2232, %v2184, 0
      %v2249 = vsel %vm2232, %v2185, 0
      %v2252 = vsel %vm2232, %v2186, 0
      %v2255 = vsel %vm2232, %v2187, 0
      %v2258 = vsel %vm2232, %v2188, 0
      %v2261 = vsel %vm2232, %v2189, 0
      %v2264 = vsel %vm2232, %v2190, 0
      %v2267 = vsel %vm2232, %v2191, 0
      %v2270 = vsel %vm2232, %v2192, 0
      %v2273 = vsel %vm2232, %v2193, 0
      %v2276 = vsel %vm2232, %v2194, 0
      %v2279 = vsel %vm2232, %v2195, 0
      %vm2281 = vcmask 1043456
      %v2283 = vsel %vm2281, %v2227, 0
      %2285 = vmatprep.subr.bf16.mxu0 0
      %2286 = vmatpush1.bf16.msra.mxu0 %v2223
      %2287 = vmatprep.subr.bf16.mxu0 0
      %2288 = vmatpush1.bf16.msra.mxu0 %v2224
      %2289 = vmatprep.subr.bf16.mxu0 0
      %2290 = vmatpush1.bf16.msra.mxu0 %v2225
      %2291 = vmatprep.subr.bf16.mxu0 0
      %2292 = vmatpush1.bf16.msra.mxu0 %v2226
      %2293 = vmatprep.subr.bf16.mxu0 0
      %2294 = vmatpush1.bf16.msra.mxu0 %v2283
      %2295 = vmatprep.subr.bf16.mxu0 0
      %2296 = vmatpush1.bf16.msra.mxu0 0
      %2297 = vmatprep.subr.bf16.mxu0 0
      %2298 = vmatpush1.bf16.msra.mxu0 0
      %2299 = vmatprep.subr.bf16.mxu0 0
      %2300 = vmatpush1.bf16.msra.mxu0 0
      %2301 = vmatprep.subr.bf16.mxu0 0
      %2302 = vmatpush1.bf16.msra.mxu0 0
      %2303 = vmatprep.subr.bf16.mxu0 0
      %2304 = vmatpush1.bf16.msra.mxu0 0
      %2305 = vmatprep.subr.bf16.mxu0 0
      %2306 = vmatpush1.bf16.msra.mxu0 0
      %2307 = vmatprep.subr.bf16.mxu0 0
      %2308 = vmatpush1.bf16.msra.mxu0 0
      %2309 = vmatprep.subr.bf16.mxu0 0
      %2310 = vmatpush1.bf16.msra.mxu0 0
      %2311 = vmatprep.subr.bf16.mxu0 0
      %2312 = vmatpush1.bf16.msra.mxu0 0
      %2313 = vmatprep.subr.bf16.mxu0 0
      %2314 = vmatpush1.bf16.msra.mxu0 0
      %2315 = vmatprep.subr.bf16.mxu0 0
      %2316 = vmatpush1.bf16.msra.mxu0 0
      %2317 = vmatprep.mubr.bf16.mxu0 0
      %2318 = vmatmul.mubr.bf16.gmra.mrb[0].mxu0 %v2234
      %v2319 = vpop.f32.mrb[0].mxu0
      %v2320 = vadd.f32 0.0, %v2319
      %v2321 = vpop.f32.mrb[0].mxu0
      %v2322 = vpop.f32.mrb[0].mxu0
      %v2323 = vadd.f32 0.0, %v2322
      %v2324 = vpop.f32.mrb[0].mxu0
      %2325 = vmatprep.mubr.bf16.mxu0 0
      %2326 = vmatmul.mubr.bf16.gmra.mrb[0].mxu0 %v2237
      %v2327 = vpop.f32.mrb[0].mxu0
      %v2328 = vadd.f32 0.0, %v2327
      %v2329 = vpop.f32.mrb[0].mxu0
      %v2330 = vpop.f32.mrb[0].mxu0
      %v2331 = vadd.f32 0.0, %v2330
      %v2332 = vpop.f32.mrb[0].mxu0
      %2333 = vmatprep.mubr.bf16.mxu0 0
      %2334 = vmatmul.mubr.bf16.gmra.mrb[0].mxu0 %v2240
      %v2335 = vpop.f32.mrb[0].mxu0
      %v2336 = vadd.f32 0.0, %v2335
      %v2337 = vpop.f32.mrb[0].mxu0
      %v2338 = vpop.f32.mrb[0].mxu0
      %v2339 = vadd.f32 0.0, %v2338
      %v2340 = vpop.f32.mrb[0].mxu0
      %2341 = vmatprep.mubr.bf16.mxu0 0
      %2342 = vmatmul.mubr.bf16.gmra.mrb[0].mxu0 %v2243
      %v2343 = vpop.f32.mrb[0].mxu0
      %v2344 = vadd.f32 0.0, %v2343
      %v2345 = vpop.f32.mrb[0].mxu0
      %v2346 = vpop.f32.mrb[0].mxu0
      %v2347 = vadd.f32 0.0, %v2346
      %v2348 = vpop.f32.mrb[0].mxu0
      %2349 = vmatprep.mubr.bf16.mxu0 0
      %2350 = vmatmul.mubr.bf16.gmra.mrb[0].mxu0 %v2246
      %v2351 = vpop.f32.mrb[0].mxu0
      %v2352 = vadd.f32 0.0, %v2351
      %v2353 = vpop.f32.mrb[0].mxu0
      %v2354 = vpop.f32.mrb[0].mxu0
      %v2355 = vadd.f32 0.0, %v2354
      %v2356 = vpop.f32.mrb[0].mxu0
      %2357 = vmatprep.mubr.bf16.mxu0 0
      %2358 = vmatmul.mubr.bf16.gmra.mrb[0].mxu0 %v2249
      %v2359 = vpop.f32.mrb[0].mxu0
      %v2360 = vadd.f32 0.0, %v2359
      %v2361 = vpop.f32.mrb[0].mxu0
      %v2362 = vpop.f32.mrb[0].mxu0
      %v2363 = vadd.f32 0.0, %v2362
      %v2364 = vpop.f32.mrb[0].mxu0
      %2365 = vmatprep.mubr.bf16.mxu0 0
      %2366 = vmatmul.mubr.bf16.gmra.mrb[0].mxu0 %v2252
      %v2367 = vpop.f32.mrb[0].mxu0
      %v2368 = vadd.f32 0.0, %v2367
      %v2369 = vpop.f32.mrb[0].mxu0
      %v2370 = vpop.f32.mrb[0].mxu0
      %v2371 = vadd.f32 0.0, %v2370
      %v2372 = vpop.f32.mrb[0].mxu0
      %2373 = vmatprep.mubr.bf16.mxu0 0
      %2374 = vmatmul.mubr.bf16.gmra.mrb[0].mxu0 %v2255
      %v2375 = vpop.f32.mrb[0].mxu0
      %v2376 = vadd.f32 0.0, %v2375
      %v2377 = vpop.f32.mrb[0].mxu0
      %v2378 = vpop.f32.mrb[0].mxu0
      %v2379 = vadd.f32 0.0, %v2378
      %v2380 = vpop.f32.mrb[0].mxu0
      %2381 = vmatprep.mubr.bf16.mxu0 0
      %2382 = vmatmul.mubr.bf16.gmra.mrb[0].mxu0 %v2258
      %v2383 = vpop.f32.mrb[0].mxu0
      %v2384 = vadd.f32 0.0, %v2383
      %v2385 = vpop.f32.mrb[0].mxu0
      %v2386 = vpop.f32.mrb[0].mxu0
      %v2387 = vadd.f32 0.0, %v2386
      %v2388 = vpop.f32.mrb[0].mxu0
      %2389 = vmatprep.mubr.bf16.mxu0 0
      %2390 = vmatmul.mubr.bf16.gmra.mrb[0].mxu0 %v2261
      %v2391 = vpop.f32.mrb[0].mxu0
      %v2392 = vadd.f32 0.0, %v2391
      %v2393 = vpop.f32.mrb[0].mxu0
      %v2394 = vpop.f32.mrb[0].mxu0
      %v2395 = vadd.f32 0.0, %v2394
      %v2396 = vpop.f32.mrb[0].mxu0
      %2397 = vmatprep.mubr.bf16.mxu0 0
      %2398 = vmatmul.mubr.bf16.gmra.mrb[0].mxu0 %v2264
      %v2399 = vpop.f32.mrb[0].mxu0
      %v2400 = vadd.f32 0.0, %v2399
      %v2401 = vpop.f32.mrb[0].mxu0
      %v2402 = vpop.f32.mrb[0].mxu0
      %v2403 = vadd.f32 0.0, %v2402
      %v2404 = vpop.f32.mrb[0].mxu0
      %2405 = vmatprep.mubr.bf16.mxu0 0
      %2406 = vmatmul.mubr.bf16.gmra.mrb[0].mxu0 %v2267
      %v2407 = vpop.f32.mrb[0].mxu0
      %v2408 = vadd.f32 0.0, %v2407
      %v2409 = vpop.f32.mrb[0].mxu0
      %v2410 = vpop.f32.mrb[0].mxu0
      %v2411 = vadd.f32 0.0, %v2410
      %v2412 = vpop.f32.mrb[0].mxu0
      %2413 = vmatprep.mubr.bf16.mxu0 0
      %2414 = vmatmul.mubr.bf16.gmra.mrb[0].mxu0 %v2270
      %v2415 = vpop.f32.mrb[0].mxu0
      %v2416 = vadd.f32 0.0, %v2415
      %v2417 = vpop.f32.mrb[0].mxu0
      %v2418 = vpop.f32.mrb[0].mxu0
      %v2419 = vadd.f32 0.0, %v2418
      %v2420 = vpop.f32.mrb[0].mxu0
      %2421 = vmatprep.mubr.bf16.mxu0 0
      %2422 = vmatmul.mubr.bf16.gmra.mrb[0].mxu0 %v2273
      %v2423 = vpop.f32.mrb[0].mxu0
      %v2424 = vadd.f32 0.0, %v2423
      %v2425 = vpop.f32.mrb[0].mxu0
      %v2426 = vpop.f32.mrb[0].mxu0
      %v2427 = vadd.f32 0.0, %v2426
      %v2428 = vpop.f32.mrb[0].mxu0
      %2429 = vmatprep.mubr.bf16.mxu0 0
      %2430 = vmatmul.mubr.bf16.gmra.mrb[0].mxu0 %v2276
      %v2431 = vpop.f32.mrb[0].mxu0
      %v2432 = vadd.f32 0.0, %v2431
      %v2433 = vpop.f32.mrb[0].mxu0
      %v2434 = vpop.f32.mrb[0].mxu0
      %v2435 = vadd.f32 0.0, %v2434
      %v2436 = vpop.f32.mrb[0].mxu0
      %2437 = vmatprep.mubr.bf16.mxu0 0
      %2438 = vmatmul.mubr.bf16.gmra.mrb[0].mxu0 %v2279
      %v2439 = vpop.f32.mrb[0].mxu0
      %v2440 = vadd.f32 0.0, %v2439
      %v2441 = vpop.f32.mrb[0].mxu0
      %v2442 = vpop.f32.mrb[0].mxu0
      %v2443 = vadd.f32 0.0, %v2442
      %v2444 = vpop.f32.mrb[0].mxu0
      %2445 = vdwg.mxu0
      %v2446 = vadd.f32 %v610, %v2320
      %v2447 = vadd.f32 %v611, %v2323
      %v2448 = vadd.f32 %v612, %v2328
      %v2449 = vadd.f32 %v613, %v2331
      %v2450 = vadd.f32 %v614, %v2336
      %v2451 = vadd.f32 %v615, %v2339
      %v2452 = vadd.f32 %v616, %v2344
      %v2453 = vadd.f32 %v617, %v2347
      %v2454 = vadd.f32 %v618, %v2352
      %v2455 = vadd.f32 %v619, %v2355
      %v2456 = vadd.f32 %v620, %v2360
      %v2457 = vadd.f32 %v621, %v2363
      %v2458 = vadd.f32 %v622, %v2368
      %v2459 = vadd.f32 %v623, %v2371
      %v2460 = vadd.f32 %v624, %v2376
      %v2461 = vadd.f32 %v625, %v2379
      %v2462 = vadd.f32 %v626, %v2384
      %v2463 = vadd.f32 %v627, %v2387
      %v2464 = vadd.f32 %v628, %v2392
      %v2465 = vadd.f32 %v629, %v2395
      %v2466 = vadd.f32 %v630, %v2400
      %v2467 = vadd.f32 %v631, %v2403
      %v2468 = vadd.f32 %v632, %v2408
      %v2469 = vadd.f32 %v633, %v2411
      %v2470 = vadd.f32 %v634, %v2416
      %v2471 = vadd.f32 %v635, %v2419
      %v2472 = vadd.f32 %v636, %v2424
      %v2473 = vadd.f32 %v637, %v2427
      %v2474 = vadd.f32 %v638, %v2432
      %v2475 = vadd.f32 %v639, %v2435
      %v2476 = vadd.f32 %v640, %v2440
      %v2477 = vadd.f32 %v641, %v2443
      %2478 = vst.msk [vmem:[%s338] sm:$0xff] %vm1916, %v2446
      %2479 = vst.msk [vmem:[%s338 + $0x8] sm:$0xff] %vm1916, %v2447
      %2480 = vst.msk [vmem:[%s338 + $0x10] sm:$0xff] %vm1916, %v2448
      %2481 = vst.msk [vmem:[%s338 + $0x18] sm:$0xff] %vm1916, %v2449
      %2482 = vst.msk [vmem:[%s338 + $0x20] sm:$0xff] %vm1916, %v2450
      %2483 = vst.msk [vmem:[%s338 + $0x28] sm:$0xff] %vm1916, %v2451
      %2484 = vst.msk [vmem:[%s338 + $0x30] sm:$0xff] %vm1916, %v2452
      %2485 = vst.msk [vmem:[%s338 + $0x38] sm:$0xff] %vm1916, %v2453
      %2486 = vst.msk [vmem:[%s338 + $0x40] sm:$0xff] %vm1916, %v2454
      %2487 = vst.msk [vmem:[%s338 + $0x48] sm:$0xff] %vm1916, %v2455
      %2488 = vst.msk [vmem:[%s338 + $0x50] sm:$0xff] %vm1916, %v2456
      %2489 = vst.msk [vmem:[%s338 + $0x58] sm:$0xff] %vm1916, %v2457
      %2490 = vst.msk [vmem:[%s338 + $0x60] sm:$0xff] %vm1916, %v2458
      %2491 = vst.msk [vmem:[%s338 + $0x68] sm:$0xff] %vm1916, %v2459
      %2492 = vst.msk [vmem:[%s338 + $0x70] sm:$0xff] %vm1916, %v2460
      %2493 = vst.msk [vmem:[%s338 + $0x78] sm:$0xff] %vm1916, %v2461
      %2494 = vst.msk [vmem:[%s338 + $0x80] sm:$0xff] %vm1916, %v2462
      %2495 = vst.msk [vmem:[%s338 + $0x88] sm:$0xff] %vm1916, %v2463
      %2496 = vst.msk [vmem:[%s338 + $0x90] sm:$0xff] %vm1916, %v2464
      %2497 = vst.msk [vmem:[%s338 + $0x98] sm:$0xff] %vm1916, %v2465
      %2498 = vst.msk [vmem:[%s338 + $0xa0] sm:$0xff] %vm1916, %v2466
      %2499 = vst.msk [vmem:[%s338 + $0xa8] sm:$0xff] %vm1916, %v2467
      %2500 = vst.msk [vmem:[%s338 + $0xb0] sm:$0xff] %vm1916, %v2468
      %2501 = vst.msk [vmem:[%s338 + $0xb8] sm:$0xff] %vm1916, %v2469
      %2502 = vst.msk [vmem:[%s338 + $0xc0] sm:$0xff] %vm1916, %v2470
      %2503 = vst.msk [vmem:[%s338 + $0xc8] sm:$0xff] %vm1916, %v2471
      %2504 = vst.msk [vmem:[%s338 + $0xd0] sm:$0xff] %vm1916, %v2472
      %2505 = vst.msk [vmem:[%s338 + $0xd8] sm:$0xff] %vm1916, %v2473
      %2506 = vst.msk [vmem:[%s338 + $0xe0] sm:$0xff] %vm1916, %v2474
      %2507 = vst.msk [vmem:[%s338 + $0xe8] sm:$0xff] %vm1916, %v2475
      %2508 = vst.msk [vmem:[%s338 + $0xf0] sm:$0xff] %vm1916, %v2476
      %2509 = vst.msk [vmem:[%s338 + $0xf8] sm:$0xff] %vm1916, %v2477
      %v2510 = vld [vmem:[%s338] ss:$2 sm:$0xff]
      %s2511 = scalar_lea.vmem %s338, 32
      %v2512 = vld [vmem:[%s2511] ss:$2 sm:$0xff]
      %s2513 = scalar_lea.vmem %s338, 64
      %v2514 = vld [vmem:[%s2513] ss:$2 sm:$0xff]
      %s2515 = scalar_lea.vmem %s338, 96
      %v2516 = vld [vmem:[%s2515] ss:$2 sm:$0xff]
      %s2517 = scalar_lea.vmem %s338, 128
      %v2518 = vld [vmem:[%s2517] ss:$2 sm:$0xff]
      %s2519 = scalar_lea.vmem %s338, 160
      %v2520 = vld [vmem:[%s2519] ss:$2 sm:$0xff]
      %s2521 = scalar_lea.vmem %s338, 192
      %v2522 = vld [vmem:[%s2521] ss:$2 sm:$0xff]
      %s2523 = scalar_lea.vmem %s338, 224
      %v2524 = vld [vmem:[%s2523] ss:$2 sm:$0xff]
      %s2525 = scalar_lea.vmem %s338, 1
      %v2526 = vld [vmem:[%s2525] ss:$2 sm:$0xff]
      %s2527 = scalar_lea.vmem %s338, 33
      %v2528 = vld [vmem:[%s2527] ss:$2 sm:$0xff]
      %s2529 = scalar_lea.vmem %s338, 65
      %v2530 = vld [vmem:[%s2529] ss:$2 sm:$0xff]
      %s2531 = scalar_lea.vmem %s338, 97
      %v2532 = vld [vmem:[%s2531] ss:$2 sm:$0xff]
      %s2533 = scalar_lea.vmem %s338, 129
      %v2534 = vld [vmem:[%s2533] ss:$2 sm:$0xff]
      %s2535 = scalar_lea.vmem %s338, 161
      %v2536 = vld [vmem:[%s2535] ss:$2 sm:$0xff]
      %s2537 = scalar_lea.vmem %s338, 193
      %v2538 = vld [vmem:[%s2537] ss:$2 sm:$0xff]
      %s2539 = scalar_lea.vmem %s338, 225
      %v2540 = vld [vmem:[%s2539] ss:$2 sm:$0xff]
      %s2541 = scalar_lea.vmem %s338, 16
      %v2542 = vld [vmem:[%s2541] ss:$2 sm:$0xff]
      %s2543 = scalar_lea.vmem %s2541, 32
      %v2544 = vld [vmem:[%s2543] ss:$2 sm:$0xff]
      %s2545 = scalar_lea.vmem %s2541, 64
      %v2546 = vld [vmem:[%s2545] ss:$2 sm:$0xff]
      %s2547 = scalar_lea.vmem %s2541, 96
      %v2548 = vld [vmem:[%s2547] ss:$2 sm:$0xff]
      %s2549 = scalar_lea.vmem %s2541, 128
      %v2550 = vld [vmem:[%s2549] ss:$2 sm:$0xff]
      %s2551 = scalar_lea.vmem %s2541, 160
      %v2552 = vld [vmem:[%s2551] ss:$2 sm:$0xff]
      %s2553 = scalar_lea.vmem %s2541, 192
      %v2554 = vld [vmem:[%s2553] ss:$2 sm:$0xff]
      %s2555 = scalar_lea.vmem %s2541, 224
      %v2556 = vld [vmem:[%s2555] ss:$2 sm:$0xff]
      %s2557 = scalar_lea.vmem %s2541, 1
      %v2558 = vld [vmem:[%s2557] ss:$2 sm:$0xff]
      %s2559 = scalar_lea.vmem %s2541, 33
      %v2560 = vld [vmem:[%s2559] ss:$2 sm:$0xff]
      %s2561 = scalar_lea.vmem %s2541, 65
      %v2562 = vld [vmem:[%s2561] ss:$2 sm:$0xff]
      %s2563 = scalar_lea.vmem %s2541, 97
      %v2564 = vld [vmem:[%s2563] ss:$2 sm:$0xff]
      %s2565 = scalar_lea.vmem %s2541, 129
      %v2566 = vld [vmem:[%s2565] ss:$2 sm:$0xff]
      %s2567 = scalar_lea.vmem %s2541, 161
      %v2568 = vld [vmem:[%s2567] ss:$2 sm:$0xff]
      %s2569 = scalar_lea.vmem %s2541, 193
      %v2570 = vld [vmem:[%s2569] ss:$2 sm:$0xff]
      %s2571 = scalar_lea.vmem %s2541, 225
      %v2572 = vld [vmem:[%s2571] ss:$2 sm:$0xff]
      %v2573 = vadd.f32 %v2510, %v2526
      %v2574 = vadd.f32 %v2512, %v2528
      %v2575 = vadd.f32 %v2514, %v2530
      %v2576 = vadd.f32 %v2516, %v2532
      %v2577 = vadd.f32 %v2518, %v2534
      %v2578 = vadd.f32 %v2520, %v2536
      %v2579 = vadd.f32 %v2522, %v2538
      %v2580 = vadd.f32 %v2524, %v2540
      %v2581 = vadd.f32 %v2573, %v2542
      %v2582 = vadd.f32 %v2574, %v2544
      %v2583 = vadd.f32 %v2575, %v2546
      %v2584 = vadd.f32 %v2576, %v2548
      %v2585 = vadd.f32 %v2577, %v2550
      %v2586 = vadd.f32 %v2578, %v2552
      %v2587 = vadd.f32 %v2579, %v2554
      %v2588 = vadd.f32 %v2580, %v2556
      %v2589 = vadd.f32 %v2581, %v2558
      %v2590 = vadd.f32 %v2582, %v2560
      %v2591 = vadd.f32 %v2583, %v2562
      %v2592 = vadd.f32 %v2584, %v2564
      %v2593 = vadd.f32 %v2585, %v2566
      %v2594 = vadd.f32 %v2586, %v2568
      %v2595 = vadd.f32 %v2587, %v2570
      %v2596 = vadd.f32 %v2588, %v2572
      %v2597 = vmul.f32 %v2589, 0.25
      %v2598 = vmul.f32 %v2590, 0.25
      %v2599 = vmul.f32 %v2591, 0.25
      %v2600 = vmul.f32 %v2592, 0.25
      %v2601 = vmul.f32 %v2593, 0.25
      %v2602 = vmul.f32 %v2594, 0.25
      %v2603 = vmul.f32 %v2595, 0.25
      %v2604 = vmul.f32 %v2596, 0.25
      %2605 = vst.msk [vmem:[%s333] sm:$0xff] %vm1916, %v2597
      %2606 = vst.msk [vmem:[%s333 + $0x8] sm:$0xff] %vm1916, %v2598
      %2607 = vst.msk [vmem:[%s333 + $0x10] sm:$0xff] %vm1916, %v2599
      %2608 = vst.msk [vmem:[%s333 + $0x18] sm:$0xff] %vm1916, %v2600
      %2609 = vst.msk [vmem:[%s333 + $0x20] sm:$0xff] %vm1916, %v2601
      %2610 = vst.msk [vmem:[%s333 + $0x28] sm:$0xff] %vm1916, %v2602
      %2611 = vst.msk [vmem:[%s333 + $0x30] sm:$0xff] %vm1916, %v2603
      %2612 = vst.msk [vmem:[%s333 + $0x38] sm:$0xff] %vm1916, %v2604
      %p2613 = scmp.lt.s32.totalorder %s20, 1
      %s2614 = scalar_select %p2613, %s20, 1
      %s2615 = smul.addr %s2614, 8
      %s2616 = smul.addr %s2615, 8
      %s2617 = scalar_lea.vmem %s7, %s2616
      %p2618 = scmp.lt.s32.totalorder %s20, 1
      %s2619 = scalar_select %p2618, %s20, 1
      %s2620 = smul.addr %s2619, 32
      %s2621 = smul.addr %s2620, 8
      %s2622 = scalar_lea.vmem %s8, %s2621
      // Predicated region
      $region49: #{encoder_block.3} parent=47 // pred_check
        %p2623 = pneg %p195
      $region50: #{encoder_block.3} parent=47 // pred_check_branch
        %2625 = sbr.rel (%p2623) target = $region52
      $region51: #{encoder_block.3} parent=47 // pred_region
        _
      $region52: #{encoder_block.3} parent=47 // pred_fallthru
        _
      // Predicated region
      $region53: #{encoder_block.3} parent=47 // pred_check
        %p2626 = pneg %p221
      $region54: #{encoder_block.3} parent=47 // pred_check_branch
        %2628 = sbr.rel (%p2626) target = $region56
      $region55: #{encoder_block.3} parent=47 // pred_region
        _
      $region56: #{encoder_block.3} parent=47 // pred_fallthru
        _
    $region48: #{encoder_block.3} parent=5 // pred_fallthru
      _
    %p2629 = scmp.le.s32.totalorder 2, %s15
    // Predicated region
    $region57: #{encoder_block.3} parent=5 // pred_check
      %p2630 = pneg %p2629
    $region58: #{encoder_block.3} parent=5 // pred_check_branch
      %2632 = sbr.rel (%p2630) target = $region60
    $region59: #{encoder_block.3} parent=5 // pred_region
      %s2633 = ssub.s32 %s15, 2
      // Predicated region
      $region61: #{encoder_block.3} parent=59 // pred_check
        %p2634 = pneg %p201
      $region62: #{encoder_block.3} parent=59 // pred_check_branch
        %2636 = sbr.rel (%p2634) target = $region64
      $region63: #{encoder_block.3} parent=59 // pred_region
        %p2637 = scmp.lt.s32.totalorder %s21, 1
        %s2638 = scalar_select %p2637, %s21, 1
        %s2639 = smul.addr %s2638, 8
        %s2640 = smul.addr %s2639, 8
        %s2641 = scalar_lea.vmem %s7, %s2640
      $region64: #{encoder_block.3} parent=59 // pred_fallthru
        _
      // Predicated region
      $region65: #{encoder_block.3} parent=59 // pred_check
        %p2642 = pneg %p227
      $region66: #{encoder_block.3} parent=59 // pred_check_branch
        %2644 = sbr.rel (%p2642) target = $region68
      $region67: #{encoder_block.3} parent=59 // pred_region
        %p2645 = scmp.lt.s32.totalorder %s21, 1
        %s2646 = scalar_select %p2645, %s21, 1
        %s2647 = smul.addr %s2646, 32
        %s2648 = smul.addr %s2647, 8
        %s2649 = scalar_lea.vmem %s8, %s2648
      $region68: #{encoder_block.3} parent=59 // pred_fallthru
        _
    $region60: #{encoder_block.3} parent=5 // pred_fallthru
      _
  $region6: #{encoder_block.3} parent=0 // loop_footer
    %s19 = sadd.s32 1, %s15
  $region7: #{encoder_block.3} parent=0 // loop_footer_branch
    %14 = sbr.rel target = $region3
  $region8: #{encoder_block.3} parent=0 // loop_exit
    _

</llo_original>
